<compile_context>
chip_gen: v6e
topology: v6e:2x2x1
jax: 0.10.0
libtpu: 0.0.40
codegen_flags: <defaults>
</compile_context>

<pallas_src>
import functools

import jax
import jax.numpy as jnp
from jax.experimental import pallas as pl
from jax.experimental.pallas import tpu as pltpu

BN_EPS = 1e-3
MAX_ROW_TILE = 512                      # rows (of N*H*W) per matmul grid step
VMEM_LIMIT_BYTES = 32 * 1024 * 1024     # explicit scoped-VMEM budget (safe on v5e/v6e/v7x)

NUM_CLASSES = 10
LAST_CHANNEL = 64

# small synthetic MobileNetV3 config (InvertedResidualConfig fields, width_mult=1.0)
_RAW_SETTING = [
    dict(input_channels=16, kernel=3, expanded_channels=16, out_channels=16,
         use_se=True, use_hs=False, stride=1, dilation=1),
    dict(input_channels=16, kernel=3, expanded_channels=64, out_channels=24,
         use_se=False, use_hs=True, stride=2, dilation=1),
]


def _make_divisible(v, divisor=8, min_value=None):
    if min_value is None:
        min_value = divisor
    new_v = max(min_value, int(v + divisor / 2) // divisor * divisor)
    if new_v < 0.9 * v:
        new_v += divisor
    return new_v


def _adjust_cfg(c):
    return dict(
        input_channels=_make_divisible(c["input_channels"]),
        kernel=c["kernel"],
        expanded_channels=_make_divisible(c["expanded_channels"]),
        out_channels=_make_divisible(c["out_channels"]),
        use_se=c["use_se"], use_hs=c["use_hs"],
        stride=c["stride"], dilation=c["dilation"])


# STATIC (Python-level) block configuration -- never traced by jit.
BLOCK_CONFIGS = tuple(_adjust_cfg(c) for c in _RAW_SETTING)


def _cparams(num_parallel_axes):
    return pltpu.CompilerParams(
        dimension_semantics=("parallel",) * num_parallel_axes,
        vmem_limit_bytes=VMEM_LIMIT_BYTES)


def _cost(flops, bytes_accessed):
    return pl.CostEstimate(flops=int(flops), transcendentals=0,
                           bytes_accessed=int(bytes_accessed))


# ------------------------------------------------------------------
# activation helper (static dispatch, f32 math)
# ------------------------------------------------------------------

def _act(y, act):
    if act == "none":
        return y
    if act == "relu":
        return jnp.maximum(y, 0.0)
    if act == "hardswish":
        return y * jnp.clip(y + 3.0, 0.0, 6.0) * (1.0 / 6.0)
    if act == "hardsigmoid":
        return jnp.clip(y + 3.0, 0.0, 6.0) * (1.0 / 6.0)
    raise ValueError(act)


# ------------------------------------------------------------------
# Kernel 1: row-tiled matmul (1x1 conv / stem-patch conv) with fused BN affine + act.
#           Rows are N*H*W flattened (batch folded into M), bf16 in / bf16 out,
#           f32 MXU accumulation.
# ------------------------------------------------------------------

def _pw_kernel(x_ref, w_ref, scale_ref, shift_ref, o_ref, *, act):
    acc = jnp.dot(x_ref[...], w_ref[...], preferred_element_type=jnp.float32)
    y = acc * scale_ref[...] + shift_ref[...]       # folded BN / bias
    o_ref[...] = _act(y, act).astype(o_ref.dtype)


def _row_tile(m):
    """Largest tile <= MAX_ROW_TILE that still yields >=2 grid steps (v7x megacore)."""
    if m >= 2 * MAX_ROW_TILE:
        return MAX_ROW_TILE
    half = -(-m // 2)
    tile = -(-half // 8) * 8
    return max(8, min(tile, m))


def pw_conv_bn_act(x2d, w, scale, shift, act, out_dtype=jnp.bfloat16):
    """out = act(x2d @ w * scale + shift); x2d:(M,K) bf16, w:(K,Cout) bf16."""
    M, K = x2d.shape
    Cout = w.shape[1]
    tile = _row_tile(M)
    grid = (pl.cdiv(M, tile),)
    cost = _cost(
        2 * M * K * Cout,
        M * K * x2d.dtype.itemsize + K * Cout * w.dtype.itemsize
        + M * Cout * jnp.dtype(out_dtype).itemsize + 2 * Cout * 4)
    return pl.pallas_call(
        functools.partial(_pw_kernel, act=act),
        grid=grid,
        in_specs=[
            pl.BlockSpec((tile, K), lambda i: (i, 0)),
            pl.BlockSpec((K, Cout), lambda i: (0, 0)),
            pl.BlockSpec((1, Cout), lambda i: (0, 0)),
            pl.BlockSpec((1, Cout), lambda i: (0, 0)),
        ],
        out_specs=pl.BlockSpec((tile, Cout), lambda i: (i, 0)),
        out_shape=jax.ShapeDtypeStruct((M, Cout), out_dtype),
        compiler_params=_cparams(1),
        cost_estimate=cost,
    )(x2d, w, scale.reshape(1, Cout), shift.reshape(1, Cout))


# ------------------------------------------------------------------
# Spatial helpers (XLA side; single cheap copies, never a k*k im2col of activations).
# ------------------------------------------------------------------

def _out_size(h, k, stride, pad, dil):
    return (h + 2 * pad - dil * (k - 1) - 1) // stride + 1


def _space_to_depth_pad(x, k, stride, dil):
    """Returns xs:(N, stride*stride, Hp/stride, Wp/stride, C), Hout, Wout such that
    tap (kh,kw) of the conv is a unit-stride slice of one parity plane of xs."""
    N, H, W, C = x.shape
    pad = (k - 1) // 2 * dil
    Hout = _out_size(H, k, stride, pad, dil)
    Wout = _out_size(W, k, stride, pad, dil)
    Hneed = stride * (Hout - 1) + dil * (k - 1) + 1
    Wneed = stride * (Wout - 1) + dil * (k - 1) + 1
    Hp = -(-Hneed // stride) * stride
    Wp = -(-Wneed // stride) * stride
    assert Hp - H - pad >= 0 and Wp - W - pad >= 0
    xp = jnp.pad(x, ((0, 0), (pad, Hp - H - pad), (pad, Wp - W - pad), (0, 0)))
    if stride == 1:
        xs = xp.reshape(N, 1, Hp, Wp, C)
    else:
        xs = xp.reshape(N, Hp // stride, stride, Wp // stride, stride, C)
        xs = jnp.transpose(xs, (0, 2, 4, 1, 3, 5))
        xs = xs.reshape(N, stride * stride, Hp // stride, Wp // stride, C)
    return xs, Hout, Wout


def _im2col_stem(x, k, stride, dil):
    """Stem-only patch matrix (cin=3 -> k*k*cin=27 columns, <=2.25x the input bytes).
    Built once in XLA so the stem runs as one lane-dense MXU matmul in Pallas."""
    N, H, W, C = x.shape
    pad = (k - 1) // 2 * dil
    Hout = _out_size(H, k, stride, pad, dil)
    Wout = _out_size(W, k, stride, pad, dil)
    hi_pad = max(0, stride * (Hout - 1) + dil * (k - 1) + 1 - (H + pad))
    wi_pad = max(0, stride * (Wout - 1) + dil * (k - 1) + 1 - (W + pad))
    xp = jnp.pad(x, ((0, 0), (pad, hi_pad), (pad, wi_pad), (0, 0)))
    taps = []
    for kh in range(k):
        for kw in range(k):
            taps.append(xp[:, dil * kh: dil * kh + stride * Hout: stride,
                           dil * kw: dil * kw + stride * Wout: stride, :])
    patches = jnp.concatenate(taps, axis=-1)            # (N, Hout, Wout, k*k*C)
    return patches.reshape(N, Hout * Wout, k * k * C), Hout, Wout


# ------------------------------------------------------------------
# Kernel 2: fused InvertedResidual body (per image):
#   depthwise kxk conv + BN + act  ->  [SE: pool, fc1+ReLU, fc2+Hardsigmoid, scale]
#   ->  1x1 project conv + BN  ->  [+ residual]
# The padded / stride-decomposed input comes from one XLA copy; the k*k taps are
# formed with static in-VMEM slices.  The project matmul runs per output row to stay
# reshape-free (tiny M; MXU-friendly enough at these channel counts).
# ------------------------------------------------------------------

def _block_kernel(*refs, k, stride, dil, hout, wout, act, has_se, has_res):
    it = iter(refs)
    xs_ref = next(it)
    wdw_ref = next(it)
    dsc_ref = next(it)
    dsh_ref = next(it)
    if has_se:
        w1_ref, b1_ref, w2_ref, b2_ref = next(it), next(it), next(it), next(it)
    wp_ref = next(it)
    psc_ref = next(it)
    psh_ref = next(it)
    res_ref = next(it) if has_res else None
    o_ref = next(it)

    # ---- depthwise conv + folded BN + activation (VPU, f32 math) ----
    wdw = wdw_ref[...].astype(jnp.float32)              # (k*k, Cexp)
    acc = None
    for kh in range(k):
        for kw in range(k):
            ph, oh = (dil * kh) % stride, (dil * kh) // stride
            pw_, ow = (dil * kw) % stride, (dil * kw) // stride
            plane = ph * stride + pw_
            tap = xs_ref[0, plane, oh:oh + hout, ow:ow + wout, :].astype(jnp.float32)
            t = kh * k + kw
            contrib = tap * wdw[t:t + 1, :]              # (1, Cexp) broadcast
            acc = contrib if acc is None else acc + contrib
    y = acc * dsc_ref[...] + dsh_ref[...]
    y = _act(y, act)                                     # (hout, wout, Cexp) f32

    # ---- fused SqueezeExcitation gate (uses the VMEM-resident dw output) ----
    if has_se:
        row_sum = y[0]
        for h in range(1, hout):
            row_sum = row_sum + y[h]
        pooled = jnp.sum(row_sum, axis=0, keepdims=True) * (1.0 / (hout * wout))
        s = jnp.dot(pooled, w1_ref[...].astype(jnp.float32),
                    preferred_element_type=jnp.float32) + b1_ref[...]
        s = jnp.maximum(s, 0.0)
        g = jnp.dot(s, w2_ref[...].astype(jnp.float32),
                    preferred_element_type=jnp.float32) + b2_ref[...]
        g = jnp.clip(g + 3.0, 0.0, 6.0) * (1.0 / 6.0)    # hardsigmoid gate (1, Cexp)
        y = y * g

    # ---- 1x1 project conv + folded BN (+ residual), per output row (MXU) ----
    wp = wp_ref[...].astype(jnp.float32)                 # (Cexp, Cout)
    for h in range(hout):
        row = jnp.dot(y[h], wp, preferred_element_type=jnp.float32)   # (wout, Cout)
        row = row * psc_ref[...] + psh_ref[...]
        if has_res:
            row = row + res_ref[0, h].astype(jnp.float32)
        o_ref[0, h] = row.astype(o_ref.dtype)


def fused_block(x, p, cfg, stride, act, residual=None):
    """Fused dw-conv/BN/act [+SE] + project/BN [+residual] for one inverted-residual
    block.  x: NHWC bf16 (the dw input, i.e. post-expand if expand exists)."""
    k, dil = cfg["kernel"], cfg["dilation"]
    N, H, W, Cexp = x.shape
    xs, Hout, Wout = _space_to_depth_pad(x, k, stride, dil)
    _, S2, Hs, Ws, _ = xs.shape
    d, pr = p["dw"], p["project"]
    Cout = pr["w"].shape[1]
    has_se = "se" in p
    has_res = residual is not None

    args = [xs, d["w"], d["scale"].reshape(1, Cexp), d["shift"].reshape(1, Cexp)]
    in_specs = [
        pl.BlockSpec((1, S2, Hs, Ws, Cexp), lambda n: (n, 0, 0, 0, 0)),
        pl.BlockSpec((k * k, Cexp), lambda n: (0, 0)),
        pl.BlockSpec((1, Cexp), lambda n: (0, 0)),
        pl.BlockSpec((1, Cexp), lambda n: (0, 0)),
    ]
    if has_se:
        s = p["se"]
        Csq = s["fc1_w"].shape[1]
        args += [s["fc1_w"], s["fc1_b"].reshape(1, Csq),
                 s["fc2_w"], s["fc2_b"].reshape(1, Cexp)]
        in_specs += [pl.BlockSpec((Cexp, Csq), lambda n: (0, 0)),
                     pl.BlockSpec((1, Csq), lambda n: (0, 0)),
                     pl.BlockSpec((Csq, Cexp), lambda n: (0, 0)),
                     pl.BlockSpec((1, Cexp), lambda n: (0, 0))]
    args += [pr["w"], pr["scale"].reshape(1, Cout), pr["shift"].reshape(1, Cout)]
    in_specs += [pl.BlockSpec((Cexp, Cout), lambda n: (0, 0)),
                 pl.BlockSpec((1, Cout), lambda n: (0, 0)),
                 pl.BlockSpec((1, Cout), lambda n: (0, 0))]
    if has_res:
        args.append(residual)
        in_specs.append(pl.BlockSpec((1, Hout, Wout, Cout), lambda n: (n, 0, 0, 0)))

    kern = functools.partial(_block_kernel, k=k, stride=stride, dil=dil,
                             hout=Hout, wout=Wout, act=act,
                             has_se=has_se, has_res=has_res)
    flops = N * Hout * Wout * (2 * k * k * Cexp + 2 * Cexp * Cout)
    bytes_acc = (xs.size * xs.dtype.itemsize
                 + (k * k * Cexp + Cexp * Cout) * 2
                 + N * Hout * Wout * Cout * 2)
    return pl.pallas_call(
        kern,
        grid=(N,),
        in_specs=in_specs,
        out_specs=pl.BlockSpec((1, Hout, Wout, Cout), lambda n: (n, 0, 0, 0)),
        out_shape=jax.ShapeDtypeStruct((N, Hout, Wout, Cout), jnp.bfloat16),
        compiler_params=_cparams(1),
        cost_estimate=_cost(flops, bytes_acc),
    )(*args)


# ------------------------------------------------------------------
# Kernel 3: fused tail (per image):
#   last 1x1 conv + BN + Hardswish  ->  global avg pool  ->
#   classifier fc1 + Hardswish  ->  [Dropout p=0.0 = identity]  ->  fc2 logits
# ------------------------------------------------------------------

def _tail_kernel(x_ref, wl_ref, lsc_ref, lsh_ref, w1_ref, b1_ref, w2_ref, b2_ref,
                 o_ref, *, hw):
    xv = x_ref[0]                                        # (HW, Cin) bf16
    y = jnp.dot(xv, wl_ref[...], preferred_element_type=jnp.float32)
    y = _act(y * lsc_ref[...] + lsh_ref[...], "hardswish")
    pooled = jnp.sum(y, axis=0, keepdims=True) * (1.0 / hw)            # (1, Clast)
    h = jnp.dot(pooled, w1_ref[...].astype(jnp.float32),
                preferred_element_type=jnp.float32) + b1_ref[...]
    h = _act(h, "hardswish")
    # Dropout(p=0.0) -> identity
    out = jnp.dot(h, w2_ref[...].astype(jnp.float32),
                  preferred_element_type=jnp.float32) + b2_ref[...]
    o_ref[0] = out


def tail_head(x3, lc, cls):
    """x3:(N,HW,Cin) bf16 -> logits (N, NUM_CLASSES) f32."""
    N, HW, Cin = x3.shape
    Clast = lc["w"].shape[1]
    Chid = cls["fc1_w"].shape[1]
    flops = N * (2 * HW * Cin * Clast + 2 * Clast * Chid + 2 * Chid * NUM_CLASSES)
    bytes_acc = (x3.size * 2 + Cin * Clast * 2 + Clast * Chid * 2
                 + Chid * NUM_CLASSES * 2 + N * NUM_CLASSES * 4)
    out = pl.pallas_call(
        functools.partial(_tail_kernel, hw=HW),
        grid=(N,),
        in_specs=[
            pl.BlockSpec((1, HW, Cin), lambda n: (n, 0, 0)),
            pl.BlockSpec((Cin, Clast), lambda n: (0, 0)),
            pl.BlockSpec((1, Clast), lambda n: (0, 0)),
            pl.BlockSpec((1, Clast), lambda n: (0, 0)),
            pl.BlockSpec((Clast, Chid), lambda n: (0, 0)),
            pl.BlockSpec((1, Chid), lambda n: (0, 0)),
            pl.BlockSpec((Chid, NUM_CLASSES), lambda n: (0, 0)),
            pl.BlockSpec((1, NUM_CLASSES), lambda n: (0, 0)),
        ],
        out_specs=pl.BlockSpec((1, 1, NUM_CLASSES), lambda n: (n, 0, 0)),
        out_shape=jax.ShapeDtypeStruct((N, 1, NUM_CLASSES), jnp.float32),
        compiler_params=_cparams(1),
        cost_estimate=_cost(flops, bytes_acc),
    )(x3, lc["w"], lc["scale"].reshape(1, Clast), lc["shift"].reshape(1, Clast),
      cls["fc1_w"], cls["fc1_b"].reshape(1, Chid),
      cls["fc2_w"], cls["fc2_b"].reshape(1, NUM_CLASSES))
    return out.reshape(N, NUM_CLASSES)


# ------------------------------------------------------------------
# Model plumbing
# ------------------------------------------------------------------

def inverted_residual(x, cfg, p):
    act = "hardswish" if cfg["use_hs"] else "relu"
    use_res = cfg["stride"] == 1 and cfg["input_channels"] == cfg["out_channels"]
    N, H, W, Cin = x.shape
    inp = x

    if "expand" in p:
        e = p["expand"]
        xm = pw_conv_bn_act(x.reshape(N * H * W, Cin), e["w"], e["scale"], e["shift"], act)
        x = xm.reshape(N, H, W, e["w"].shape[1])

    stride = 1 if cfg["dilation"] > 1 else cfg["stride"]
    return fused_block(x, p, cfg, stride, act, residual=inp if use_res else None)


def mobilenet_v3_forward(params, x_nchw):
    x = jnp.transpose(x_nchw, (0, 2, 3, 1)).astype(jnp.bfloat16)   # NCHW -> NHWC, bf16
    N = x.shape[0]

    # stem: 3x3/s2 conv + BN + Hardswish as one lane-dense MXU matmul over N*H*W rows
    f = params["first"]
    patches, Ho, Wo = _im2col_stem(x, k=3, stride=2, dil=1)
    Kp = patches.shape[-1]
    xm = pw_conv_bn_act(patches.reshape(N * Ho * Wo, Kp),
                        f["w"], f["scale"], f["shift"], "hardswish")
    x = xm.reshape(N, Ho, Wo, f["w"].shape[1])

    for cfg, bp in zip(BLOCK_CONFIGS, params["blocks"]):
        x = inverted_residual(x, cfg, bp)

    # fused tail: last conv + BN + Hardswish -> avgpool -> classifier
    N2, H2, W2, C2 = x.shape
    return tail_head(x.reshape(N2, H2 * W2, C2), params["last_conv"], params["classifier"])


# ------------------------------------------------------------------
# Deterministic parameter construction (mirrors the module's __init__)
# ------------------------------------------------------------------

def _bn_affine(c):
    gamma = jnp.ones((c,), jnp.float32)
    beta = jnp.zeros((c,), jnp.float32)
    mean = jnp.zeros((c,), jnp.float32)
    var = jnp.ones((c,), jnp.float32)
    scale = gamma / jnp.sqrt(var + BN_EPS)
    shift = beta - mean * scale
    return scale, shift


def _conv_w(key, k, cin, cout):      # kaiming_normal_(mode='fan_out')
    fan_out = k * k * cout
    return jax.random.normal(key, (k, k, cin, cout), jnp.float32) * jnp.sqrt(2.0 / fan_out)


def _dw_w(key, k, c):                # depthwise conv weight, kaiming fan_out
    fan_out = k * k * c
    return jax.random.normal(key, (k, k, c), jnp.float32) * jnp.sqrt(2.0 / fan_out)


def _linear_w(key, cin, cout):       # nn.init.normal_(0, 0.01)
    return jax.random.normal(key, (cin, cout), jnp.float32) * 0.01


def build_params(key):
    keys = iter(jax.random.split(key, 64))
    bf16 = jnp.bfloat16
    params = {}

    first_out = BLOCK_CONFIGS[0]["input_channels"]
    sc, sh = _bn_affine(first_out)
    params["first"] = dict(
        w=_conv_w(next(keys), 3, 3, first_out).reshape(3 * 3 * 3, first_out).astype(bf16),
        scale=sc, shift=sh)

    blocks = []
    for cfg in BLOCK_CONFIGS:
        cin, cexp, cout = cfg["input_channels"], cfg["expanded_channels"], cfg["out_channels"]
        kk = cfg["kernel"]
        b = {}
        if cexp != cin:
            sc, sh = _bn_affine(cexp)
            b["expand"] = dict(w=_conv_w(next(keys), 1, cin, cexp).reshape(cin, cexp).astype(bf16),
                               scale=sc, shift=sh)
        sc, sh = _bn_affine(cexp)
        b["dw"] = dict(w=_dw_w(next(keys), kk, cexp).reshape(kk * kk, cexp).astype(bf16),
                       scale=sc, shift=sh)
        if cfg["use_se"]:
            csq = _make_divisible(cexp // 4)
            b["se"] = dict(
                fc1_w=_conv_w(next(keys), 1, cexp, csq).reshape(cexp, csq).astype(bf16),
                fc1_b=jnp.zeros((csq,), jnp.float32),
                fc2_w=_conv_w(next(keys), 1, csq, cexp).reshape(csq, cexp).astype(bf16),
                fc2_b=jnp.zeros((cexp,), jnp.float32))
        sc, sh = _bn_affine(cout)
        b["project"] = dict(w=_conv_w(next(keys), 1, cexp, cout).reshape(cexp, cout).astype(bf16),
                            scale=sc, shift=sh)
        blocks.append(b)
    params["blocks"] = blocks

    last_in = BLOCK_CONFIGS[-1]["out_channels"]
    last_out = 6 * last_in
    sc, sh = _bn_affine(last_out)
    params["last_conv"] = dict(
        w=_conv_w(next(keys), 1, last_in, last_out).reshape(last_in, last_out).astype(bf16),
        scale=sc, shift=sh)
    params["classifier"] = dict(
        fc1_w=_linear_w(next(keys), last_out, LAST_CHANNEL).astype(bf16),
        fc1_b=jnp.zeros((LAST_CHANNEL,), jnp.float32),
        fc2_w=_linear_w(next(keys), LAST_CHANNEL, NUM_CLASSES).astype(bf16),
        fc2_b=jnp.zeros((NUM_CLASSES,), jnp.float32))
    return params


if __name__ == "__main__":
    key = jax.random.PRNGKey(0)
    pkey, xkey = jax.random.split(key)
    params = build_params(pkey)
    x = jax.random.normal(xkey, (2, 3, 16, 16), jnp.float32)  # NCHW input, like torch
    out = jax.jit(mobilenet_v3_forward)(params, x)
    out = jax.block_until_ready(out)
    assert out.shape == (2, NUM_CLASSES), out.shape
    assert bool(jnp.all(jnp.isfinite(out)))
    print("KERNEL_OK")
</pallas_src>

<mosaic_0001>
module attributes {stable_mosaic.version = 11 : i64} {
  func.func @_pw_kernel(%arg0: i32, %arg1: memref<64x27xbf16, #tpu.memory_space<vmem>>, %arg2: memref<27x16xbf16, #tpu.memory_space<vmem>>, %arg3: memref<1x16xf32, #tpu.memory_space<vmem>>, %arg4: memref<1x16xf32, #tpu.memory_space<vmem>>, %arg5: memref<64x16xbf16, #tpu.memory_space<vmem>>) attributes {dimension_semantics = [#tpu.dimension_semantics<parallel>], iteration_bounds = array<i64: 2>, scalar_prefetch = 0 : i64, scratch_operands = 0 : i64, tpu.core_type = #tpu.core_type<tc>, window_params = [{transform_indices = @transform_0, window_bounds = array<i64: 64, 27>}, {pipeline_mode = #tpu.pipeline_mode<synchronous>, transform_indices = @transform_1, window_bounds = array<i64: 27, 16>}, {pipeline_mode = #tpu.pipeline_mode<synchronous>, transform_indices = @transform_2, window_bounds = array<i64: 1, 16>}, {pipeline_mode = #tpu.pipeline_mode<synchronous>, transform_indices = @transform_3, window_bounds = array<i64: 1, 16>}, {transform_indices = @transform_4, window_bounds = array<i64: 64, 16>}]} {
    %c0 = arith.constant 0 : index
    %c0_0 = arith.constant 0 : index
    %0 = vector.load %arg1[%c0, %c0_0] : memref<64x27xbf16, #tpu.memory_space<vmem>>, vector<64x27xbf16>
    %c0_1 = arith.constant 0 : index
    %c0_2 = arith.constant 0 : index
    %1 = vector.load %arg2[%c0_1, %c0_2] : memref<27x16xbf16, #tpu.memory_space<vmem>>, vector<27x16xbf16>
    %cst = arith.constant dense<0.000000e+00> : vector<64x16xf32>
    %2 = tpu.matmul %0, %1, %cst {dimension_numbers = #tpu.dot_dimension_numbers<[1], [0], [0], [1], [0, 0, 1, 1], [], []>} : vector<64x27xbf16>, vector<27x16xbf16>, vector<64x16xf32> -> vector<64x16xf32>
    %c0_3 = arith.constant 0 : index
    %c0_4 = arith.constant 0 : index
    %3 = vector.load %arg3[%c0_3, %c0_4] : memref<1x16xf32, #tpu.memory_space<vmem>>, vector<1x16xf32>
    %4 = vector.broadcast %3 : vector<1x16xf32> to vector<64x16xf32>
    %5 = arith.mulf %2, %4 : vector<64x16xf32>
    %c0_5 = arith.constant 0 : index
    %c0_6 = arith.constant 0 : index
    %6 = vector.load %arg4[%c0_5, %c0_6] : memref<1x16xf32, #tpu.memory_space<vmem>>, vector<1x16xf32>
    %7 = vector.broadcast %6 : vector<1x16xf32> to vector<64x16xf32>
    %8 = arith.addf %5, %7 : vector<64x16xf32>
    %cst_7 = arith.constant 3.000000e+00 : f32
    %9 = vector.broadcast %cst_7 : f32 to vector<64x16xf32>
    %10 = arith.addf %8, %9 : vector<64x16xf32>
    %cst_8 = arith.constant 0.000000e+00 : f32
    %cst_9 = arith.constant 6.000000e+00 : f32
    %11 = vector.broadcast %cst_8 : f32 to vector<64x16xf32>
    %12 = arith.maximumf %11, %10 : vector<64x16xf32>
    %13 = vector.broadcast %cst_9 : f32 to vector<64x16xf32>
    %14 = arith.minimumf %13, %12 : vector<64x16xf32>
    %15 = arith.mulf %8, %14 : vector<64x16xf32>
    %cst_10 = arith.constant 0.166666672 : f32
    %16 = vector.broadcast %cst_10 : f32 to vector<64x16xf32>
    %17 = arith.mulf %15, %16 : vector<64x16xf32>
    %18 = arith.truncf %17 : vector<64x16xf32> to vector<64x16xbf16>
    %c0_11 = arith.constant 0 : index
    %c0_12 = arith.constant 0 : index
    %19 = vector.load %arg5[%c0_11, %c0_12] : memref<64x16xbf16, #tpu.memory_space<vmem>>, vector<64x16xbf16>
    tpu.vector_store %arg5[%c0_11, %c0_12], %18 {strides = array<i32>} : memref<64x16xbf16, #tpu.memory_space<vmem>>, vector<64x16xbf16>,
    return
  }
  func.func @transform_0(%arg0: i32) -> (i32, i32) {
    %c0_i32 = arith.constant 0 : i32
    %c0_i32_0 = arith.constant 0 : i32
    return %arg0, %c0_i32 : i32, i32
  }
  func.func @transform_1(%arg0: i32) -> (i32, i32) {
    %c0_i32 = arith.constant 0 : i32
    %c0_i32_0 = arith.constant 0 : i32
    %c0_i32_1 = arith.constant 0 : i32
    return %c0_i32, %c0_i32_0 : i32, i32
  }
  func.func @transform_2(%arg0: i32) -> (i32, i32) {
    %c0_i32 = arith.constant 0 : i32
    %c0_i32_0 = arith.constant 0 : i32
    %c0_i32_1 = arith.constant 0 : i32
    return %c0_i32, %c0_i32_0 : i32, i32
  }
  func.func @transform_3(%arg0: i32) -> (i32, i32) {
    %c0_i32 = arith.constant 0 : i32
    %c0_i32_0 = arith.constant 0 : i32
    %c0_i32_1 = arith.constant 0 : i32
    return %c0_i32, %c0_i32_0 : i32, i32
  }
  func.func @transform_4(%arg0: i32) -> (i32, i32) {
    %c0_i32 = arith.constant 0 : i32
    %c0_i32_0 = arith.constant 0 : i32
    return %arg0, %c0_i32 : i32, i32
  }
}

module attributes {stable_mosaic.version = 11 : i64} {
  func.func @_block_kernel(%arg0: i32, %arg1: memref<1x1x10x10x16xbf16, #tpu.memory_space<vmem>>, %arg2: memref<9x16xbf16, #tpu.memory_space<vmem>>, %arg3: memref<1x16xf32, #tpu.memory_space<vmem>>, %arg4: memref<1x16xf32, #tpu.memory_space<vmem>>, %arg5: memref<16x8xbf16, #tpu.memory_space<vmem>>, %arg6: memref<1x8xf32, #tpu.memory_space<vmem>>, %arg7: memref<8x16xbf16, #tpu.memory_space<vmem>>, %arg8: memref<1x16xf32, #tpu.memory_space<vmem>>, %arg9: memref<16x16xbf16, #tpu.memory_space<vmem>>, %arg10: memref<1x16xf32, #tpu.memory_space<vmem>>, %arg11: memref<1x16xf32, #tpu.memory_space<vmem>>, %arg12: memref<1x8x8x16xbf16, #tpu.memory_space<vmem>>, %arg13: memref<1x8x8x16xbf16, #tpu.memory_space<vmem>>) attributes {dimension_semantics = [#tpu.dimension_semantics<parallel>], iteration_bounds = array<i64: 2>, scalar_prefetch = 0 : i64, scratch_operands = 0 : i64, tpu.core_type = #tpu.core_type<tc>, window_params = [{transform_indices = @transform_0, window_bounds = array<i64: 1, 1, 10, 10, 16>}, {pipeline_mode = #tpu.pipeline_mode<synchronous>, transform_indices = @transform_1, window_bounds = array<i64: 9, 16>}, {pipeline_mode = #tpu.pipeline_mode<synchronous>, transform_indices = @transform_2, window_bounds = array<i64: 1, 16>}, {pipeline_mode = #tpu.pipeline_mode<synchronous>, transform_indices = @transform_3, window_bounds = array<i64: 1, 16>}, {pipeline_mode = #tpu.pipeline_mode<synchronous>, transform_indices = @transform_4, window_bounds = array<i64: 16, 8>}, {pipeline_mode = #tpu.pipeline_mode<synchronous>, transform_indices = @transform_5, window_bounds = array<i64: 1, 8>}, {pipeline_mode = #tpu.pipeline_mode<synchronous>, transform_indices = @transform_6, window_bounds = array<i64: 8, 16>}, {pipeline_mode = #tpu.pipeline_mode<synchronous>, transform_indices = @transform_7, window_bounds = array<i64: 1, 16>}, {pipeline_mode = #tpu.pipeline_mode<synchronous>, transform_indices = @transform_8, window_bounds = array<i64: 16, 16>}, {pipeline_mode = #tpu.pipeline_mode<synchronous>, transform_indices = @transform_9, window_bounds = array<i64: 1, 16>}, {pipeline_mode = #tpu.pipeline_mode<synchronous>, transform_indices = @transform_10, window_bounds = array<i64: 1, 16>}, {transform_indices = @transform_11, window_bounds = array<i64: 1, 8, 8, 16>}, {transform_indices = @transform_12, window_bounds = array<i64: 1, 8, 8, 16>}]} {
    %c0 = arith.constant 0 : index
    %c0_0 = arith.constant 0 : index
    %0 = vector.load %arg2[%c0, %c0_0] : memref<9x16xbf16, #tpu.memory_space<vmem>>, vector<9x16xbf16>
    %1 = arith.extf %0 : vector<9x16xbf16> to vector<9x16xf32>
    %c0_1 = arith.constant 0 : index
    %c0_2 = arith.constant 0 : index
    %c0_3 = arith.constant 0 : index
    %c0_4 = arith.constant 0 : index
    %c0_5 = arith.constant 0 : index
    %2 = vector.load %arg1[%c0_1, %c0_2, %c0_3, %c0_4, %c0_5] : memref<1x1x10x10x16xbf16, #tpu.memory_space<vmem>>, vector<1x1x8x8x16xbf16>
    %3 = vector.shape_cast %2 : vector<1x1x8x8x16xbf16> to vector<8x8x16xbf16>
    %4 = arith.extf %3 : vector<8x8x16xbf16> to vector<8x8x16xf32>
    %5 = vector.extract_strided_slice %1 {offsets = [0, 0], sizes = [1, 16], strides = [1, 1]} : vector<9x16xf32> to vector<1x16xf32>
    %6 = vector.shape_cast %5 : vector<1x16xf32> to vector<1x1x16xf32>
    %7 = vector.broadcast %6 : vector<1x1x16xf32> to vector<8x8x16xf32>
    %8 = arith.mulf %4, %7 : vector<8x8x16xf32>
    %c0_6 = arith.constant 0 : index
    %c0_7 = arith.constant 0 : index
    %c0_8 = arith.constant 0 : index
    %c1 = arith.constant 1 : index
    %c0_9 = arith.constant 0 : index
    %9 = vector.load %arg1[%c0_6, %c0_7, %c0_8, %c1, %c0_9] : memref<1x1x10x10x16xbf16, #tpu.memory_space<vmem>>, vector<1x1x8x8x16xbf16>
    %10 = vector.shape_cast %9 : vector<1x1x8x8x16xbf16> to vector<8x8x16xbf16>
    %11 = arith.extf %10 : vector<8x8x16xbf16> to vector<8x8x16xf32>
    %12 = vector.extract_strided_slice %1 {offsets = [1, 0], sizes = [1, 16], strides = [1, 1]} : vector<9x16xf32> to vector<1x16xf32>
    %13 = vector.shape_cast %12 : vector<1x16xf32> to vector<1x1x16xf32>
    %14 = vector.broadcast %13 : vector<1x1x16xf32> to vector<8x8x16xf32>
    %15 = arith.mulf %11, %14 : vector<8x8x16xf32>
    %16 = arith.addf %8, %15 : vector<8x8x16xf32>
    %c0_10 = arith.constant 0 : index
    %c0_11 = arith.constant 0 : index
    %c0_12 = arith.constant 0 : index
    %c2 = arith.constant 2 : index
    %c0_13 = arith.constant 0 : index
    %17 = vector.load %arg1[%c0_10, %c0_11, %c0_12, %c2, %c0_13] : memref<1x1x10x10x16xbf16, #tpu.memory_space<vmem>>, vector<1x1x8x8x16xbf16>
    %18 = vector.shape_cast %17 : vector<1x1x8x8x16xbf16> to vector<8x8x16xbf16>
    %19 = arith.extf %18 : vector<8x8x16xbf16> to vector<8x8x16xf32>
    %20 = vector.extract_strided_slice %1 {offsets = [2, 0], sizes = [1, 16], strides = [1, 1]} : vector<9x16xf32> to vector<1x16xf32>
    %21 = vector.shape_cast %20 : vector<1x16xf32> to vector<1x1x16xf32>
    %22 = vector.broadcast %21 : vector<1x1x16xf32> to vector<8x8x16xf32>
    %23 = arith.mulf %19, %22 : vector<8x8x16xf32>
    %24 = arith.addf %16, %23 : vector<8x8x16xf32>
    %c0_14 = arith.constant 0 : index
    %c0_15 = arith.constant 0 : index
    %c1_16 = arith.constant 1 : index
    %c0_17 = arith.constant 0 : index
    %c0_18 = arith.constant 0 : index
    %25 = vector.load %arg1[%c0_14, %c0_15, %c1_16, %c0_17, %c0_18] : memref<1x1x10x10x16xbf16, #tpu.memory_space<vmem>>, vector<1x1x8x8x16xbf16>
    %26 = vector.shape_cast %25 : vector<1x1x8x8x16xbf16> to vector<8x8x16xbf16>
    %27 = arith.extf %26 : vector<8x8x16xbf16> to vector<8x8x16xf32>
    %28 = vector.extract_strided_slice %1 {offsets = [3, 0], sizes = [1, 16], strides = [1, 1]} : vector<9x16xf32> to vector<1x16xf32>
    %29 = vector.shape_cast %28 : vector<1x16xf32> to vector<1x1x16xf32>
    %30 = vector.broadcast %29 : vector<1x1x16xf32> to vector<8x8x16xf32>
    %31 = arith.mulf %27, %30 : vector<8x8x16xf32>
    %32 = arith.addf %24, %31 : vector<8x8x16xf32>
    %c0_19 = arith.constant 0 : index
    %c0_20 = arith.constant 0 : index
    %c1_21 = arith.constant 1 : index
    %c1_22 = arith.constant 1 : index
    %c0_23 = arith.constant 0 : index
    %33 = vector.load %arg1[%c0_19, %c0_20, %c1_21, %c1_22, %c0_23] : memref<1x1x10x10x16xbf16, #tpu.memory_space<vmem>>, vector<1x1x8x8x16xbf16>
    %34 = vector.shape_cast %33 : vector<1x1x8x8x16xbf16> to vector<8x8x16xbf16>
    %35 = arith.extf %34 : vector<8x8x16xbf16> to vector<8x8x16xf32>
    %36 = vector.extract_strided_slice %1 {offsets = [4, 0], sizes = [1, 16], strides = [1, 1]} : vector<9x16xf32> to vector<1x16xf32>
    %37 = vector.shape_cast %36 : vector<1x16xf32> to vector<1x1x16xf32>
    %38 = vector.broadcast %37 : vector<1x1x16xf32> to vector<8x8x16xf32>
    %39 = arith.mulf %35, %38 : vector<8x8x16xf32>
    %40 = arith.addf %32, %39 : vector<8x8x16xf32>
    %c0_24 = arith.constant 0 : index
    %c0_25 = arith.constant 0 : index
    %c1_26 = arith.constant 1 : index
    %c2_27 = arith.constant 2 : index
    %c0_28 = arith.constant 0 : index
    %41 = vector.load %arg1[%c0_24, %c0_25, %c1_26, %c2_27, %c0_28] : memref<1x1x10x10x16xbf16, #tpu.memory_space<vmem>>, vector<1x1x8x8x16xbf16>
    %42 = vector.shape_cast %41 : vector<1x1x8x8x16xbf16> to vector<8x8x16xbf16>
    %43 = arith.extf %42 : vector<8x8x16xbf16> to vector<8x8x16xf32>
    %44 = vector.extract_strided_slice %1 {offsets = [5, 0], sizes = [1, 16], strides = [1, 1]} : vector<9x16xf32> to vector<1x16xf32>
    %45 = vector.shape_cast %44 : vector<1x16xf32> to vector<1x1x16xf32>
    %46 = vector.broadcast %45 : vector<1x1x16xf32> to vector<8x8x16xf32>
    %47 = arith.mulf %43, %46 : vector<8x8x16xf32>
    %48 = arith.addf %40, %47 : vector<8x8x16xf32>
    %c0_29 = arith.constant 0 : index
    %c0_30 = arith.constant 0 : index
    %c2_31 = arith.constant 2 : index
    %c0_32 = arith.constant 0 : index
    %c0_33 = arith.constant 0 : index
    %49 = vector.load %arg1[%c0_29, %c0_30, %c2_31, %c0_32, %c0_33] : memref<1x1x10x10x16xbf16, #tpu.memory_space<vmem>>, vector<1x1x8x8x16xbf16>
    %50 = vector.shape_cast %49 : vector<1x1x8x8x16xbf16> to vector<8x8x16xbf16>
    %51 = arith.extf %50 : vector<8x8x16xbf16> to vector<8x8x16xf32>
    %52 = vector.extract_strided_slice %1 {offsets = [6, 0], sizes = [1, 16], strides = [1, 1]} : vector<9x16xf32> to vector<1x16xf32>
    %53 = vector.shape_cast %52 : vector<1x16xf32> to vector<1x1x16xf32>
    %54 = vector.broadcast %53 : vector<1x1x16xf32> to vector<8x8x16xf32>
    %55 = arith.mulf %51, %54 : vector<8x8x16xf32>
    %56 = arith.addf %48, %55 : vector<8x8x16xf32>
    %c0_34 = arith.constant 0 : index
    %c0_35 = arith.constant 0 : index
    %c2_36 = arith.constant 2 : index
    %c1_37 = arith.constant 1 : index
    %c0_38 = arith.constant 0 : index
    %57 = vector.load %arg1[%c0_34, %c0_35, %c2_36, %c1_37, %c0_38] : memref<1x1x10x10x16xbf16, #tpu.memory_space<vmem>>, vector<1x1x8x8x16xbf16>
    %58 = vector.shape_cast %57 : vector<1x1x8x8x16xbf16> to vector<8x8x16xbf16>
    %59 = arith.extf %58 : vector<8x8x16xbf16> to vector<8x8x16xf32>
    %60 = vector.extract_strided_slice %1 {offsets = [7, 0], sizes = [1, 16], strides = [1, 1]} : vector<9x16xf32> to vector<1x16xf32>
    %61 = vector.shape_cast %60 : vector<1x16xf32> to vector<1x1x16xf32>
    %62 = vector.broadcast %61 : vector<1x1x16xf32> to vector<8x8x16xf32>
    %63 = arith.mulf %59, %62 : vector<8x8x16xf32>
    %64 = arith.addf %56, %63 : vector<8x8x16xf32>
    %c0_39 = arith.constant 0 : index
    %c0_40 = arith.constant 0 : index
    %c2_41 = arith.constant 2 : index
    %c2_42 = arith.constant 2 : index
    %c0_43 = arith.constant 0 : index
    %65 = vector.load %arg1[%c0_39, %c0_40, %c2_41, %c2_42, %c0_43] : memref<1x1x10x10x16xbf16, #tpu.memory_space<vmem>>, vector<1x1x8x8x16xbf16>
    %66 = vector.shape_cast %65 : vector<1x1x8x8x16xbf16> to vector<8x8x16xbf16>
    %67 = arith.extf %66 : vector<8x8x16xbf16> to vector<8x8x16xf32>
    %68 = vector.extract_strided_slice %1 {offsets = [8, 0], sizes = [1, 16], strides = [1, 1]} : vector<9x16xf32> to vector<1x16xf32>
    %69 = vector.shape_cast %68 : vector<1x16xf32> to vector<1x1x16xf32>
    %70 = vector.broadcast %69 : vector<1x1x16xf32> to vector<8x8x16xf32>
    %71 = arith.mulf %67, %70 : vector<8x8x16xf32>
    %72 = arith.addf %64, %71 : vector<8x8x16xf32>
    %c0_44 = arith.constant 0 : index
    %c0_45 = arith.constant 0 : index
    %73 = vector.load %arg3[%c0_44, %c0_45] : memref<1x16xf32, #tpu.memory_space<vmem>>, vector<1x16xf32>
    %74 = vector.shape_cast %73 : vector<1x16xf32> to vector<1x1x16xf32>
    %75 = vector.broadcast %74 : vector<1x1x16xf32> to vector<8x8x16xf32>
    %76 = arith.mulf %72, %75 : vector<8x8x16xf32>
    %c0_46 = arith.constant 0 : index
    %c0_47 = arith.constant 0 : index
    %77 = vector.load %arg4[%c0_46, %c0_47] : memref<1x16xf32, #tpu.memory_space<vmem>>, vector<1x16xf32>
    %78 = vector.shape_cast %77 : vector<1x16xf32> to vector<1x1x16xf32>
    %79 = vector.broadcast %78 : vector<1x1x16xf32> to vector<8x8x16xf32>
    %80 = arith.addf %76, %79 : vector<8x8x16xf32>
    %cst = arith.constant 0.000000e+00 : f32
    %81 = vector.broadcast %cst : f32 to vector<8x8x16xf32>
    %82 = arith.maximumf %80, %81 : vector<8x8x16xf32>
    %83 = vector.extract_strided_slice %82 {offsets = [0, 0, 0], sizes = [1, 8, 16], strides = [1, 1, 1]} : vector<8x8x16xf32> to vector<1x8x16xf32>
    %84 = vector.shape_cast %83 : vector<1x8x16xf32> to vector<8x16xf32>
    %85 = vector.extract_strided_slice %82 {offsets = [1, 0, 0], sizes = [1, 8, 16], strides = [1, 1, 1]} : vector<8x8x16xf32> to vector<1x8x16xf32>
    %86 = vector.shape_cast %85 : vector<1x8x16xf32> to vector<8x16xf32>
    %87 = arith.addf %84, %86 : vector<8x16xf32>
    %88 = vector.extract_strided_slice %82 {offsets = [2, 0, 0], sizes = [1, 8, 16], strides = [1, 1, 1]} : vector<8x8x16xf32> to vector<1x8x16xf32>
    %89 = vector.shape_cast %88 : vector<1x8x16xf32> to vector<8x16xf32>
    %90 = arith.addf %87, %89 : vector<8x16xf32>
    %91 = vector.extract_strided_slice %82 {offsets = [3, 0, 0], sizes = [1, 8, 16], strides = [1, 1, 1]} : vector<8x8x16xf32> to vector<1x8x16xf32>
    %92 = vector.shape_cast %91 : vector<1x8x16xf32> to vector<8x16xf32>
    %93 = arith.addf %90, %92 : vector<8x16xf32>
    %94 = vector.extract_strided_slice %82 {offsets = [4, 0, 0], sizes = [1, 8, 16], strides = [1, 1, 1]} : vector<8x8x16xf32> to vector<1x8x16xf32>
    %95 = vector.shape_cast %94 : vector<1x8x16xf32> to vector<8x16xf32>
    %96 = arith.addf %93, %95 : vector<8x16xf32>
    %97 = vector.extract_strided_slice %82 {offsets = [5, 0, 0], sizes = [1, 8, 16], strides = [1, 1, 1]} : vector<8x8x16xf32> to vector<1x8x16xf32>
    %98 = vector.shape_cast %97 : vector<1x8x16xf32> to vector<8x16xf32>
    %99 = arith.addf %96, %98 : vector<8x16xf32>
    %100 = vector.extract_strided_slice %82 {offsets = [6, 0, 0], sizes = [1, 8, 16], strides = [1, 1, 1]} : vector<8x8x16xf32> to vector<1x8x16xf32>
    %101 = vector.shape_cast %100 : vector<1x8x16xf32> to vector<8x16xf32>
    %102 = arith.addf %99, %101 : vector<8x16xf32>
    %103 = vector.extract_strided_slice %82 {offsets = [7, 0, 0], sizes = [1, 8, 16], strides = [1, 1, 1]} : vector<8x8x16xf32> to vector<1x8x16xf32>
    %104 = vector.shape_cast %103 : vector<1x8x16xf32> to vector<8x16xf32>
    %105 = arith.addf %102, %104 : vector<8x16xf32>
    %cst_48 = arith.constant dense<0.000000e+00> : vector<16xf32>
    %106 = vector.multi_reduction <add>, %105, %cst_48 [0] : vector<8x16xf32> to vector<16xf32>
    %107 = vector.shape_cast %106 : vector<16xf32> to vector<1x16xf32>
    %cst_49 = arith.constant 1.562500e-02 : f32
    %108 = vector.broadcast %cst_49 : f32 to vector<1x16xf32>
    %109 = arith.mulf %107, %108 : vector<1x16xf32>
    %c0_50 = arith.constant 0 : index
    %c0_51 = arith.constant 0 : index
    %110 = vector.load %arg5[%c0_50, %c0_51] : memref<16x8xbf16, #tpu.memory_space<vmem>>, vector<16x8xbf16>
    %111 = arith.extf %110 : vector<16x8xbf16> to vector<16x8xf32>
    %cst_52 = arith.constant dense<0.000000e+00> : vector<1x8xf32>
    %112 = tpu.matmul %109, %111, %cst_52 {dimension_numbers = #tpu.dot_dimension_numbers<[1], [0], [0], [1], [0, 0, 1, 1], [], []>} : vector<1x16xf32>, vector<16x8xf32>, vector<1x8xf32> -> vector<1x8xf32>
    %c0_53 = arith.constant 0 : index
    %c0_54 = arith.constant 0 : index
    %113 = vector.load %arg6[%c0_53, %c0_54] : memref<1x8xf32, #tpu.memory_space<vmem>>, vector<1x8xf32>
    %114 = arith.addf %112, %113 : vector<1x8xf32>
    %cst_55 = arith.constant 0.000000e+00 : f32
    %115 = vector.broadcast %cst_55 : f32 to vector<1x8xf32>
    %116 = arith.maximumf %114, %115 : vector<1x8xf32>
    %c0_56 = arith.constant 0 : index
    %c0_57 = arith.constant 0 : index
    %117 = vector.load %arg7[%c0_56, %c0_57] : memref<8x16xbf16, #tpu.memory_space<vmem>>, vector<8x16xbf16>
    %118 = arith.extf %117 : vector<8x16xbf16> to vector<8x16xf32>
    %cst_58 = arith.constant dense<0.000000e+00> : vector<1x16xf32>
    %119 = tpu.matmul %116, %118, %cst_58 {dimension_numbers = #tpu.dot_dimension_numbers<[1], [0], [0], [1], [0, 0, 1, 1], [], []>} : vector<1x8xf32>, vector<8x16xf32>, vector<1x16xf32> -> vector<1x16xf32>
    %c0_59 = arith.constant 0 : index
    %c0_60 = arith.constant 0 : index
    %120 = vector.load %arg8[%c0_59, %c0_60] : memref<1x16xf32, #tpu.memory_space<vmem>>, vector<1x16xf32>
    %121 = arith.addf %119, %120 : vector<1x16xf32>
    %cst_61 = arith.constant 3.000000e+00 : f32
    %122 = vector.broadcast %cst_61 : f32 to vector<1x16xf32>
    %123 = arith.addf %121, %122 : vector<1x16xf32>
    %cst_62 = arith.constant 0.000000e+00 : f32
    %cst_63 = arith.constant 6.000000e+00 : f32
    %124 = vector.broadcast %cst_62 : f32 to vector<1x16xf32>
    %125 = arith.maximumf %124, %123 : vector<1x16xf32>
    %126 = vector.broadcast %cst_63 : f32 to vector<1x16xf32>
    %127 = arith.minimumf %126, %125 : vector<1x16xf32>
    %cst_64 = arith.constant 0.166666672 : f32
    %128 = vector.broadcast %cst_64 : f32 to vector<1x16xf32>
    %129 = arith.mulf %127, %128 : vector<1x16xf32>
    %130 = vector.shape_cast %129 : vector<1x16xf32> to vector<1x1x16xf32>
    %131 = vector.broadcast %130 : vector<1x1x16xf32> to vector<8x8x16xf32>
    %132 = arith.mulf %82, %131 : vector<8x8x16xf32>
    %c0_65 = arith.constant 0 : index
    %c0_66 = arith.constant 0 : index
    %133 = vector.load %arg9[%c0_65, %c0_66] : memref<16x16xbf16, #tpu.memory_space<vmem>>, vector<16x16xbf16>
    %134 = arith.extf %133 : vector<16x16xbf16> to vector<16x16xf32>
    %135 = vector.extract_strided_slice %132 {offsets = [0, 0, 0], sizes = [1, 8, 16], strides = [1, 1, 1]} : vector<8x8x16xf32> to vector<1x8x16xf32>
    %136 = vector.shape_cast %135 : vector<1x8x16xf32> to vector<8x16xf32>
    %cst_67 = arith.constant dense<0.000000e+00> : vector<8x16xf32>
    %137 = tpu.matmul %136, %134, %cst_67 {dimension_numbers = #tpu.dot_dimension_numbers<[1], [0], [0], [1], [0, 0, 1, 1], [], []>} : vector<8x16xf32>, vector<16x16xf32>, vector<8x16xf32> -> vector<8x16xf32>
    %c0_68 = arith.constant 0 : index
    %c0_69 = arith.constant 0 : index
    %138 = vector.load %arg10[%c0_68, %c0_69] : memref<1x16xf32, #tpu.memory_space<vmem>>, vector<1x16xf32>
    %139 = vector.broadcast %138 : vector<1x16xf32> to vector<8x16xf32>
    %140 = arith.mulf %137, %139 : vector<8x16xf32>
    %c0_70 = arith.constant 0 : index
    %c0_71 = arith.constant 0 : index
    %141 = vector.load %arg11[%c0_70, %c0_71] : memref<1x16xf32, #tpu.memory_space<vmem>>, vector<1x16xf32>
    %142 = vector.broadcast %141 : vector<1x16xf32> to vector<8x16xf32>
    %143 = arith.addf %140, %142 : vector<8x16xf32>
    %c0_72 = arith.constant 0 : index
    %c0_73 = arith.constant 0 : index
    %c0_74 = arith.constant 0 : index
    %c0_75 = arith.constant 0 : index
    %144 = vector.load %arg12[%c0_72, %c0_73, %c0_74, %c0_75] : memref<1x8x8x16xbf16, #tpu.memory_space<vmem>>, vector<1x1x8x16xbf16>
    %145 = vector.shape_cast %144 : vector<1x1x8x16xbf16> to vector<8x16xbf16>
    %146 = arith.extf %145 : vector<8x16xbf16> to vector<8x16xf32>
    %147 = arith.addf %143, %146 : vector<8x16xf32>
    %148 = arith.truncf %147 : vector<8x16xf32> to vector<8x16xbf16>
    %c0_76 = arith.constant 0 : index
    %c0_77 = arith.constant 0 : index
    %c0_78 = arith.constant 0 : index
    %c0_79 = arith.constant 0 : index
    %149 = vector.load %arg13[%c0_76, %c0_77, %c0_78, %c0_79] : memref<1x8x8x16xbf16, #tpu.memory_space<vmem>>, vector<1x1x8x16xbf16>
    %150 = vector.shape_cast %149 : vector<1x1x8x16xbf16> to vector<8x16xbf16>
    %151 = vector.shape_cast %148 : vector<8x16xbf16> to vector<1x1x8x16xbf16>
    tpu.vector_store %arg13[%c0_76, %c0_77, %c0_78, %c0_79], %151 {strides = array<i32>} : memref<1x8x8x16xbf16, #tpu.memory_space<vmem>>, vector<1x1x8x16xbf16>,
    %152 = vector.extract_strided_slice %132 {offsets = [1, 0, 0], sizes = [1, 8, 16], strides = [1, 1, 1]} : vector<8x8x16xf32> to vector<1x8x16xf32>
    %153 = vector.shape_cast %152 : vector<1x8x16xf32> to vector<8x16xf32>
    %cst_80 = arith.constant dense<0.000000e+00> : vector<8x16xf32>
    %154 = tpu.matmul %153, %134, %cst_80 {dimension_numbers = #tpu.dot_dimension_numbers<[1], [0], [0], [1], [0, 0, 1, 1], [], []>} : vector<8x16xf32>, vector<16x16xf32>, vector<8x16xf32> -> vector<8x16xf32>
    %c0_81 = arith.constant 0 : index
    %c0_82 = arith.constant 0 : index
    %155 = vector.load %arg10[%c0_81, %c0_82] : memref<1x16xf32, #tpu.memory_space<vmem>>, vector<1x16xf32>
    %156 = vector.broadcast %155 : vector<1x16xf32> to vector<8x16xf32>
    %157 = arith.mulf %154, %156 : vector<8x16xf32>
    %c0_83 = arith.constant 0 : index
    %c0_84 = arith.constant 0 : index
    %158 = vector.load %arg11[%c0_83, %c0_84] : memref<1x16xf32, #tpu.memory_space<vmem>>, vector<1x16xf32>
    %159 = vector.broadcast %158 : vector<1x16xf32> to vector<8x16xf32>
    %160 = arith.addf %157, %159 : vector<8x16xf32>
    %c0_85 = arith.constant 0 : index
    %c1_86 = arith.constant 1 : index
    %c0_87 = arith.constant 0 : index
    %c0_88 = arith.constant 0 : index
    %161 = vector.load %arg12[%c0_85, %c1_86, %c0_87, %c0_88] : memref<1x8x8x16xbf16, #tpu.memory_space<vmem>>, vector<1x1x8x16xbf16>
    %162 = vector.shape_cast %161 : vector<1x1x8x16xbf16> to vector<8x16xbf16>
    %163 = arith.extf %162 : vector<8x16xbf16> to vector<8x16xf32>
    %164 = arith.addf %160, %163 : vector<8x16xf32>
    %165 = arith.truncf %164 : vector<8x16xf32> to vector<8x16xbf16>
    %c0_89 = arith.constant 0 : index
    %c1_90 = arith.constant 1 : index
    %c0_91 = arith.constant 0 : index
    %c0_92 = arith.constant 0 : index
    %166 = vector.load %arg13[%c0_89, %c1_90, %c0_91, %c0_92] : memref<1x8x8x16xbf16, #tpu.memory_space<vmem>>, vector<1x1x8x16xbf16>
    %167 = vector.shape_cast %166 : vector<1x1x8x16xbf16> to vector<8x16xbf16>
    %168 = vector.shape_cast %165 : vector<8x16xbf16> to vector<1x1x8x16xbf16>
    tpu.vector_store %arg13[%c0_89, %c1_90, %c0_91, %c0_92], %168 {strides = array<i32>} : memref<1x8x8x16xbf16, #tpu.memory_space<vmem>>, vector<1x1x8x16xbf16>,
    %169 = vector.extract_strided_slice %132 {offsets = [2, 0, 0], sizes = [1, 8, 16], strides = [1, 1, 1]} : vector<8x8x16xf32> to vector<1x8x16xf32>
    %170 = vector.shape_cast %169 : vector<1x8x16xf32> to vector<8x16xf32>
    %cst_93 = arith.constant dense<0.000000e+00> : vector<8x16xf32>
    %171 = tpu.matmul %170, %134, %cst_93 {dimension_numbers = #tpu.dot_dimension_numbers<[1], [0], [0], [1], [0, 0, 1, 1], [], []>} : vector<8x16xf32>, vector<16x16xf32>, vector<8x16xf32> -> vector<8x16xf32>
    %c0_94 = arith.constant 0 : index
    %c0_95 = arith.constant 0 : index
    %172 = vector.load %arg10[%c0_94, %c0_95] : memref<1x16xf32, #tpu.memory_space<vmem>>, vector<1x16xf32>
    %173 = vector.broadcast %172 : vector<1x16xf32> to vector<8x16xf32>
    %174 = arith.mulf %171, %173 : vector<8x16xf32>
    %c0_96 = arith.constant 0 : index
    %c0_97 = arith.constant 0 : index
    %175 = vector.load %arg11[%c0_96, %c0_97] : memref<1x16xf32, #tpu.memory_space<vmem>>, vector<1x16xf32>
    %176 = vector.broadcast %175 : vector<1x16xf32> to vector<8x16xf32>
    %177 = arith.addf %174, %176 : vector<8x16xf32>
    %c0_98 = arith.constant 0 : index
    %c2_99 = arith.constant 2 : index
    %c0_100 = arith.constant 0 : index
    %c0_101 = arith.constant 0 : index
    %178 = vector.load %arg12[%c0_98, %c2_99, %c0_100, %c0_101] : memref<1x8x8x16xbf16, #tpu.memory_space<vmem>>, vector<1x1x8x16xbf16>
    %179 = vector.shape_cast %178 : vector<1x1x8x16xbf16> to vector<8x16xbf16>
    %180 = arith.extf %179 : vector<8x16xbf16> to vector<8x16xf32>
    %181 = arith.addf %177, %180 : vector<8x16xf32>
    %182 = arith.truncf %181 : vector<8x16xf32> to vector<8x16xbf16>
    %c0_102 = arith.constant 0 : index
    %c2_103 = arith.constant 2 : index
    %c0_104 = arith.constant 0 : index
    %c0_105 = arith.constant 0 : index
    %183 = vector.load %arg13[%c0_102, %c2_103, %c0_104, %c0_105] : memref<1x8x8x16xbf16, #tpu.memory_space<vmem>>, vector<1x1x8x16xbf16>
    %184 = vector.shape_cast %183 : vector<1x1x8x16xbf16> to vector<8x16xbf16>
    %185 = vector.shape_cast %182 : vector<8x16xbf16> to vector<1x1x8x16xbf16>
    tpu.vector_store %arg13[%c0_102, %c2_103, %c0_104, %c0_105], %185 {strides = array<i32>} : memref<1x8x8x16xbf16, #tpu.memory_space<vmem>>, vector<1x1x8x16xbf16>,
    %186 = vector.extract_strided_slice %132 {offsets = [3, 0, 0], sizes = [1, 8, 16], strides = [1, 1, 1]} : vector<8x8x16xf32> to vector<1x8x16xf32>
    %187 = vector.shape_cast %186 : vector<1x8x16xf32> to vector<8x16xf32>
    %cst_106 = arith.constant dense<0.000000e+00> : vector<8x16xf32>
    %188 = tpu.matmul %187, %134, %cst_106 {dimension_numbers = #tpu.dot_dimension_numbers<[1], [0], [0], [1], [0, 0, 1, 1], [], []>} : vector<8x16xf32>, vector<16x16xf32>, vector<8x16xf32> -> vector<8x16xf32>
    %c0_107 = arith.constant 0 : index
    %c0_108 = arith.constant 0 : index
    %189 = vector.load %arg10[%c0_107, %c0_108] : memref<1x16xf32, #tpu.memory_space<vmem>>, vector<1x16xf32>
    %190 = vector.broadcast %189 : vector<1x16xf32> to vector<8x16xf32>
    %191 = arith.mulf %188, %190 : vector<8x16xf32>
    %c0_109 = arith.constant 0 : index
    %c0_110 = arith.constant 0 : index
    %192 = vector.load %arg11[%c0_109, %c0_110] : memref<1x16xf32, #tpu.memory_space<vmem>>, vector<1x16xf32>
    %193 = vector.broadcast %192 : vector<1x16xf32> to vector<8x16xf32>
    %194 = arith.addf %191, %193 : vector<8x16xf32>
    %c0_111 = arith.constant 0 : index
    %c3 = arith.constant 3 : index
    %c0_112 = arith.constant 0 : index
    %c0_113 = arith.constant 0 : index
    %195 = vector.load %arg12[%c0_111, %c3, %c0_112, %c0_113] : memref<1x8x8x16xbf16, #tpu.memory_space<vmem>>, vector<1x1x8x16xbf16>
    %196 = vector.shape_cast %195 : vector<1x1x8x16xbf16> to vector<8x16xbf16>
    %197 = arith.extf %196 : vector<8x16xbf16> to vector<8x16xf32>
    %198 = arith.addf %194, %197 : vector<8x16xf32>
    %199 = arith.truncf %198 : vector<8x16xf32> to vector<8x16xbf16>
    %c0_114 = arith.constant 0 : index
    %c3_115 = arith.constant 3 : index
    %c0_116 = arith.constant 0 : index
    %c0_117 = arith.constant 0 : index
    %200 = vector.load %arg13[%c0_114, %c3_115, %c0_116, %c0_117] : memref<1x8x8x16xbf16, #tpu.memory_space<vmem>>, vector<1x1x8x16xbf16>
    %201 = vector.shape_cast %200 : vector<1x1x8x16xbf16> to vector<8x16xbf16>
    %202 = vector.shape_cast %199 : vector<8x16xbf16> to vector<1x1x8x16xbf16>
    tpu.vector_store %arg13[%c0_114, %c3_115, %c0_116, %c0_117], %202 {strides = array<i32>} : memref<1x8x8x16xbf16, #tpu.memory_space<vmem>>, vector<1x1x8x16xbf16>,
    %203 = vector.extract_strided_slice %132 {offsets = [4, 0, 0], sizes = [1, 8, 16], strides = [1, 1, 1]} : vector<8x8x16xf32> to vector<1x8x16xf32>
    %204 = vector.shape_cast %203 : vector<1x8x16xf32> to vector<8x16xf32>
    %cst_118 = arith.constant dense<0.000000e+00> : vector<8x16xf32>
    %205 = tpu.matmul %204, %134, %cst_118 {dimension_numbers = #tpu.dot_dimension_numbers<[1], [0], [0], [1], [0, 0, 1, 1], [], []>} : vector<8x16xf32>, vector<16x16xf32>, vector<8x16xf32> -> vector<8x16xf32>
    %c0_119 = arith.constant 0 : index
    %c0_120 = arith.constant 0 : index
    %206 = vector.load %arg10[%c0_119, %c0_120] : memref<1x16xf32, #tpu.memory_space<vmem>>, vector<1x16xf32>
    %207 = vector.broadcast %206 : vector<1x16xf32> to vector<8x16xf32>
    %208 = arith.mulf %205, %207 : vector<8x16xf32>
    %c0_121 = arith.constant 0 : index
    %c0_122 = arith.constant 0 : index
    %209 = vector.load %arg11[%c0_121, %c0_122] : memref<1x16xf32, #tpu.memory_space<vmem>>, vector<1x16xf32>
    %210 = vector.broadcast %209 : vector<1x16xf32> to vector<8x16xf32>
    %211 = arith.addf %208, %210 : vector<8x16xf32>
    %c0_123 = arith.constant 0 : index
    %c4 = arith.constant 4 : index
    %c0_124 = arith.constant 0 : index
    %c0_125 = arith.constant 0 : index
    %212 = vector.load %arg12[%c0_123, %c4, %c0_124, %c0_125] : memref<1x8x8x16xbf16, #tpu.memory_space<vmem>>, vector<1x1x8x16xbf16>
    %213 = vector.shape_cast %212 : vector<1x1x8x16xbf16> to vector<8x16xbf16>
    %214 = arith.extf %213 : vector<8x16xbf16> to vector<8x16xf32>
    %215 = arith.addf %211, %214 : vector<8x16xf32>
    %216 = arith.truncf %215 : vector<8x16xf32> to vector<8x16xbf16>
    %c0_126 = arith.constant 0 : index
    %c4_127 = arith.constant 4 : index
    %c0_128 = arith.constant 0 : index
    %c0_129 = arith.constant 0 : index
    %217 = vector.load %arg13[%c0_126, %c4_127, %c0_128, %c0_129] : memref<1x8x8x16xbf16, #tpu.memory_space<vmem>>, vector<1x1x8x16xbf16>
    %218 = vector.shape_cast %217 : vector<1x1x8x16xbf16> to vector<8x16xbf16>
    %219 = vector.shape_cast %216 : vector<8x16xbf16> to vector<1x1x8x16xbf16>
    tpu.vector_store %arg13[%c0_126, %c4_127, %c0_128, %c0_129], %219 {strides = array<i32>} : memref<1x8x8x16xbf16, #tpu.memory_space<vmem>>, vector<1x1x8x16xbf16>,
    %220 = vector.extract_strided_slice %132 {offsets = [5, 0, 0], sizes = [1, 8, 16], strides = [1, 1, 1]} : vector<8x8x16xf32> to vector<1x8x16xf32>
    %221 = vector.shape_cast %220 : vector<1x8x16xf32> to vector<8x16xf32>
    %cst_130 = arith.constant dense<0.000000e+00> : vector<8x16xf32>
    %222 = tpu.matmul %221, %134, %cst_130 {dimension_numbers = #tpu.dot_dimension_numbers<[1], [0], [0], [1], [0, 0, 1, 1], [], []>} : vector<8x16xf32>, vector<16x16xf32>, vector<8x16xf32> -> vector<8x16xf32>
    %c0_131 = arith.constant 0 : index
    %c0_132 = arith.constant 0 : index
    %223 = vector.load %arg10[%c0_131, %c0_132] : memref<1x16xf32, #tpu.memory_space<vmem>>, vector<1x16xf32>
    %224 = vector.broadcast %223 : vector<1x16xf32> to vector<8x16xf32>
    %225 = arith.mulf %222, %224 : vector<8x16xf32>
    %c0_133 = arith.constant 0 : index
    %c0_134 = arith.constant 0 : index
    %226 = vector.load %arg11[%c0_133, %c0_134] : memref<1x16xf32, #tpu.memory_space<vmem>>, vector<1x16xf32>
    %227 = vector.broadcast %226 : vector<1x16xf32> to vector<8x16xf32>
    %228 = arith.addf %225, %227 : vector<8x16xf32>
    %c0_135 = arith.constant 0 : index
    %c5 = arith.constant 5 : index
    %c0_136 = arith.constant 0 : index
    %c0_137 = arith.constant 0 : index
    %229 = vector.load %arg12[%c0_135, %c5, %c0_136, %c0_137] : memref<1x8x8x16xbf16, #tpu.memory_space<vmem>>, vector<1x1x8x16xbf16>
    %230 = vector.shape_cast %229 : vector<1x1x8x16xbf16> to vector<8x16xbf16>
    %231 = arith.extf %230 : vector<8x16xbf16> to vector<8x16xf32>
    %232 = arith.addf %228, %231 : vector<8x16xf32>
    %233 = arith.truncf %232 : vector<8x16xf32> to vector<8x16xbf16>
    %c0_138 = arith.constant 0 : index
    %c5_139 = arith.constant 5 : index
    %c0_140 = arith.constant 0 : index
    %c0_141 = arith.constant 0 : index
    %234 = vector.load %arg13[%c0_138, %c5_139, %c0_140, %c0_141] : memref<1x8x8x16xbf16, #tpu.memory_space<vmem>>, vector<1x1x8x16xbf16>
    %235 = vector.shape_cast %234 : vector<1x1x8x16xbf16> to vector<8x16xbf16>
    %236 = vector.shape_cast %233 : vector<8x16xbf16> to vector<1x1x8x16xbf16>
    tpu.vector_store %arg13[%c0_138, %c5_139, %c0_140, %c0_141], %236 {strides = array<i32>} : memref<1x8x8x16xbf16, #tpu.memory_space<vmem>>, vector<1x1x8x16xbf16>,
    %237 = vector.extract_strided_slice %132 {offsets = [6, 0, 0], sizes = [1, 8, 16], strides = [1, 1, 1]} : vector<8x8x16xf32> to vector<1x8x16xf32>
    %238 = vector.shape_cast %237 : vector<1x8x16xf32> to vector<8x16xf32>
    %cst_142 = arith.constant dense<0.000000e+00> : vector<8x16xf32>
    %239 = tpu.matmul %238, %134, %cst_142 {dimension_numbers = #tpu.dot_dimension_numbers<[1], [0], [0], [1], [0, 0, 1, 1], [], []>} : vector<8x16xf32>, vector<16x16xf32>, vector<8x16xf32> -> vector<8x16xf32>
    %c0_143 = arith.constant 0 : index
    %c0_144 = arith.constant 0 : index
    %240 = vector.load %arg10[%c0_143, %c0_144] : memref<1x16xf32, #tpu.memory_space<vmem>>, vector<1x16xf32>
    %241 = vector.broadcast %240 : vector<1x16xf32> to vector<8x16xf32>
    %242 = arith.mulf %239, %241 : vector<8x16xf32>
    %c0_145 = arith.constant 0 : index
    %c0_146 = arith.constant 0 : index
    %243 = vector.load %arg11[%c0_145, %c0_146] : memref<1x16xf32, #tpu.memory_space<vmem>>, vector<1x16xf32>
    %244 = vector.broadcast %243 : vector<1x16xf32> to vector<8x16xf32>
    %245 = arith.addf %242, %244 : vector<8x16xf32>
    %c0_147 = arith.constant 0 : index
    %c6 = arith.constant 6 : index
    %c0_148 = arith.constant 0 : index
    %c0_149 = arith.constant 0 : index
    %246 = vector.load %arg12[%c0_147, %c6, %c0_148, %c0_149] : memref<1x8x8x16xbf16, #tpu.memory_space<vmem>>, vector<1x1x8x16xbf16>
    %247 = vector.shape_cast %246 : vector<1x1x8x16xbf16> to vector<8x16xbf16>
    %248 = arith.extf %247 : vector<8x16xbf16> to vector<8x16xf32>
    %249 = arith.addf %245, %248 : vector<8x16xf32>
    %250 = arith.truncf %249 : vector<8x16xf32> to vector<8x16xbf16>
    %c0_150 = arith.constant 0 : index
    %c6_151 = arith.constant 6 : index
    %c0_152 = arith.constant 0 : index
    %c0_153 = arith.constant 0 : index
    %251 = vector.load %arg13[%c0_150, %c6_151, %c0_152, %c0_153] : memref<1x8x8x16xbf16, #tpu.memory_space<vmem>>, vector<1x1x8x16xbf16>
    %252 = vector.shape_cast %251 : vector<1x1x8x16xbf16> to vector<8x16xbf16>
    %253 = vector.shape_cast %250 : vector<8x16xbf16> to vector<1x1x8x16xbf16>
    tpu.vector_store %arg13[%c0_150, %c6_151, %c0_152, %c0_153], %253 {strides = array<i32>} : memref<1x8x8x16xbf16, #tpu.memory_space<vmem>>, vector<1x1x8x16xbf16>,
    %254 = vector.extract_strided_slice %132 {offsets = [7, 0, 0], sizes = [1, 8, 16], strides = [1, 1, 1]} : vector<8x8x16xf32> to vector<1x8x16xf32>
    %255 = vector.shape_cast %254 : vector<1x8x16xf32> to vector<8x16xf32>
    %cst_154 = arith.constant dense<0.000000e+00> : vector<8x16xf32>
    %256 = tpu.matmul %255, %134, %cst_154 {dimension_numbers = #tpu.dot_dimension_numbers<[1], [0], [0], [1], [0, 0, 1, 1], [], []>} : vector<8x16xf32>, vector<16x16xf32>, vector<8x16xf32> -> vector<8x16xf32>
    %c0_155 = arith.constant 0 : index
    %c0_156 = arith.constant 0 : index
    %257 = vector.load %arg10[%c0_155, %c0_156] : memref<1x16xf32, #tpu.memory_space<vmem>>, vector<1x16xf32>
    %258 = vector.broadcast %257 : vector<1x16xf32> to vector<8x16xf32>
    %259 = arith.mulf %256, %258 : vector<8x16xf32>
    %c0_157 = arith.constant 0 : index
    %c0_158 = arith.constant 0 : index
    %260 = vector.load %arg11[%c0_157, %c0_158] : memref<1x16xf32, #tpu.memory_space<vmem>>, vector<1x16xf32>
    %261 = vector.broadcast %260 : vector<1x16xf32> to vector<8x16xf32>
    %262 = arith.addf %259, %261 : vector<8x16xf32>
    %c0_159 = arith.constant 0 : index
    %c7 = arith.constant 7 : index
    %c0_160 = arith.constant 0 : index
    %c0_161 = arith.constant 0 : index
    %263 = vector.load %arg12[%c0_159, %c7, %c0_160, %c0_161] : memref<1x8x8x16xbf16, #tpu.memory_space<vmem>>, vector<1x1x8x16xbf16>
    %264 = vector.shape_cast %263 : vector<1x1x8x16xbf16> to vector<8x16xbf16>
    %265 = arith.extf %264 : vector<8x16xbf16> to vector<8x16xf32>
    %266 = arith.addf %262, %265 : vector<8x16xf32>
    %267 = arith.truncf %266 : vector<8x16xf32> to vector<8x16xbf16>
    %c0_162 = arith.constant 0 : index
    %c7_163 = arith.constant 7 : index
    %c0_164 = arith.constant 0 : index
    %c0_165 = arith.constant 0 : index
    %268 = vector.load %arg13[%c0_162, %c7_163, %c0_164, %c0_165] : memref<1x8x8x16xbf16, #tpu.memory_space<vmem>>, vector<1x1x8x16xbf16>
    %269 = vector.shape_cast %268 : vector<1x1x8x16xbf16> to vector<8x16xbf16>
    %270 = vector.shape_cast %267 : vector<8x16xbf16> to vector<1x1x8x16xbf16>
    tpu.vector_store %arg13[%c0_162, %c7_163, %c0_164, %c0_165], %270 {strides = array<i32>} : memref<1x8x8x16xbf16, #tpu.memory_space<vmem>>, vector<1x1x8x16xbf16>,
    return
  }
  func.func @transform_0(%arg0: i32) -> (i32, i32, i32, i32, i32) {
    %c0_i32 = arith.constant 0 : i32
    %c0_i32_0 = arith.constant 0 : i32
    %c0_i32_1 = arith.constant 0 : i32
    %c0_i32_2 = arith.constant 0 : i32
    %c0_i32_3 = arith.constant 0 : i32
    return %arg0, %c0_i32, %c0_i32_0, %c0_i32_1, %c0_i32_2 : i32, i32, i32, i32, i32
  }
  func.func @transform_1(%arg0: i32) -> (i32, i32) {
    %c0_i32 = arith.constant 0 : i32
    %c0_i32_0 = arith.constant 0 : i32
    %c0_i32_1 = arith.constant 0 : i32
    return %c0_i32, %c0_i32_0 : i32, i32
  }
  func.func @transform_2(%arg0: i32) -> (i32, i32) {
    %c0_i32 = arith.constant 0 : i32
    %c0_i32_0 = arith.constant 0 : i32
    %c0_i32_1 = arith.constant 0 : i32
    return %c0_i32, %c0_i32_0 : i32, i32
  }
  func.func @transform_3(%arg0: i32) -> (i32, i32) {
    %c0_i32 = arith.constant 0 : i32
    %c0_i32_0 = arith.constant 0 : i32
    %c0_i32_1 = arith.constant 0 : i32
    return %c0_i32, %c0_i32_0 : i32, i32
  }
  func.func @transform_4(%arg0: i32) -> (i32, i32) {
    %c0_i32 = arith.constant 0 : i32
    %c0_i32_0 = arith.constant 0 : i32
    %c0_i32_1 = arith.constant 0 : i32
    return %c0_i32, %c0_i32_0 : i32, i32
  }
  func.func @transform_5(%arg0: i32) -> (i32, i32) {
    %c0_i32 = arith.constant 0 : i32
    %c0_i32_0 = arith.constant 0 : i32
    %c0_i32_1 = arith.constant 0 : i32
    return %c0_i32, %c0_i32_0 : i32, i32
  }
  func.func @transform_6(%arg0: i32) -> (i32, i32) {
    %c0_i32 = arith.constant 0 : i32
    %c0_i32_0 = arith.constant 0 : i32
    %c0_i32_1 = arith.constant 0 : i32
    return %c0_i32, %c0_i32_0 : i32, i32
  }
  func.func @transform_7(%arg0: i32) -> (i32, i32) {
    %c0_i32 = arith.constant 0 : i32
    %c0_i32_0 = arith.constant 0 : i32
    %c0_i32_1 = arith.constant 0 : i32
    return %c0_i32, %c0_i32_0 : i32, i32
  }
  func.func @transform_8(%arg0: i32) -> (i32, i32) {
    %c0_i32 = arith.constant 0 : i32
    %c0_i32_0 = arith.constant 0 : i32
    %c0_i32_1 = arith.constant 0 : i32
    return %c0_i32, %c0_i32_0 : i32, i32
  }
  func.func @transform_9(%arg0: i32) -> (i32, i32) {
    %c0_i32 = arith.constant 0 : i32
    %c0_i32_0 = arith.constant 0 : i32
    %c0_i32_1 = arith.constant 0 : i32
    return %c0_i32, %c0_i32_0 : i32, i32
  }
  func.func @transform_10(%arg0: i32) -> (i32, i32) {
    %c0_i32 = arith.constant 0 : i32
    %c0_i32_0 = arith.constant 0 : i32
    %c0_i32_1 = arith.constant 0 : i32
    return %c0_i32, %c0_i32_0 : i32, i32
  }
  func.func @transform_11(%arg0: i32) -> (i32, i32, i32, i32) {
    %c0_i32 = arith.constant 0 : i32
    %c0_i32_0 = arith.constant 0 : i32
    %c0_i32_1 = arith.constant 0 : i32
    %c0_i32_2 = arith.constant 0 : i32
    return %arg0, %c0_i32, %c0_i32_0, %c0_i32_1 : i32, i32, i32, i32
  }
  func.func @transform_12(%arg0: i32) -> (i32, i32, i32, i32) {
    %c0_i32 = arith.constant 0 : i32
    %c0_i32_0 = arith.constant 0 : i32
    %c0_i32_1 = arith.constant 0 : i32
    %c0_i32_2 = arith.constant 0 : i32
    return %arg0, %c0_i32, %c0_i32_0, %c0_i32_1 : i32, i32, i32, i32
  }
}

module attributes {stable_mosaic.version = 11 : i64} {
  func.func @_pw_kernel(%arg0: i32, %arg1: memref<64x16xbf16, #tpu.memory_space<vmem>>, %arg2: memref<16x64xbf16, #tpu.memory_space<vmem>>, %arg3: memref<1x64xf32, #tpu.memory_space<vmem>>, %arg4: memref<1x64xf32, #tpu.memory_space<vmem>>, %arg5: memref<64x64xbf16, #tpu.memory_space<vmem>>) attributes {dimension_semantics = [#tpu.dimension_semantics<parallel>], iteration_bounds = array<i64: 2>, scalar_prefetch = 0 : i64, scratch_operands = 0 : i64, tpu.core_type = #tpu.core_type<tc>, window_params = [{transform_indices = @transform_0, window_bounds = array<i64: 64, 16>}, {pipeline_mode = #tpu.pipeline_mode<synchronous>, transform_indices = @transform_1, window_bounds = array<i64: 16, 64>}, {pipeline_mode = #tpu.pipeline_mode<synchronous>, transform_indices = @transform_2, window_bounds = array<i64: 1, 64>}, {pipeline_mode = #tpu.pipeline_mode<synchronous>, transform_indices = @transform_3, window_bounds = array<i64: 1, 64>}, {transform_indices = @transform_4, window_bounds = array<i64: 64, 64>}]} {
    %c0 = arith.constant 0 : index
    %c0_0 = arith.constant 0 : index
    %0 = vector.load %arg1[%c0, %c0_0] : memref<64x16xbf16, #tpu.memory_space<vmem>>, vector<64x16xbf16>
    %c0_1 = arith.constant 0 : index
    %c0_2 = arith.constant 0 : index
    %1 = vector.load %arg2[%c0_1, %c0_2] : memref<16x64xbf16, #tpu.memory_space<vmem>>, vector<16x64xbf16>
    %cst = arith.constant dense<0.000000e+00> : vector<64x64xf32>
    %2 = tpu.matmul %0, %1, %cst {dimension_numbers = #tpu.dot_dimension_numbers<[1], [0], [0], [1], [0, 0, 1, 1], [], []>} : vector<64x16xbf16>, vector<16x64xbf16>, vector<64x64xf32> -> vector<64x64xf32>
    %c0_3 = arith.constant 0 : index
    %c0_4 = arith.constant 0 : index
    %3 = vector.load %arg3[%c0_3, %c0_4] : memref<1x64xf32, #tpu.memory_space<vmem>>, vector<1x64xf32>
    %4 = vector.broadcast %3 : vector<1x64xf32> to vector<64x64xf32>
    %5 = arith.mulf %2, %4 : vector<64x64xf32>
    %c0_5 = arith.constant 0 : index
    %c0_6 = arith.constant 0 : index
    %6 = vector.load %arg4[%c0_5, %c0_6] : memref<1x64xf32, #tpu.memory_space<vmem>>, vector<1x64xf32>
    %7 = vector.broadcast %6 : vector<1x64xf32> to vector<64x64xf32>
    %8 = arith.addf %5, %7 : vector<64x64xf32>
    %cst_7 = arith.constant 3.000000e+00 : f32
    %9 = vector.broadcast %cst_7 : f32 to vector<64x64xf32>
    %10 = arith.addf %8, %9 : vector<64x64xf32>
    %cst_8 = arith.constant 0.000000e+00 : f32
    %cst_9 = arith.constant 6.000000e+00 : f32
    %11 = vector.broadcast %cst_8 : f32 to vector<64x64xf32>
    %12 = arith.maximumf %11, %10 : vector<64x64xf32>
    %13 = vector.broadcast %cst_9 : f32 to vector<64x64xf32>
    %14 = arith.minimumf %13, %12 : vector<64x64xf32>
    %15 = arith.mulf %8, %14 : vector<64x64xf32>
    %cst_10 = arith.constant 0.166666672 : f32
    %16 = vector.broadcast %cst_10 : f32 to vector<64x64xf32>
    %17 = arith.mulf %15, %16 : vector<64x64xf32>
    %18 = arith.truncf %17 : vector<64x64xf32> to vector<64x64xbf16>
    %c0_11 = arith.constant 0 : index
    %c0_12 = arith.constant 0 : index
    %19 = vector.load %arg5[%c0_11, %c0_12] : memref<64x64xbf16, #tpu.memory_space<vmem>>, vector<64x64xbf16>
    tpu.vector_store %arg5[%c0_11, %c0_12], %18 {strides = array<i32>} : memref<64x64xbf16, #tpu.memory_space<vmem>>, vector<64x64xbf16>,
    return
  }
  func.func @transform_0(%arg0: i32) -> (i32, i32) {
    %c0_i32 = arith.constant 0 : i32
    %c0_i32_0 = arith.constant 0 : i32
    return %arg0, %c0_i32 : i32, i32
  }
  func.func @transform_1(%arg0: i32) -> (i32, i32) {
    %c0_i32 = arith.constant 0 : i32
    %c0_i32_0 = arith.constant 0 : i32
    %c0_i32_1 = arith.constant 0 : i32
    return %c0_i32, %c0_i32_0 : i32, i32
  }
  func.func @transform_2(%arg0: i32) -> (i32, i32) {
    %c0_i32 = arith.constant 0 : i32
    %c0_i32_0 = arith.constant 0 : i32
    %c0_i32_1 = arith.constant 0 : i32
    return %c0_i32, %c0_i32_0 : i32, i32
  }
  func.func @transform_3(%arg0: i32) -> (i32, i32) {
    %c0_i32 = arith.constant 0 : i32
    %c0_i32_0 = arith.constant 0 : i32
    %c0_i32_1 = arith.constant 0 : i32
    return %c0_i32, %c0_i32_0 : i32, i32
  }
  func.func @transform_4(%arg0: i32) -> (i32, i32) {
    %c0_i32 = arith.constant 0 : i32
    %c0_i32_0 = arith.constant 0 : i32
    return %arg0, %c0_i32 : i32, i32
  }
}

module attributes {stable_mosaic.version = 11 : i64} {
  func.func @_block_kernel(%arg0: i32, %arg1: memref<1x4x5x5x64xbf16, #tpu.memory_space<vmem>>, %arg2: memref<9x64xbf16, #tpu.memory_space<vmem>>, %arg3: memref<1x64xf32, #tpu.memory_space<vmem>>, %arg4: memref<1x64xf32, #tpu.memory_space<vmem>>, %arg5: memref<64x24xbf16, #tpu.memory_space<vmem>>, %arg6: memref<1x24xf32, #tpu.memory_space<vmem>>, %arg7: memref<1x24xf32, #tpu.memory_space<vmem>>, %arg8: memref<1x4x4x24xbf16, #tpu.memory_space<vmem>>) attributes {dimension_semantics = [#tpu.dimension_semantics<parallel>], iteration_bounds = array<i64: 2>, scalar_prefetch = 0 : i64, scratch_operands = 0 : i64, tpu.core_type = #tpu.core_type<tc>, window_params = [{transform_indices = @transform_0, window_bounds = array<i64: 1, 4, 5, 5, 64>}, {pipeline_mode = #tpu.pipeline_mode<synchronous>, transform_indices = @transform_1, window_bounds = array<i64: 9, 64>}, {pipeline_mode = #tpu.pipeline_mode<synchronous>, transform_indices = @transform_2, window_bounds = array<i64: 1, 64>}, {pipeline_mode = #tpu.pipeline_mode<synchronous>, transform_indices = @transform_3, window_bounds = array<i64: 1, 64>}, {pipeline_mode = #tpu.pipeline_mode<synchronous>, transform_indices = @transform_4, window_bounds = array<i64: 64, 24>}, {pipeline_mode = #tpu.pipeline_mode<synchronous>, transform_indices = @transform_5, window_bounds = array<i64: 1, 24>}, {pipeline_mode = #tpu.pipeline_mode<synchronous>, transform_indices = @transform_6, window_bounds = array<i64: 1, 24>}, {transform_indices = @transform_7, window_bounds = array<i64: 1, 4, 4, 24>}]} {
    %c0 = arith.constant 0 : index
    %c0_0 = arith.constant 0 : index
    %0 = vector.load %arg2[%c0, %c0_0] : memref<9x64xbf16, #tpu.memory_space<vmem>>, vector<9x64xbf16>
    %1 = arith.extf %0 : vector<9x64xbf16> to vector<9x64xf32>
    %c0_1 = arith.constant 0 : index
    %c0_2 = arith.constant 0 : index
    %c0_3 = arith.constant 0 : index
    %c0_4 = arith.constant 0 : index
    %c0_5 = arith.constant 0 : index
    %2 = vector.load %arg1[%c0_1, %c0_2, %c0_3, %c0_4, %c0_5] : memref<1x4x5x5x64xbf16, #tpu.memory_space<vmem>>, vector<1x1x4x4x64xbf16>
    %3 = vector.shape_cast %2 : vector<1x1x4x4x64xbf16> to vector<4x4x64xbf16>
    %4 = arith.extf %3 : vector<4x4x64xbf16> to vector<4x4x64xf32>
    %5 = vector.extract_strided_slice %1 {offsets = [0, 0], sizes = [1, 64], strides = [1, 1]} : vector<9x64xf32> to vector<1x64xf32>
    %6 = vector.shape_cast %5 : vector<1x64xf32> to vector<1x1x64xf32>
    %7 = vector.broadcast %6 : vector<1x1x64xf32> to vector<4x4x64xf32>
    %8 = arith.mulf %4, %7 : vector<4x4x64xf32>
    %c0_6 = arith.constant 0 : index
    %c1 = arith.constant 1 : index
    %c0_7 = arith.constant 0 : index
    %c0_8 = arith.constant 0 : index
    %c0_9 = arith.constant 0 : index
    %9 = vector.load %arg1[%c0_6, %c1, %c0_7, %c0_8, %c0_9] : memref<1x4x5x5x64xbf16, #tpu.memory_space<vmem>>, vector<1x1x4x4x64xbf16>
    %10 = vector.shape_cast %9 : vector<1x1x4x4x64xbf16> to vector<4x4x64xbf16>
    %11 = arith.extf %10 : vector<4x4x64xbf16> to vector<4x4x64xf32>
    %12 = vector.extract_strided_slice %1 {offsets = [1, 0], sizes = [1, 64], strides = [1, 1]} : vector<9x64xf32> to vector<1x64xf32>
    %13 = vector.shape_cast %12 : vector<1x64xf32> to vector<1x1x64xf32>
    %14 = vector.broadcast %13 : vector<1x1x64xf32> to vector<4x4x64xf32>
    %15 = arith.mulf %11, %14 : vector<4x4x64xf32>
    %16 = arith.addf %8, %15 : vector<4x4x64xf32>
    %c0_10 = arith.constant 0 : index
    %c0_11 = arith.constant 0 : index
    %c0_12 = arith.constant 0 : index
    %c1_13 = arith.constant 1 : index
    %c0_14 = arith.constant 0 : index
    %17 = vector.load %arg1[%c0_10, %c0_11, %c0_12, %c1_13, %c0_14] : memref<1x4x5x5x64xbf16, #tpu.memory_space<vmem>>, vector<1x1x4x4x64xbf16>
    %18 = vector.shape_cast %17 : vector<1x1x4x4x64xbf16> to vector<4x4x64xbf16>
    %19 = arith.extf %18 : vector<4x4x64xbf16> to vector<4x4x64xf32>
    %20 = vector.extract_strided_slice %1 {offsets = [2, 0], sizes = [1, 64], strides = [1, 1]} : vector<9x64xf32> to vector<1x64xf32>
    %21 = vector.shape_cast %20 : vector<1x64xf32> to vector<1x1x64xf32>
    %22 = vector.broadcast %21 : vector<1x1x64xf32> to vector<4x4x64xf32>
    %23 = arith.mulf %19, %22 : vector<4x4x64xf32>
    %24 = arith.addf %16, %23 : vector<4x4x64xf32>
    %c0_15 = arith.constant 0 : index
    %c2 = arith.constant 2 : index
    %c0_16 = arith.constant 0 : index
    %c0_17 = arith.constant 0 : index
    %c0_18 = arith.constant 0 : index
    %25 = vector.load %arg1[%c0_15, %c2, %c0_16, %c0_17, %c0_18] : memref<1x4x5x5x64xbf16, #tpu.memory_space<vmem>>, vector<1x1x4x4x64xbf16>
    %26 = vector.shape_cast %25 : vector<1x1x4x4x64xbf16> to vector<4x4x64xbf16>
    %27 = arith.extf %26 : vector<4x4x64xbf16> to vector<4x4x64xf32>
    %28 = vector.extract_strided_slice %1 {offsets = [3, 0], sizes = [1, 64], strides = [1, 1]} : vector<9x64xf32> to vector<1x64xf32>
    %29 = vector.shape_cast %28 : vector<1x64xf32> to vector<1x1x64xf32>
    %30 = vector.broadcast %29 : vector<1x1x64xf32> to vector<4x4x64xf32>
    %31 = arith.mulf %27, %30 : vector<4x4x64xf32>
    %32 = arith.addf %24, %31 : vector<4x4x64xf32>
    %c0_19 = arith.constant 0 : index
    %c3 = arith.constant 3 : index
    %c0_20 = arith.constant 0 : index
    %c0_21 = arith.constant 0 : index
    %c0_22 = arith.constant 0 : index
    %33 = vector.load %arg1[%c0_19, %c3, %c0_20, %c0_21, %c0_22] : memref<1x4x5x5x64xbf16, #tpu.memory_space<vmem>>, vector<1x1x4x4x64xbf16>
    %34 = vector.shape_cast %33 : vector<1x1x4x4x64xbf16> to vector<4x4x64xbf16>
    %35 = arith.extf %34 : vector<4x4x64xbf16> to vector<4x4x64xf32>
    %36 = vector.extract_strided_slice %1 {offsets = [4, 0], sizes = [1, 64], strides = [1, 1]} : vector<9x64xf32> to vector<1x64xf32>
    %37 = vector.shape_cast %36 : vector<1x64xf32> to vector<1x1x64xf32>
    %38 = vector.broadcast %37 : vector<1x1x64xf32> to vector<4x4x64xf32>
    %39 = arith.mulf %35, %38 : vector<4x4x64xf32>
    %40 = arith.addf %32, %39 : vector<4x4x64xf32>
    %c0_23 = arith.constant 0 : index
    %c2_24 = arith.constant 2 : index
    %c0_25 = arith.constant 0 : index
    %c1_26 = arith.constant 1 : index
    %c0_27 = arith.constant 0 : index
    %41 = vector.load %arg1[%c0_23, %c2_24, %c0_25, %c1_26, %c0_27] : memref<1x4x5x5x64xbf16, #tpu.memory_space<vmem>>, vector<1x1x4x4x64xbf16>
    %42 = vector.shape_cast %41 : vector<1x1x4x4x64xbf16> to vector<4x4x64xbf16>
    %43 = arith.extf %42 : vector<4x4x64xbf16> to vector<4x4x64xf32>
    %44 = vector.extract_strided_slice %1 {offsets = [5, 0], sizes = [1, 64], strides = [1, 1]} : vector<9x64xf32> to vector<1x64xf32>
    %45 = vector.shape_cast %44 : vector<1x64xf32> to vector<1x1x64xf32>
    %46 = vector.broadcast %45 : vector<1x1x64xf32> to vector<4x4x64xf32>
    %47 = arith.mulf %43, %46 : vector<4x4x64xf32>
    %48 = arith.addf %40, %47 : vector<4x4x64xf32>
    %c0_28 = arith.constant 0 : index
    %c0_29 = arith.constant 0 : index
    %c1_30 = arith.constant 1 : index
    %c0_31 = arith.constant 0 : index
    %c0_32 = arith.constant 0 : index
    %49 = vector.load %arg1[%c0_28, %c0_29, %c1_30, %c0_31, %c0_32] : memref<1x4x5x5x64xbf16, #tpu.memory_space<vmem>>, vector<1x1x4x4x64xbf16>
    %50 = vector.shape_cast %49 : vector<1x1x4x4x64xbf16> to vector<4x4x64xbf16>
    %51 = arith.extf %50 : vector<4x4x64xbf16> to vector<4x4x64xf32>
    %52 = vector.extract_strided_slice %1 {offsets = [6, 0], sizes = [1, 64], strides = [1, 1]} : vector<9x64xf32> to vector<1x64xf32>
    %53 = vector.shape_cast %52 : vector<1x64xf32> to vector<1x1x64xf32>
    %54 = vector.broadcast %53 : vector<1x1x64xf32> to vector<4x4x64xf32>
    %55 = arith.mulf %51, %54 : vector<4x4x64xf32>
    %56 = arith.addf %48, %55 : vector<4x4x64xf32>
    %c0_33 = arith.constant 0 : index
    %c1_34 = arith.constant 1 : index
    %c1_35 = arith.constant 1 : index
    %c0_36 = arith.constant 0 : index
    %c0_37 = arith.constant 0 : index
    %57 = vector.load %arg1[%c0_33, %c1_34, %c1_35, %c0_36, %c0_37] : memref<1x4x5x5x64xbf16, #tpu.memory_space<vmem>>, vector<1x1x4x4x64xbf16>
    %58 = vector.shape_cast %57 : vector<1x1x4x4x64xbf16> to vector<4x4x64xbf16>
    %59 = arith.extf %58 : vector<4x4x64xbf16> to vector<4x4x64xf32>
    %60 = vector.extract_strided_slice %1 {offsets = [7, 0], sizes = [1, 64], strides = [1, 1]} : vector<9x64xf32> to vector<1x64xf32>
    %61 = vector.shape_cast %60 : vector<1x64xf32> to vector<1x1x64xf32>
    %62 = vector.broadcast %61 : vector<1x1x64xf32> to vector<4x4x64xf32>
    %63 = arith.mulf %59, %62 : vector<4x4x64xf32>
    %64 = arith.addf %56, %63 : vector<4x4x64xf32>
    %c0_38 = arith.constant 0 : index
    %c0_39 = arith.constant 0 : index
    %c1_40 = arith.constant 1 : index
    %c1_41 = arith.constant 1 : index
    %c0_42 = arith.constant 0 : index
    %65 = vector.load %arg1[%c0_38, %c0_39, %c1_40, %c1_41, %c0_42] : memref<1x4x5x5x64xbf16, #tpu.memory_space<vmem>>, vector<1x1x4x4x64xbf16>
    %66 = vector.shape_cast %65 : vector<1x1x4x4x64xbf16> to vector<4x4x64xbf16>
    %67 = arith.extf %66 : vector<4x4x64xbf16> to vector<4x4x64xf32>
    %68 = vector.extract_strided_slice %1 {offsets = [8, 0], sizes = [1, 64], strides = [1, 1]} : vector<9x64xf32> to vector<1x64xf32>
    %69 = vector.shape_cast %68 : vector<1x64xf32> to vector<1x1x64xf32>
    %70 = vector.broadcast %69 : vector<1x1x64xf32> to vector<4x4x64xf32>
    %71 = arith.mulf %67, %70 : vector<4x4x64xf32>
    %72 = arith.addf %64, %71 : vector<4x4x64xf32>
    %c0_43 = arith.constant 0 : index
    %c0_44 = arith.constant 0 : index
    %73 = vector.load %arg3[%c0_43, %c0_44] : memref<1x64xf32, #tpu.memory_space<vmem>>, vector<1x64xf32>
    %74 = vector.shape_cast %73 : vector<1x64xf32> to vector<1x1x64xf32>
    %75 = vector.broadcast %74 : vector<1x1x64xf32> to vector<4x4x64xf32>
    %76 = arith.mulf %72, %75 : vector<4x4x64xf32>
    %c0_45 = arith.constant 0 : index
    %c0_46 = arith.constant 0 : index
    %77 = vector.load %arg4[%c0_45, %c0_46] : memref<1x64xf32, #tpu.memory_space<vmem>>, vector<1x64xf32>
    %78 = vector.shape_cast %77 : vector<1x64xf32> to vector<1x1x64xf32>
    %79 = vector.broadcast %78 : vector<1x1x64xf32> to vector<4x4x64xf32>
    %80 = arith.addf %76, %79 : vector<4x4x64xf32>
    %cst = arith.constant 3.000000e+00 : f32
    %81 = vector.broadcast %cst : f32 to vector<4x4x64xf32>
    %82 = arith.addf %80, %81 : vector<4x4x64xf32>
    %cst_47 = arith.constant 0.000000e+00 : f32
    %cst_48 = arith.constant 6.000000e+00 : f32
    %83 = vector.broadcast %cst_47 : f32 to vector<4x4x64xf32>
    %84 = arith.maximumf %83, %82 : vector<4x4x64xf32>
    %85 = vector.broadcast %cst_48 : f32 to vector<4x4x64xf32>
    %86 = arith.minimumf %85, %84 : vector<4x4x64xf32>
    %87 = arith.mulf %80, %86 : vector<4x4x64xf32>
    %cst_49 = arith.constant 0.166666672 : f32
    %88 = vector.broadcast %cst_49 : f32 to vector<4x4x64xf32>
    %89 = arith.mulf %87, %88 : vector<4x4x64xf32>
    %c0_50 = arith.constant 0 : index
    %c0_51 = arith.constant 0 : index
    %90 = vector.load %arg5[%c0_50, %c0_51] : memref<64x24xbf16, #tpu.memory_space<vmem>>, vector<64x24xbf16>
    %91 = arith.extf %90 : vector<64x24xbf16> to vector<64x24xf32>
    %92 = vector.extract_strided_slice %89 {offsets = [0, 0, 0], sizes = [1, 4, 64], strides = [1, 1, 1]} : vector<4x4x64xf32> to vector<1x4x64xf32>
    %93 = vector.shape_cast %92 : vector<1x4x64xf32> to vector<4x64xf32>
    %cst_52 = arith.constant dense<0.000000e+00> : vector<4x24xf32>
    %94 = tpu.matmul %93, %91, %cst_52 {dimension_numbers = #tpu.dot_dimension_numbers<[1], [0], [0], [1], [0, 0, 1, 1], [], []>} : vector<4x64xf32>, vector<64x24xf32>, vector<4x24xf32> -> vector<4x24xf32>
    %c0_53 = arith.constant 0 : index
    %c0_54 = arith.constant 0 : index
    %95 = vector.load %arg6[%c0_53, %c0_54] : memref<1x24xf32, #tpu.memory_space<vmem>>, vector<1x24xf32>
    %96 = vector.broadcast %95 : vector<1x24xf32> to vector<4x24xf32>
    %97 = arith.mulf %94, %96 : vector<4x24xf32>
    %c0_55 = arith.constant 0 : index
    %c0_56 = arith.constant 0 : index
    %98 = vector.load %arg7[%c0_55, %c0_56] : memref<1x24xf32, #tpu.memory_space<vmem>>, vector<1x24xf32>
    %99 = vector.broadcast %98 : vector<1x24xf32> to vector<4x24xf32>
    %100 = arith.addf %97, %99 : vector<4x24xf32>
    %101 = arith.truncf %100 : vector<4x24xf32> to vector<4x24xbf16>
    %c0_57 = arith.constant 0 : index
    %c0_58 = arith.constant 0 : index
    %c0_59 = arith.constant 0 : index
    %c0_60 = arith.constant 0 : index
    %102 = vector.load %arg8[%c0_57, %c0_58, %c0_59, %c0_60] : memref<1x4x4x24xbf16, #tpu.memory_space<vmem>>, vector<1x1x4x24xbf16>
    %103 = vector.shape_cast %102 : vector<1x1x4x24xbf16> to vector<4x24xbf16>
    %104 = vector.shape_cast %101 : vector<4x24xbf16> to vector<1x1x4x24xbf16>
    tpu.vector_store %arg8[%c0_57, %c0_58, %c0_59, %c0_60], %104 {strides = array<i32>} : memref<1x4x4x24xbf16, #tpu.memory_space<vmem>>, vector<1x1x4x24xbf16>,
    %105 = vector.extract_strided_slice %89 {offsets = [1, 0, 0], sizes = [1, 4, 64], strides = [1, 1, 1]} : vector<4x4x64xf32> to vector<1x4x64xf32>
    %106 = vector.shape_cast %105 : vector<1x4x64xf32> to vector<4x64xf32>
    %cst_61 = arith.constant dense<0.000000e+00> : vector<4x24xf32>
    %107 = tpu.matmul %106, %91, %cst_61 {dimension_numbers = #tpu.dot_dimension_numbers<[1], [0], [0], [1], [0, 0, 1, 1], [], []>} : vector<4x64xf32>, vector<64x24xf32>, vector<4x24xf32> -> vector<4x24xf32>
    %c0_62 = arith.constant 0 : index
    %c0_63 = arith.constant 0 : index
    %108 = vector.load %arg6[%c0_62, %c0_63] : memref<1x24xf32, #tpu.memory_space<vmem>>, vector<1x24xf32>
    %109 = vector.broadcast %108 : vector<1x24xf32> to vector<4x24xf32>
    %110 = arith.mulf %107, %109 : vector<4x24xf32>
    %c0_64 = arith.constant 0 : index
    %c0_65 = arith.constant 0 : index
    %111 = vector.load %arg7[%c0_64, %c0_65] : memref<1x24xf32, #tpu.memory_space<vmem>>, vector<1x24xf32>
    %112 = vector.broadcast %111 : vector<1x24xf32> to vector<4x24xf32>
    %113 = arith.addf %110, %112 : vector<4x24xf32>
    %114 = arith.truncf %113 : vector<4x24xf32> to vector<4x24xbf16>
    %c0_66 = arith.constant 0 : index
    %c1_67 = arith.constant 1 : index
    %c0_68 = arith.constant 0 : index
    %c0_69 = arith.constant 0 : index
    %115 = vector.load %arg8[%c0_66, %c1_67, %c0_68, %c0_69] : memref<1x4x4x24xbf16, #tpu.memory_space<vmem>>, vector<1x1x4x24xbf16>
    %116 = vector.shape_cast %115 : vector<1x1x4x24xbf16> to vector<4x24xbf16>
    %117 = vector.shape_cast %114 : vector<4x24xbf16> to vector<1x1x4x24xbf16>
    tpu.vector_store %arg8[%c0_66, %c1_67, %c0_68, %c0_69], %117 {strides = array<i32>} : memref<1x4x4x24xbf16, #tpu.memory_space<vmem>>, vector<1x1x4x24xbf16>,
    %118 = vector.extract_strided_slice %89 {offsets = [2, 0, 0], sizes = [1, 4, 64], strides = [1, 1, 1]} : vector<4x4x64xf32> to vector<1x4x64xf32>
    %119 = vector.shape_cast %118 : vector<1x4x64xf32> to vector<4x64xf32>
    %cst_70 = arith.constant dense<0.000000e+00> : vector<4x24xf32>
    %120 = tpu.matmul %119, %91, %cst_70 {dimension_numbers = #tpu.dot_dimension_numbers<[1], [0], [0], [1], [0, 0, 1, 1], [], []>} : vector<4x64xf32>, vector<64x24xf32>, vector<4x24xf32> -> vector<4x24xf32>
    %c0_71 = arith.constant 0 : index
    %c0_72 = arith.constant 0 : index
    %121 = vector.load %arg6[%c0_71, %c0_72] : memref<1x24xf32, #tpu.memory_space<vmem>>, vector<1x24xf32>
    %122 = vector.broadcast %121 : vector<1x24xf32> to vector<4x24xf32>
    %123 = arith.mulf %120, %122 : vector<4x24xf32>
    %c0_73 = arith.constant 0 : index
    %c0_74 = arith.constant 0 : index
    %124 = vector.load %arg7[%c0_73, %c0_74] : memref<1x24xf32, #tpu.memory_space<vmem>>, vector<1x24xf32>
    %125 = vector.broadcast %124 : vector<1x24xf32> to vector<4x24xf32>
    %126 = arith.addf %123, %125 : vector<4x24xf32>
    %127 = arith.truncf %126 : vector<4x24xf32> to vector<4x24xbf16>
    %c0_75 = arith.constant 0 : index
    %c2_76 = arith.constant 2 : index
    %c0_77 = arith.constant 0 : index
    %c0_78 = arith.constant 0 : index
    %128 = vector.load %arg8[%c0_75, %c2_76, %c0_77, %c0_78] : memref<1x4x4x24xbf16, #tpu.memory_space<vmem>>, vector<1x1x4x24xbf16>
    %129 = vector.shape_cast %128 : vector<1x1x4x24xbf16> to vector<4x24xbf16>
    %130 = vector.shape_cast %127 : vector<4x24xbf16> to vector<1x1x4x24xbf16>
    tpu.vector_store %arg8[%c0_75, %c2_76, %c0_77, %c0_78], %130 {strides = array<i32>} : memref<1x4x4x24xbf16, #tpu.memory_space<vmem>>, vector<1x1x4x24xbf16>,
    %131 = vector.extract_strided_slice %89 {offsets = [3, 0, 0], sizes = [1, 4, 64], strides = [1, 1, 1]} : vector<4x4x64xf32> to vector<1x4x64xf32>
    %132 = vector.shape_cast %131 : vector<1x4x64xf32> to vector<4x64xf32>
    %cst_79 = arith.constant dense<0.000000e+00> : vector<4x24xf32>
    %133 = tpu.matmul %132, %91, %cst_79 {dimension_numbers = #tpu.dot_dimension_numbers<[1], [0], [0], [1], [0, 0, 1, 1], [], []>} : vector<4x64xf32>, vector<64x24xf32>, vector<4x24xf32> -> vector<4x24xf32>
    %c0_80 = arith.constant 0 : index
    %c0_81 = arith.constant 0 : index
    %134 = vector.load %arg6[%c0_80, %c0_81] : memref<1x24xf32, #tpu.memory_space<vmem>>, vector<1x24xf32>
    %135 = vector.broadcast %134 : vector<1x24xf32> to vector<4x24xf32>
    %136 = arith.mulf %133, %135 : vector<4x24xf32>
    %c0_82 = arith.constant 0 : index
    %c0_83 = arith.constant 0 : index
    %137 = vector.load %arg7[%c0_82, %c0_83] : memref<1x24xf32, #tpu.memory_space<vmem>>, vector<1x24xf32>
    %138 = vector.broadcast %137 : vector<1x24xf32> to vector<4x24xf32>
    %139 = arith.addf %136, %138 : vector<4x24xf32>
    %140 = arith.truncf %139 : vector<4x24xf32> to vector<4x24xbf16>
    %c0_84 = arith.constant 0 : index
    %c3_85 = arith.constant 3 : index
    %c0_86 = arith.constant 0 : index
    %c0_87 = arith.constant 0 : index
    %141 = vector.load %arg8[%c0_84, %c3_85, %c0_86, %c0_87] : memref<1x4x4x24xbf16, #tpu.memory_space<vmem>>, vector<1x1x4x24xbf16>
    %142 = vector.shape_cast %141 : vector<1x1x4x24xbf16> to vector<4x24xbf16>
    %143 = vector.shape_cast %140 : vector<4x24xbf16> to vector<1x1x4x24xbf16>
    tpu.vector_store %arg8[%c0_84, %c3_85, %c0_86, %c0_87], %143 {strides = array<i32>} : memref<1x4x4x24xbf16, #tpu.memory_space<vmem>>, vector<1x1x4x24xbf16>,
    return
  }
  func.func @transform_0(%arg0: i32) -> (i32, i32, i32, i32, i32) {
    %c0_i32 = arith.constant 0 : i32
    %c0_i32_0 = arith.constant 0 : i32
    %c0_i32_1 = arith.constant 0 : i32
    %c0_i32_2 = arith.constant 0 : i32
    %c0_i32_3 = arith.constant 0 : i32
    return %arg0, %c0_i32, %c0_i32_0, %c0_i32_1, %c0_i32_2 : i32, i32, i32, i32, i32
  }
  func.func @transform_1(%arg0: i32) -> (i32, i32) {
    %c0_i32 = arith.constant 0 : i32
    %c0_i32_0 = arith.constant 0 : i32
    %c0_i32_1 = arith.constant 0 : i32
    return %c0_i32, %c0_i32_0 : i32, i32
  }
  func.func @transform_2(%arg0: i32) -> (i32, i32) {
    %c0_i32 = arith.constant 0 : i32
    %c0_i32_0 = arith.constant 0 : i32
    %c0_i32_1 = arith.constant 0 : i32
    return %c0_i32, %c0_i32_0 : i32, i32
  }
  func.func @transform_3(%arg0: i32) -> (i32, i32) {
    %c0_i32 = arith.constant 0 : i32
    %c0_i32_0 = arith.constant 0 : i32
    %c0_i32_1 = arith.constant 0 : i32
    return %c0_i32, %c0_i32_0 : i32, i32
  }
  func.func @transform_4(%arg0: i32) -> (i32, i32) {
    %c0_i32 = arith.constant 0 : i32
    %c0_i32_0 = arith.constant 0 : i32
    %c0_i32_1 = arith.constant 0 : i32
    return %c0_i32, %c0_i32_0 : i32, i32
  }
  func.func @transform_5(%arg0: i32) -> (i32, i32) {
    %c0_i32 = arith.constant 0 : i32
    %c0_i32_0 = arith.constant 0 : i32
    %c0_i32_1 = arith.constant 0 : i32
    return %c0_i32, %c0_i32_0 : i32, i32
  }
  func.func @transform_6(%arg0: i32) -> (i32, i32) {
    %c0_i32 = arith.constant 0 : i32
    %c0_i32_0 = arith.constant 0 : i32
    %c0_i32_1 = arith.constant 0 : i32
    return %c0_i32, %c0_i32_0 : i32, i32
  }
  func.func @transform_7(%arg0: i32) -> (i32, i32, i32, i32) {
    %c0_i32 = arith.constant 0 : i32
    %c0_i32_0 = arith.constant 0 : i32
    %c0_i32_1 = arith.constant 0 : i32
    %c0_i32_2 = arith.constant 0 : i32
    return %arg0, %c0_i32, %c0_i32_0, %c0_i32_1 : i32, i32, i32, i32
  }
}

module attributes {stable_mosaic.version = 11 : i64} {
  func.func @_tail_kernel(%arg0: i32, %arg1: memref<1x16x24xbf16, #tpu.memory_space<vmem>>, %arg2: memref<24x144xbf16, #tpu.memory_space<vmem>>, %arg3: memref<1x144xf32, #tpu.memory_space<vmem>>, %arg4: memref<1x144xf32, #tpu.memory_space<vmem>>, %arg5: memref<144x64xbf16, #tpu.memory_space<vmem>>, %arg6: memref<1x64xf32, #tpu.memory_space<vmem>>, %arg7: memref<64x10xbf16, #tpu.memory_space<vmem>>, %arg8: memref<1x10xf32, #tpu.memory_space<vmem>>, %arg9: memref<1x1x10xf32, #tpu.memory_space<vmem>>) attributes {dimension_semantics = [#tpu.dimension_semantics<parallel>], iteration_bounds = array<i64: 2>, scalar_prefetch = 0 : i64, scratch_operands = 0 : i64, tpu.core_type = #tpu.core_type<tc>, window_params = [{transform_indices = @transform_0, window_bounds = array<i64: 1, 16, 24>}, {pipeline_mode = #tpu.pipeline_mode<synchronous>, transform_indices = @transform_1, window_bounds = array<i64: 24, 144>}, {pipeline_mode = #tpu.pipeline_mode<synchronous>, transform_indices = @transform_2, window_bounds = array<i64: 1, 144>}, {pipeline_mode = #tpu.pipeline_mode<synchronous>, transform_indices = @transform_3, window_bounds = array<i64: 1, 144>}, {pipeline_mode = #tpu.pipeline_mode<synchronous>, transform_indices = @transform_4, window_bounds = array<i64: 144, 64>}, {pipeline_mode = #tpu.pipeline_mode<synchronous>, transform_indices = @transform_5, window_bounds = array<i64: 1, 64>}, {pipeline_mode = #tpu.pipeline_mode<synchronous>, transform_indices = @transform_6, window_bounds = array<i64: 64, 10>}, {pipeline_mode = #tpu.pipeline_mode<synchronous>, transform_indices = @transform_7, window_bounds = array<i64: 1, 10>}, {transform_indices = @transform_8, window_bounds = array<i64: 1, 1, 10>}]} {
    %c0 = arith.constant 0 : index
    %c0_0 = arith.constant 0 : index
    %c0_1 = arith.constant 0 : index
    %0 = vector.load %arg1[%c0, %c0_0, %c0_1] : memref<1x16x24xbf16, #tpu.memory_space<vmem>>, vector<1x16x24xbf16>
    %1 = vector.shape_cast %0 : vector<1x16x24xbf16> to vector<16x24xbf16>
    %c0_2 = arith.constant 0 : index
    %c0_3 = arith.constant 0 : index
    %2 = vector.load %arg2[%c0_2, %c0_3] : memref<24x144xbf16, #tpu.memory_space<vmem>>, vector<24x144xbf16>
    %cst = arith.constant dense<0.000000e+00> : vector<16x144xf32>
    %3 = tpu.matmul %1, %2, %cst {dimension_numbers = #tpu.dot_dimension_numbers<[1], [0], [0], [1], [0, 0, 1, 1], [], []>} : vector<16x24xbf16>, vector<24x144xbf16>, vector<16x144xf32> -> vector<16x144xf32>
    %c0_4 = arith.constant 0 : index
    %c0_5 = arith.constant 0 : index
    %4 = vector.load %arg3[%c0_4, %c0_5] : memref<1x144xf32, #tpu.memory_space<vmem>>, vector<1x144xf32>
    %5 = vector.broadcast %4 : vector<1x144xf32> to vector<16x144xf32>
    %6 = arith.mulf %3, %5 : vector<16x144xf32>
    %c0_6 = arith.constant 0 : index
    %c0_7 = arith.constant 0 : index
    %7 = vector.load %arg4[%c0_6, %c0_7] : memref<1x144xf32, #tpu.memory_space<vmem>>, vector<1x144xf32>
    %8 = vector.broadcast %7 : vector<1x144xf32> to vector<16x144xf32>
    %9 = arith.addf %6, %8 : vector<16x144xf32>
    %cst_8 = arith.constant 3.000000e+00 : f32
    %10 = vector.broadcast %cst_8 : f32 to vector<16x144xf32>
    %11 = arith.addf %9, %10 : vector<16x144xf32>
    %cst_9 = arith.constant 0.000000e+00 : f32
    %cst_10 = arith.constant 6.000000e+00 : f32
    %12 = vector.broadcast %cst_9 : f32 to vector<16x144xf32>
    %13 = arith.maximumf %12, %11 : vector<16x144xf32>
    %14 = vector.broadcast %cst_10 : f32 to vector<16x144xf32>
    %15 = arith.minimumf %14, %13 : vector<16x144xf32>
    %16 = arith.mulf %9, %15 : vector<16x144xf32>
    %cst_11 = arith.constant 0.166666672 : f32
    %17 = vector.broadcast %cst_11 : f32 to vector<16x144xf32>
    %18 = arith.mulf %16, %17 : vector<16x144xf32>
    %cst_12 = arith.constant dense<0.000000e+00> : vector<144xf32>
    %19 = vector.multi_reduction <add>, %18, %cst_12 [0] : vector<16x144xf32> to vector<144xf32>
    %20 = vector.shape_cast %19 : vector<144xf32> to vector<1x144xf32>
    %cst_13 = arith.constant 6.250000e-02 : f32
    %21 = vector.broadcast %cst_13 : f32 to vector<1x144xf32>
    %22 = arith.mulf %20, %21 : vector<1x144xf32>
    %c0_14 = arith.constant 0 : index
    %c0_15 = arith.constant 0 : index
    %23 = vector.load %arg5[%c0_14, %c0_15] : memref<144x64xbf16, #tpu.memory_space<vmem>>, vector<144x64xbf16>
    %24 = arith.extf %23 : vector<144x64xbf16> to vector<144x64xf32>
    %cst_16 = arith.constant dense<0.000000e+00> : vector<1x64xf32>
    %25 = tpu.matmul %22, %24, %cst_16 {dimension_numbers = #tpu.dot_dimension_numbers<[1], [0], [0], [1], [0, 0, 1, 1], [], []>} : vector<1x144xf32>, vector<144x64xf32>, vector<1x64xf32> -> vector<1x64xf32>
    %c0_17 = arith.constant 0 : index
    %c0_18 = arith.constant 0 : index
    %26 = vector.load %arg6[%c0_17, %c0_18] : memref<1x64xf32, #tpu.memory_space<vmem>>, vector<1x64xf32>
    %27 = arith.addf %25, %26 : vector<1x64xf32>
    %cst_19 = arith.constant 3.000000e+00 : f32
    %28 = vector.broadcast %cst_19 : f32 to vector<1x64xf32>
    %29 = arith.addf %27, %28 : vector<1x64xf32>
    %cst_20 = arith.constant 0.000000e+00 : f32
    %cst_21 = arith.constant 6.000000e+00 : f32
    %30 = vector.broadcast %cst_20 : f32 to vector<1x64xf32>
    %31 = arith.maximumf %30, %29 : vector<1x64xf32>
    %32 = vector.broadcast %cst_21 : f32 to vector<1x64xf32>
    %33 = arith.minimumf %32, %31 : vector<1x64xf32>
    %34 = arith.mulf %27, %33 : vector<1x64xf32>
    %cst_22 = arith.constant 0.166666672 : f32
    %35 = vector.broadcast %cst_22 : f32 to vector<1x64xf32>
    %36 = arith.mulf %34, %35 : vector<1x64xf32>
    %c0_23 = arith.constant 0 : index
    %c0_24 = arith.constant 0 : index
    %37 = vector.load %arg7[%c0_23, %c0_24] : memref<64x10xbf16, #tpu.memory_space<vmem>>, vector<64x10xbf16>
    %38 = arith.extf %37 : vector<64x10xbf16> to vector<64x10xf32>
    %cst_25 = arith.constant dense<0.000000e+00> : vector<1x10xf32>
    %39 = tpu.matmul %36, %38, %cst_25 {dimension_numbers = #tpu.dot_dimension_numbers<[1], [0], [0], [1], [0, 0, 1, 1], [], []>} : vector<1x64xf32>, vector<64x10xf32>, vector<1x10xf32> -> vector<1x10xf32>
    %c0_26 = arith.constant 0 : index
    %c0_27 = arith.constant 0 : index
    %40 = vector.load %arg8[%c0_26, %c0_27] : memref<1x10xf32, #tpu.memory_space<vmem>>, vector<1x10xf32>
    %41 = arith.addf %39, %40 : vector<1x10xf32>
    %c0_28 = arith.constant 0 : index
    %c0_29 = arith.constant 0 : index
    %c0_30 = arith.constant 0 : index
    %42 = vector.load %arg9[%c0_28, %c0_29, %c0_30] : memref<1x1x10xf32, #tpu.memory_space<vmem>>, vector<1x1x10xf32>
    %43 = vector.shape_cast %42 : vector<1x1x10xf32> to vector<1x10xf32>
    %44 = vector.shape_cast %41 : vector<1x10xf32> to vector<1x1x10xf32>
    tpu.vector_store %arg9[%c0_28, %c0_29, %c0_30], %44 {strides = array<i32>} : memref<1x1x10xf32, #tpu.memory_space<vmem>>, vector<1x1x10xf32>,
    return
  }
  func.func @transform_0(%arg0: i32) -> (i32, i32, i32) {
    %c0_i32 = arith.constant 0 : i32
    %c0_i32_0 = arith.constant 0 : i32
    %c0_i32_1 = arith.constant 0 : i32
    return %arg0, %c0_i32, %c0_i32_0 : i32, i32, i32
  }
  func.func @transform_1(%arg0: i32) -> (i32, i32) {
    %c0_i32 = arith.constant 0 : i32
    %c0_i32_0 = arith.constant 0 : i32
    %c0_i32_1 = arith.constant 0 : i32
    return %c0_i32, %c0_i32_0 : i32, i32
  }
  func.func @transform_2(%arg0: i32) -> (i32, i32) {
    %c0_i32 = arith.constant 0 : i32
    %c0_i32_0 = arith.constant 0 : i32
    %c0_i32_1 = arith.constant 0 : i32
    return %c0_i32, %c0_i32_0 : i32, i32
  }
  func.func @transform_3(%arg0: i32) -> (i32, i32) {
    %c0_i32 = arith.constant 0 : i32
    %c0_i32_0 = arith.constant 0 : i32
    %c0_i32_1 = arith.constant 0 : i32
    return %c0_i32, %c0_i32_0 : i32, i32
  }
  func.func @transform_4(%arg0: i32) -> (i32, i32) {
    %c0_i32 = arith.constant 0 : i32
    %c0_i32_0 = arith.constant 0 : i32
    %c0_i32_1 = arith.constant 0 : i32
    return %c0_i32, %c0_i32_0 : i32, i32
  }
  func.func @transform_5(%arg0: i32) -> (i32, i32) {
    %c0_i32 = arith.constant 0 : i32
    %c0_i32_0 = arith.constant 0 : i32
    %c0_i32_1 = arith.constant 0 : i32
    return %c0_i32, %c0_i32_0 : i32, i32
  }
  func.func @transform_6(%arg0: i32) -> (i32, i32) {
    %c0_i32 = arith.constant 0 : i32
    %c0_i32_0 = arith.constant 0 : i32
    %c0_i32_1 = arith.constant 0 : i32
    return %c0_i32, %c0_i32_0 : i32, i32
  }
  func.func @transform_7(%arg0: i32) -> (i32, i32) {
    %c0_i32 = arith.constant 0 : i32
    %c0_i32_0 = arith.constant 0 : i32
    %c0_i32_1 = arith.constant 0 : i32
    return %c0_i32, %c0_i32_0 : i32, i32
  }
  func.func @transform_8(%arg0: i32) -> (i32, i32, i32) {
    %c0_i32 = arith.constant 0 : i32
    %c0_i32_0 = arith.constant 0 : i32
    %c0_i32_1 = arith.constant 0 : i32
    return %arg0, %c0_i32, %c0_i32_0 : i32, i32, i32
  }
}

</mosaic_0001>

<llo_original>
// kernel: mobilenet_v3_forward.5
$region0: #{mobilenet_v3_forward.5}
  #allocation0 [shape = 'u32[]', space=smem, size = 0x4, offset = 0x4, fixed_abs, tag = 'smem constant byte address 0x4 - core index']
  #allocation1 [shape = 'u32[144,128]{1,0:T(1,128)}', space=vmem, size = 0x12000, scoped, tag = 'internal scratch']
  %s0 = inlined_call_operand.vmem [shape: bf16[128,27], index: 0, kind: input, shape index: {}]
  %s1 = inlined_call_operand.vmem [shape: bf16[27,16], index: 1, kind: input, shape index: {}]
  %s2 = inlined_call_operand.vmem [shape: f32[1,16], index: 2, kind: input, shape index: {}]
  %s3 = inlined_call_operand.vmem [shape: f32[1,16], index: 3, kind: input, shape index: {}]
  %s4 = inlined_call_operand.vmem [shape: bf16[128,16], index: 4, kind: output, shape index: {}]
  %s5 = sld [smem:[#allocation0]]
  $region49: #{mobilenet_v3_forward.5} parent=0
    _
  %s7 = ssub.s32 1, %s5
  %s8 = scalar_select 0, %s7, %s5
  loop: start=0, step=1, limit=4
  $region2: #{mobilenet_v3_forward.5} parent=0 // loop_pre_header
    _
  $region3: #{mobilenet_v3_forward.5} parent=0 // loop_header
    %s10 = sphi 0, %s14
    %p11 = scmp.ge.s32.totalorder %s10, 4
    %s20 = sphi 0, %s22
    %s23 = sphi 0, %s20
    %s24 = sphi 0, %s23
    %s40 = sphi 0, %s24
    %s44 = sphi 0, %s44
    %s46 = sphi 0, %s44
    %s47 = sphi 0, %s46
    %s61 = sphi 0, %s47
    %s65 = sphi 0, %s65
    %s67 = sphi 0, %s65
    %s68 = sphi 0, %s67
    %s82 = sphi 0, %s68
    %s86 = sphi 0, %s86
    %s88 = sphi 0, %s86
    %s89 = sphi 0, %s88
    %s103 = sphi 0, %s89
    %s109 = sphi 0, %s111
    %s112 = sphi 0, %s109
    %s113 = sphi 0, %s112
    %s129 = sphi 0, %s113
  $region4: #{mobilenet_v3_forward.5} parent=0 // loop_header_branch
    %13 = sbr.rel (%p11) target = $region8
  $region5: #{mobilenet_v3_forward.5} parent=0 // loop_body
    %s15 = ssub.s32 %s10, 1
    %s16 = ssub.s32 %s10, 2
    %s17 = sadd.s32 %s10, 1
    %s18 = ssub.s32 %s10, %s17
    %p19 = scmp.eq.s32.totalorder %s18, 0
    %s21 = sadd.s32 %s20, 1
    %s22 = scalar_select %p19, %s20, %s21
    %p25 = pneg %p19
    %p26 = scmp.eq.s32.totalorder %s10, 1
    %p27 = por %p25, %p26
    %p28 = scmp.ne.s32.totalorder %s20, %s23
    %p29 = scmp.eq.s32.totalorder %s10, 0
    %p30 = por %p28, %p29
    %p31 = scmp.ne.s32.totalorder %s20, %s23
    %p32 = scmp.eq.s32.totalorder %s15, 1
    %p33 = por %p31, %p32
    %p34 = scmp.ne.s32.totalorder %s23, %s24
    %p35 = scmp.eq.s32.totalorder %s15, 0
    %p36 = por %p34, %p35
    %p37 = scmp.ne.s32.totalorder %s23, %s24
    %p38 = scmp.eq.s32.totalorder %s16, 1
    %p39 = por %p37, %p38
    %p41 = scmp.ne.s32.totalorder %s24, %s40
    %p42 = scmp.eq.s32.totalorder %s16, 0
    %p43 = por %p41, %p42
    %s45 = sadd.s32 %s44, 1
    %p48 = scmp.eq.s32.totalorder %s10, 1
    %p49 = scmp.ne.s32.totalorder %s44, %s46
    %p50 = scmp.eq.s32.totalorder %s10, 0
    %p51 = por %p49, %p50
    %p52 = scmp.ne.s32.totalorder %s44, %s46
    %p53 = scmp.eq.s32.totalorder %s15, 1
    %p54 = por %p52, %p53
    %p55 = scmp.ne.s32.totalorder %s46, %s47
    %p56 = scmp.eq.s32.totalorder %s15, 0
    %p57 = por %p55, %p56
    %p58 = scmp.ne.s32.totalorder %s46, %s47
    %p59 = scmp.eq.s32.totalorder %s16, 1
    %p60 = por %p58, %p59
    %p62 = scmp.ne.s32.totalorder %s47, %s61
    %p63 = scmp.eq.s32.totalorder %s16, 0
    %p64 = por %p62, %p63
    %s66 = sadd.s32 %s65, 1
    %p69 = scmp.eq.s32.totalorder %s10, 1
    %p70 = scmp.ne.s32.totalorder %s65, %s67
    %p71 = scmp.eq.s32.totalorder %s10, 0
    %p72 = por %p70, %p71
    %p73 = scmp.ne.s32.totalorder %s65, %s67
    %p74 = scmp.eq.s32.totalorder %s15, 1
    %p75 = por %p73, %p74
    %p76 = scmp.ne.s32.totalorder %s67, %s68
    %p77 = scmp.eq.s32.totalorder %s15, 0
    %p78 = por %p76, %p77
    %p79 = scmp.ne.s32.totalorder %s67, %s68
    %p80 = scmp.eq.s32.totalorder %s16, 1
    %p81 = por %p79, %p80
    %p83 = scmp.ne.s32.totalorder %s68, %s82
    %p84 = scmp.eq.s32.totalorder %s16, 0
    %p85 = por %p83, %p84
    %s87 = sadd.s32 %s86, 1
    %p90 = scmp.eq.s32.totalorder %s10, 1
    %p91 = scmp.ne.s32.totalorder %s86, %s88
    %p92 = scmp.eq.s32.totalorder %s10, 0
    %p93 = por %p91, %p92
    %p94 = scmp.ne.s32.totalorder %s86, %s88
    %p95 = scmp.eq.s32.totalorder %s15, 1
    %p96 = por %p94, %p95
    %p97 = scmp.ne.s32.totalorder %s88, %s89
    %p98 = scmp.eq.s32.totalorder %s15, 0
    %p99 = por %p97, %p98
    %p100 = scmp.ne.s32.totalorder %s88, %s89
    %p101 = scmp.eq.s32.totalorder %s16, 1
    %p102 = por %p100, %p101
    %p104 = scmp.ne.s32.totalorder %s89, %s103
    %p105 = scmp.eq.s32.totalorder %s16, 0
    %p106 = por %p104, %p105
    %s107 = ssub.s32 %s10, %s17
    %p108 = scmp.eq.s32.totalorder %s107, 0
    %s110 = sadd.s32 %s109, 1
    %s111 = scalar_select %p108, %s109, %s110
    %p114 = pneg %p108
    %p115 = scmp.eq.s32.totalorder %s10, 1
    %p116 = por %p114, %p115
    %p117 = scmp.ne.s32.totalorder %s109, %s112
    %p118 = scmp.eq.s32.totalorder %s10, 0
    %p119 = por %p117, %p118
    %p120 = scmp.ne.s32.totalorder %s109, %s112
    %p121 = scmp.eq.s32.totalorder %s15, 1
    %p122 = por %p120, %p121
    %p123 = scmp.ne.s32.totalorder %s112, %s113
    %p124 = scmp.eq.s32.totalorder %s15, 0
    %p125 = por %p123, %p124
    %p126 = scmp.ne.s32.totalorder %s112, %s113
    %p127 = scmp.eq.s32.totalorder %s16, 1
    %p128 = por %p126, %p127
    %p130 = scmp.ne.s32.totalorder %s113, %s129
    %p131 = scmp.eq.s32.totalorder %s16, 0
    %p132 = por %p130, %p131
    %p133 = scmp.le.s32.totalorder 1, %s10
    %p134 = scmp.lt.s32.totalorder %s10, 3
    %p135 = pnand %p133, %p134
    %p136 = pneg %p135
    // Predicated region
    $region9: #{mobilenet_v3_forward.5} parent=5 // pred_check
      _
    $region10: #{mobilenet_v3_forward.5} parent=5 // pred_check_branch
      %138 = sbr.rel (%p135) target = $region12
    $region11: #{mobilenet_v3_forward.5} parent=5 // pred_region
      %s139 = ssub.s32 %s10, 1
      // Predicated region
      $region13: #{mobilenet_v3_forward.5} parent=11 // pred_check
        %p140 = pneg %p57
      $region14: #{mobilenet_v3_forward.5} parent=11 // pred_check_branch
        %142 = sbr.rel (%p140) target = $region16
      $region15: #{mobilenet_v3_forward.5} parent=11 // pred_region
        _
      $region16: #{mobilenet_v3_forward.5} parent=11 // pred_fallthru
        _
      // Predicated region
      $region17: #{mobilenet_v3_forward.5} parent=11 // pred_check
        %p143 = pneg %p78
      $region18: #{mobilenet_v3_forward.5} parent=11 // pred_check_branch
        %145 = sbr.rel (%p143) target = $region20
      $region19: #{mobilenet_v3_forward.5} parent=11 // pred_region
        _
      $region20: #{mobilenet_v3_forward.5} parent=11 // pred_fallthru
        _
      // Predicated region
      $region21: #{mobilenet_v3_forward.5} parent=11 // pred_check
        %p146 = pneg %p99
      $region22: #{mobilenet_v3_forward.5} parent=11 // pred_check_branch
        %148 = sbr.rel (%p146) target = $region24
      $region23: #{mobilenet_v3_forward.5} parent=11 // pred_region
        _
      $region24: #{mobilenet_v3_forward.5} parent=11 // pred_fallthru
        _
    $region12: #{mobilenet_v3_forward.5} parent=5 // pred_fallthru
      _
    %p149 = scmp.lt.s32.totalorder %s10, 2
    // Predicated region
    $region25: #{mobilenet_v3_forward.5} parent=5 // pred_check
      %p150 = pneg %p149
    $region26: #{mobilenet_v3_forward.5} parent=5 // pred_check_branch
      %152 = sbr.rel (%p150) target = $region28
    $region27: #{mobilenet_v3_forward.5} parent=5 // pred_region
      // Predicated region
      $region29: #{mobilenet_v3_forward.5} parent=27 // pred_check
        %p153 = pneg %p30
      $region30: #{mobilenet_v3_forward.5} parent=27 // pred_check_branch
        %155 = sbr.rel (%p153) target = $region32
      $region31: #{mobilenet_v3_forward.5} parent=27 // pred_region
        %s156 = smul.u32 8, %s10
        %p157 = scmp.lt.s32.totalorder %s156, 15
        %s158 = scalar_select %p157, %s156, 15
        %s159 = smul.addr %s158, 4
        %s160 = scalar_lea.vmem %s0, %s159
        %s161 = smul.u32 8, %s10
      $region32: #{mobilenet_v3_forward.5} parent=27 // pred_fallthru
        _
    $region28: #{mobilenet_v3_forward.5} parent=5 // pred_fallthru
      _
    %p162 = scmp.le.s32.totalorder 1, %s10
    %p163 = scmp.lt.s32.totalorder %s10, 3
    %p164 = pnand %p162, %p163
    %p165 = pneg %p164
    // Predicated region
    $region33: #{mobilenet_v3_forward.5} parent=5 // pred_check
      _
    $region34: #{mobilenet_v3_forward.5} parent=5 // pred_check_branch
      %167 = sbr.rel (%p164) target = $region36
    $region35: #{mobilenet_v3_forward.5} parent=5 // pred_region
      %s168 = ssub.s32 %s10, 1
      %s169 = smul.u32 8, %s15
      %p170 = scmp.lt.s32.totalorder %s169, 15
      %s171 = scalar_select %p170, %s169, 15
      %s172 = smul.addr %s171, 4
      %s173 = scalar_lea.vmem %s0, %s172
      %p174 = pneg %p36
      %p175 = pneg %p33
      %p176 = pneg %p57
      %p177 = pneg %p54
      %p178 = pneg %p78
      %p179 = pneg %p75
      %p180 = pneg %p99
      %p181 = pneg %p96
      %p182 = pneg %p125
      %p183 = pneg %p122
      %s184 = smul.u32 8, %s15
      %p185 = scmp.lt.s32.totalorder %s184, 15
      %s186 = scalar_select %p185, %s184, 15
      %s187 = smul.addr %s186, 4
      %s188 = scalar_lea.vmem %s4, %s187
      %s189 = smul.u32 8, %s15
      %p190 = scmp.lt.s32.totalorder %s189, 15
      %s191 = scalar_select %p190, %s189, 15
      %s192 = smul.addr %s191, 4
      %s193 = scalar_lea.vmem %s0, %s192
      %s194 = smul.u32 8, %s15
      %s195 = smul.u32 8, %s15
      %p196 = scmp.lt.s32.totalorder %s195, 15
      %s197 = scalar_select %p196, %s195, 15
      %s198 = smul.addr %s197, 4
      %s199 = scalar_lea.vmem %s4, %s198
      %s200 = smul.u32 8, %s15
      %v202 = vld [vmem:[%s193] sm:$0xf]
      %v203 = vld [vmem:[%s193 + $0x4] sm:$0xf]
      %v204 = vld [vmem:[%s193 + $0x8] sm:$0xf]
      %v205 = vld [vmem:[%s193 + $0xc] sm:$0xf]
      %v206 = vld [vmem:[%s193 + $0x10] sm:$0xf]
      %v207 = vld [vmem:[%s193 + $0x14] sm:$0xf]
      %v208 = vld [vmem:[%s193 + $0x18] sm:$0xf]
      %v209 = vld [vmem:[%s193 + $0x1c] sm:$0xf]
      %v210 = vld [vmem:[%s1] sm:$0xf]
      %v211 = vld [vmem:[%s1 + $0x4] sm:$0xf]
      %v212 = vld [vmem:[%s1 + $0x8] sm:$0xf]
      %v213 = vld [vmem:[%s1 + $0xc] sm:$0x3]
      %v222 = vunpack.c.l.b16 %v202
      %v223 = vunpack.c.l.b16 %v203
      %v224 = vunpack.c.l.b16 %v204
      %v225 = vunpack.c.l.b16 %v205
      %v226 = vunpack.c.l.b16 %v206
      %v227 = vunpack.c.l.b16 %v207
      %v228 = vunpack.c.l.b16 %v208
      %v229 = vunpack.c.l.b16 %v209
      %v230 = vpack.c.b16 %v223, %v222
      %v231 = vpack.c.b16 %v225, %v224
      %v232 = vpack.c.b16 %v227, %v226
      %v233 = vpack.c.b16 %v229, %v228
      %v238 = vunpack.c.l.b16 %v210
      %v239 = vunpack.c.l.b16 %v211
      %v240 = vunpack.c.l.b16 %v212
      %v241 = vunpack.c.l.b16 %v213
      %v242 = vpack.c.b16 %v239, %v238
      %v243 = vpack.c.b16 %v241, %v240
      %vm245 = vcmask 220160
      %v247 = vsel %vm245, %v230, 0
      %v250 = vsel %vm245, %v231, 0
      %v253 = vsel %vm245, %v232, 0
      %v256 = vsel %vm245, %v233, 0
      %vm258 = vcmask 1044480
      %vm259 = vcmask 1045504
      %v260 = vsel %vm258, 4294967295, 65535
      %v261 = vsel %vm259, %v260, 0
      %v263 = vand.u32 %v243, %v261
      %265 = vmatprep.subr.bf16.mxu0 0
      %266 = vmatpush1.bf16.msra.mxu0 0
      %267 = vmatprep.subr.bf16.mxu0 0
      %268 = vmatpush1.bf16.msra.mxu0 0
      %269 = vmatprep.subr.bf16.mxu0 0
      %270 = vmatpush1.bf16.msra.mxu0 0
      %271 = vmatprep.subr.bf16.mxu0 0
      %272 = vmatpush1.bf16.msra.mxu0 0
      %273 = vmatprep.subr.bf16.mxu0 0
      %274 = vmatpush1.bf16.msra.mxu0 0
      %275 = vmatprep.subr.bf16.mxu0 0
      %276 = vmatpush1.bf16.msra.mxu0 0
      %277 = vmatprep.subr.bf16.mxu0 0
      %278 = vmatpush1.bf16.msra.mxu0 %v263
      %279 = vmatprep.subr.bf16.mxu0 0
      %280 = vmatpush1.bf16.msra.mxu0 %v242
      %281 = vmatprep.subr.bf16.mxu0 0
      %282 = vmatpush2.bf16.msra.mxu0 0
      %283 = vmatprep.subr.bf16.mxu0 0
      %284 = vmatpush2.bf16.msra.mxu0 0
      %285 = vmatprep.subr.bf16.mxu0 0
      %286 = vmatpush2.bf16.msra.mxu0 0
      %287 = vmatprep.subr.bf16.mxu0 0
      %288 = vmatpush2.bf16.msra.mxu0 0
      %289 = vmatprep.subr.bf16.mxu0 0
      %290 = vmatpush2.bf16.msra.mxu0 0
      %291 = vmatprep.subr.bf16.mxu0 0
      %292 = vmatpush2.bf16.msra.mxu0 0
      %293 = vmatprep.subr.bf16.mxu0 0
      %294 = vmatpush2.bf16.msra.mxu0 0
      %295 = vmatprep.subr.bf16.mxu0 0
      %296 = vmatpush2.bf16.msra.mxu0 0
      %297 = vmatprep.mubr.bf16.mxu0 0
      %298 = vmatmul.mubr.bf16.gmra.mxu0 %v247
      %v299 = vpop.f32.mrf.mxu0
      %v300 = vadd.f32 0.0, %v299
      %v301 = vpop.f32.mrf.mxu0
      %v302 = vpop.f32.mrf.mxu0
      %v303 = vadd.f32 0.0, %v302
      %v304 = vpop.f32.mrf.mxu0
      %305 = vmatprep.mubr.bf16.mxu0 0
      %306 = vmatmul.mubr.bf16.gmra.mxu0 %v250
      %v307 = vpop.f32.mrf.mxu0
      %v308 = vadd.f32 0.0, %v307
      %v309 = vpop.f32.mrf.mxu0
      %v310 = vpop.f32.mrf.mxu0
      %v311 = vadd.f32 0.0, %v310
      %v312 = vpop.f32.mrf.mxu0
      %313 = vmatprep.mubr.bf16.mxu0 0
      %314 = vmatmul.mubr.bf16.gmra.mxu0 %v253
      %v315 = vpop.f32.mrf.mxu0
      %v316 = vadd.f32 0.0, %v315
      %v317 = vpop.f32.mrf.mxu0
      %v318 = vpop.f32.mrf.mxu0
      %v319 = vadd.f32 0.0, %v318
      %v320 = vpop.f32.mrf.mxu0
      %321 = vmatprep.mubr.bf16.mxu0 0
      %322 = vmatmul.mubr.bf16.gmra.mxu0 %v256
      %v323 = vpop.f32.mrf.mxu0
      %v324 = vadd.f32 0.0, %v323
      %v325 = vpop.f32.mrf.mxu0
      %v326 = vpop.f32.mrf.mxu0
      %v327 = vadd.f32 0.0, %v326
      %v328 = vpop.f32.mrf.mxu0
      %329 = vdwg.mxu0
      %v330 = vld [vmem:[%s2] sm:$0x1]
      %v332 = vlaneseq
      %v333 = vshrl.u32 %v332, 7
      %v334 = vsub.s32 0, %v333
      %v335 = vrot.slane %v330, %v334
      %v337 = vmul.f32 %v300, %v335
      %v338 = vmul.f32 %v303, %v335
      %v339 = vmul.f32 %v308, %v335
      %v340 = vmul.f32 %v311, %v335
      %v341 = vmul.f32 %v316, %v335
      %v342 = vmul.f32 %v319, %v335
      %v343 = vmul.f32 %v324, %v335
      %v344 = vmul.f32 %v327, %v335
      %v345 = vld [vmem:[%s3] sm:$0x1]
      %v347 = vlaneseq
      %v348 = vshrl.u32 %v347, 7
      %v349 = vsub.s32 0, %v348
      %v350 = vrot.slane %v345, %v349
      %v352 = vadd.f32 %v337, %v350
      %v353 = vadd.f32 %v338, %v350
      %v354 = vadd.f32 %v339, %v350
      %v355 = vadd.f32 %v340, %v350
      %v356 = vadd.f32 %v341, %v350
      %v357 = vadd.f32 %v342, %v350
      %v358 = vadd.f32 %v343, %v350
      %v359 = vadd.f32 %v344, %v350
      %v360 = vadd.f32 %v352, 3.0
      %v361 = vadd.f32 %v353, 3.0
      %v362 = vadd.f32 %v354, 3.0
      %v363 = vadd.f32 %v355, 3.0
      %v364 = vadd.f32 %v356, 3.0
      %v365 = vadd.f32 %v357, 3.0
      %v366 = vadd.f32 %v358, 3.0
      %v367 = vadd.f32 %v359, 3.0
      %v368 = vmax.f32 %v360, 0.0
      %v369 = vmax.f32 %v361, 0.0
      %v370 = vmax.f32 %v362, 0.0
      %v371 = vmax.f32 %v363, 0.0
      %v372 = vmax.f32 %v364, 0.0
      %v373 = vmax.f32 %v365, 0.0
      %v374 = vmax.f32 %v366, 0.0
      %v375 = vmax.f32 %v367, 0.0
      %v376 = vmin.f32 %v368, 6.0
      %v377 = vmin.f32 %v369, 6.0
      %v378 = vmin.f32 %v370, 6.0
      %v379 = vmin.f32 %v371, 6.0
      %v380 = vmin.f32 %v372, 6.0
      %v381 = vmin.f32 %v373, 6.0
      %v382 = vmin.f32 %v374, 6.0
      %v383 = vmin.f32 %v375, 6.0
      %v384 = vmul.f32 %v352, %v376
      %v385 = vmul.f32 %v353, %v377
      %v386 = vmul.f32 %v354, %v378
      %v387 = vmul.f32 %v355, %v379
      %v388 = vmul.f32 %v356, %v380
      %v389 = vmul.f32 %v357, %v381
      %v390 = vmul.f32 %v358, %v382
      %v391 = vmul.f32 %v359, %v383
      %v392 = vmul.f32 %v384, 0.16666667
      %v393 = vmul.f32 %v385, 0.16666667
      %v394 = vmul.f32 %v386, 0.16666667
      %v395 = vmul.f32 %v387, 0.16666667
      %v396 = vmul.f32 %v388, 0.16666667
      %v397 = vmul.f32 %v389, 0.16666667
      %v398 = vmul.f32 %v390, 0.16666667
      %v399 = vmul.f32 %v391, 0.16666667
      %v400 = vpack.c.bf16 %v393, %v392
      %v401 = vpack.c.bf16 %v395, %v394
      %v402 = vpack.c.bf16 %v397, %v396
      %v403 = vpack.c.bf16 %v399, %v398
      %v408 = vunpack.c.l.b16 %v400
      %v409 = vunpack.c.h.b16 %v400
      %v410 = vunpack.c.l.b16 %v401
      %v411 = vunpack.c.h.b16 %v401
      %v412 = vunpack.c.l.b16 %v402
      %v413 = vunpack.c.h.b16 %v402
      %v414 = vunpack.c.l.b16 %v403
      %v415 = vunpack.c.h.b16 %v403
      %v416 = vpack.c.b16 %v408, %v408
      %v417 = vpack.c.b16 %v409, %v409
      %v418 = vpack.c.b16 %v410, %v410
      %v419 = vpack.c.b16 %v411, %v411
      %v420 = vpack.c.b16 %v412, %v412
      %v421 = vpack.c.b16 %v413, %v413
      %v422 = vpack.c.b16 %v414, %v414
      %v423 = vpack.c.b16 %v415, %v415
      %vm432 = vcmask 125952
      %433 = vst.msk [vmem:[%s199] sm:$0xf] %vm432, %v416
      %434 = vst.msk [vmem:[%s199 + $0x4] sm:$0xf] %vm432, %v417
      %435 = vst.msk [vmem:[%s199 + $0x8] sm:$0xf] %vm432, %v418
      %436 = vst.msk [vmem:[%s199 + $0xc] sm:$0xf] %vm432, %v419
      %437 = vst.msk [vmem:[%s199 + $0x10] sm:$0xf] %vm432, %v420
      %438 = vst.msk [vmem:[%s199 + $0x14] sm:$0xf] %vm432, %v421
      %439 = vst.msk [vmem:[%s199 + $0x18] sm:$0xf] %vm432, %v422
      %440 = vst.msk [vmem:[%s199 + $0x1c] sm:$0xf] %vm432, %v423
      %s441 = smul.u32 8, %s15
      %p442 = scmp.lt.s32.totalorder %s441, 15
      %s443 = scalar_select %p442, %s441, 15
      %s444 = smul.addr %s443, 4
      %s445 = scalar_lea.vmem %s4, %s444
      // Predicated region
      $region37: #{mobilenet_v3_forward.5} parent=35 // pred_check
        %p446 = pneg %p122
      $region38: #{mobilenet_v3_forward.5} parent=35 // pred_check_branch
        %448 = sbr.rel (%p446) target = $region40
      $region39: #{mobilenet_v3_forward.5} parent=35 // pred_region
        %s449 = smul.u32 8, %s15
      $region40: #{mobilenet_v3_forward.5} parent=35 // pred_fallthru
        _
    $region36: #{mobilenet_v3_forward.5} parent=5 // pred_fallthru
      _
    %p450 = scmp.le.s32.totalorder 2, %s10
    // Predicated region
    $region41: #{mobilenet_v3_forward.5} parent=5 // pred_check
      %p451 = pneg %p450
    $region42: #{mobilenet_v3_forward.5} parent=5 // pred_check_branch
      %453 = sbr.rel (%p451) target = $region44
    $region43: #{mobilenet_v3_forward.5} parent=5 // pred_region
      %s454 = ssub.s32 %s10, 2
      // Predicated region
      $region45: #{mobilenet_v3_forward.5} parent=43 // pred_check
        %p455 = pneg %p128
      $region46: #{mobilenet_v3_forward.5} parent=43 // pred_check_branch
        %457 = sbr.rel (%p455) target = $region48
      $region47: #{mobilenet_v3_forward.5} parent=43 // pred_region
        %s458 = smul.u32 8, %s16
        %p459 = scmp.lt.s32.totalorder %s458, 15
        %s460 = scalar_select %p459, %s458, 15
        %s461 = smul.addr %s460, 4
        %s462 = scalar_lea.vmem %s4, %s461
      $region48: #{mobilenet_v3_forward.5} parent=43 // pred_fallthru
        _
    $region44: #{mobilenet_v3_forward.5} parent=5 // pred_fallthru
      _
  $region6: #{mobilenet_v3_forward.5} parent=0 // loop_footer
    %s14 = sadd.s32 1, %s10
  $region7: #{mobilenet_v3_forward.5} parent=0 // loop_footer_branch
    %9 = sbr.rel target = $region3
  $region8: #{mobilenet_v3_forward.5} parent=0 // loop_exit
    _

// kernel: mobilenet_v3_forward.7
$region0: #{mobilenet_v3_forward.7}
  #allocation0 [shape = 'u32[]', space=smem, size = 0x4, offset = 0x4, fixed_abs, tag = 'smem constant byte address 0x4 - core index']
  #allocation1 [shape = 'u32[144,128]{1,0:T(1,128)}', space=vmem, size = 0x12000, scoped, tag = 'internal scratch']
  %s0 = inlined_call_operand.vmem [shape: bf16[128,16], index: 0, kind: input, shape index: {}]
  %s1 = inlined_call_operand.vmem [shape: bf16[16,64], index: 1, kind: input, shape index: {}]
  %s2 = inlined_call_operand.vmem [shape: f32[1,64], index: 2, kind: input, shape index: {}]
  %s3 = inlined_call_operand.vmem [shape: f32[1,64], index: 3, kind: input, shape index: {}]
  %s4 = inlined_call_operand.vmem [shape: bf16[128,64], index: 4, kind: output, shape index: {}]
  %s5 = sld [smem:[#allocation0]]
  $region49: #{mobilenet_v3_forward.7} parent=0
    _
  %s7 = ssub.s32 1, %s5
  %s8 = scalar_select 0, %s7, %s5
  loop: start=0, step=1, limit=4
  $region2: #{mobilenet_v3_forward.7} parent=0 // loop_pre_header
    _
  $region3: #{mobilenet_v3_forward.7} parent=0 // loop_header
    %s10 = sphi 0, %s14
    %p11 = scmp.ge.s32.totalorder %s10, 4
    %s20 = sphi 0, %s22
    %s23 = sphi 0, %s20
    %s24 = sphi 0, %s23
    %s40 = sphi 0, %s24
    %s44 = sphi 0, %s44
    %s46 = sphi 0, %s44
    %s47 = sphi 0, %s46
    %s61 = sphi 0, %s47
    %s65 = sphi 0, %s65
    %s67 = sphi 0, %s65
    %s68 = sphi 0, %s67
    %s82 = sphi 0, %s68
    %s86 = sphi 0, %s86
    %s88 = sphi 0, %s86
    %s89 = sphi 0, %s88
    %s103 = sphi 0, %s89
    %s109 = sphi 0, %s111
    %s112 = sphi 0, %s109
    %s113 = sphi 0, %s112
    %s129 = sphi 0, %s113
  $region4: #{mobilenet_v3_forward.7} parent=0 // loop_header_branch
    %13 = sbr.rel (%p11) target = $region8
  $region5: #{mobilenet_v3_forward.7} parent=0 // loop_body
    %s15 = ssub.s32 %s10, 1
    %s16 = ssub.s32 %s10, 2
    %s17 = sadd.s32 %s10, 1
    %s18 = ssub.s32 %s10, %s17
    %p19 = scmp.eq.s32.totalorder %s18, 0
    %s21 = sadd.s32 %s20, 1
    %s22 = scalar_select %p19, %s20, %s21
    %p25 = pneg %p19
    %p26 = scmp.eq.s32.totalorder %s10, 1
    %p27 = por %p25, %p26
    %p28 = scmp.ne.s32.totalorder %s20, %s23
    %p29 = scmp.eq.s32.totalorder %s10, 0
    %p30 = por %p28, %p29
    %p31 = scmp.ne.s32.totalorder %s20, %s23
    %p32 = scmp.eq.s32.totalorder %s15, 1
    %p33 = por %p31, %p32
    %p34 = scmp.ne.s32.totalorder %s23, %s24
    %p35 = scmp.eq.s32.totalorder %s15, 0
    %p36 = por %p34, %p35
    %p37 = scmp.ne.s32.totalorder %s23, %s24
    %p38 = scmp.eq.s32.totalorder %s16, 1
    %p39 = por %p37, %p38
    %p41 = scmp.ne.s32.totalorder %s24, %s40
    %p42 = scmp.eq.s32.totalorder %s16, 0
    %p43 = por %p41, %p42
    %s45 = sadd.s32 %s44, 1
    %p48 = scmp.eq.s32.totalorder %s10, 1
    %p49 = scmp.ne.s32.totalorder %s44, %s46
    %p50 = scmp.eq.s32.totalorder %s10, 0
    %p51 = por %p49, %p50
    %p52 = scmp.ne.s32.totalorder %s44, %s46
    %p53 = scmp.eq.s32.totalorder %s15, 1
    %p54 = por %p52, %p53
    %p55 = scmp.ne.s32.totalorder %s46, %s47
    %p56 = scmp.eq.s32.totalorder %s15, 0
    %p57 = por %p55, %p56
    %p58 = scmp.ne.s32.totalorder %s46, %s47
    %p59 = scmp.eq.s32.totalorder %s16, 1
    %p60 = por %p58, %p59
    %p62 = scmp.ne.s32.totalorder %s47, %s61
    %p63 = scmp.eq.s32.totalorder %s16, 0
    %p64 = por %p62, %p63
    %s66 = sadd.s32 %s65, 1
    %p69 = scmp.eq.s32.totalorder %s10, 1
    %p70 = scmp.ne.s32.totalorder %s65, %s67
    %p71 = scmp.eq.s32.totalorder %s10, 0
    %p72 = por %p70, %p71
    %p73 = scmp.ne.s32.totalorder %s65, %s67
    %p74 = scmp.eq.s32.totalorder %s15, 1
    %p75 = por %p73, %p74
    %p76 = scmp.ne.s32.totalorder %s67, %s68
    %p77 = scmp.eq.s32.totalorder %s15, 0
    %p78 = por %p76, %p77
    %p79 = scmp.ne.s32.totalorder %s67, %s68
    %p80 = scmp.eq.s32.totalorder %s16, 1
    %p81 = por %p79, %p80
    %p83 = scmp.ne.s32.totalorder %s68, %s82
    %p84 = scmp.eq.s32.totalorder %s16, 0
    %p85 = por %p83, %p84
    %s87 = sadd.s32 %s86, 1
    %p90 = scmp.eq.s32.totalorder %s10, 1
    %p91 = scmp.ne.s32.totalorder %s86, %s88
    %p92 = scmp.eq.s32.totalorder %s10, 0
    %p93 = por %p91, %p92
    %p94 = scmp.ne.s32.totalorder %s86, %s88
    %p95 = scmp.eq.s32.totalorder %s15, 1
    %p96 = por %p94, %p95
    %p97 = scmp.ne.s32.totalorder %s88, %s89
    %p98 = scmp.eq.s32.totalorder %s15, 0
    %p99 = por %p97, %p98
    %p100 = scmp.ne.s32.totalorder %s88, %s89
    %p101 = scmp.eq.s32.totalorder %s16, 1
    %p102 = por %p100, %p101
    %p104 = scmp.ne.s32.totalorder %s89, %s103
    %p105 = scmp.eq.s32.totalorder %s16, 0
    %p106 = por %p104, %p105
    %s107 = ssub.s32 %s10, %s17
    %p108 = scmp.eq.s32.totalorder %s107, 0
    %s110 = sadd.s32 %s109, 1
    %s111 = scalar_select %p108, %s109, %s110
    %p114 = pneg %p108
    %p115 = scmp.eq.s32.totalorder %s10, 1
    %p116 = por %p114, %p115
    %p117 = scmp.ne.s32.totalorder %s109, %s112
    %p118 = scmp.eq.s32.totalorder %s10, 0
    %p119 = por %p117, %p118
    %p120 = scmp.ne.s32.totalorder %s109, %s112
    %p121 = scmp.eq.s32.totalorder %s15, 1
    %p122 = por %p120, %p121
    %p123 = scmp.ne.s32.totalorder %s112, %s113
    %p124 = scmp.eq.s32.totalorder %s15, 0
    %p125 = por %p123, %p124
    %p126 = scmp.ne.s32.totalorder %s112, %s113
    %p127 = scmp.eq.s32.totalorder %s16, 1
    %p128 = por %p126, %p127
    %p130 = scmp.ne.s32.totalorder %s113, %s129
    %p131 = scmp.eq.s32.totalorder %s16, 0
    %p132 = por %p130, %p131
    %p133 = scmp.le.s32.totalorder 1, %s10
    %p134 = scmp.lt.s32.totalorder %s10, 3
    %p135 = pnand %p133, %p134
    %p136 = pneg %p135
    // Predicated region
    $region9: #{mobilenet_v3_forward.7} parent=5 // pred_check
      _
    $region10: #{mobilenet_v3_forward.7} parent=5 // pred_check_branch
      %138 = sbr.rel (%p135) target = $region12
    $region11: #{mobilenet_v3_forward.7} parent=5 // pred_region
      %s139 = ssub.s32 %s10, 1
      // Predicated region
      $region13: #{mobilenet_v3_forward.7} parent=11 // pred_check
        %p140 = pneg %p57
      $region14: #{mobilenet_v3_forward.7} parent=11 // pred_check_branch
        %142 = sbr.rel (%p140) target = $region16
      $region15: #{mobilenet_v3_forward.7} parent=11 // pred_region
        _
      $region16: #{mobilenet_v3_forward.7} parent=11 // pred_fallthru
        _
      // Predicated region
      $region17: #{mobilenet_v3_forward.7} parent=11 // pred_check
        %p143 = pneg %p78
      $region18: #{mobilenet_v3_forward.7} parent=11 // pred_check_branch
        %145 = sbr.rel (%p143) target = $region20
      $region19: #{mobilenet_v3_forward.7} parent=11 // pred_region
        _
      $region20: #{mobilenet_v3_forward.7} parent=11 // pred_fallthru
        _
      // Predicated region
      $region21: #{mobilenet_v3_forward.7} parent=11 // pred_check
        %p146 = pneg %p99
      $region22: #{mobilenet_v3_forward.7} parent=11 // pred_check_branch
        %148 = sbr.rel (%p146) target = $region24
      $region23: #{mobilenet_v3_forward.7} parent=11 // pred_region
        _
      $region24: #{mobilenet_v3_forward.7} parent=11 // pred_fallthru
        _
    $region12: #{mobilenet_v3_forward.7} parent=5 // pred_fallthru
      _
    %p149 = scmp.lt.s32.totalorder %s10, 2
    // Predicated region
    $region25: #{mobilenet_v3_forward.7} parent=5 // pred_check
      %p150 = pneg %p149
    $region26: #{mobilenet_v3_forward.7} parent=5 // pred_check_branch
      %152 = sbr.rel (%p150) target = $region28
    $region27: #{mobilenet_v3_forward.7} parent=5 // pred_region
      // Predicated region
      $region29: #{mobilenet_v3_forward.7} parent=27 // pred_check
        %p153 = pneg %p30
      $region30: #{mobilenet_v3_forward.7} parent=27 // pred_check_branch
        %155 = sbr.rel (%p153) target = $region32
      $region31: #{mobilenet_v3_forward.7} parent=27 // pred_region
        %s156 = smul.u32 8, %s10
        %p157 = scmp.lt.s32.totalorder %s156, 15
        %s158 = scalar_select %p157, %s156, 15
        %s159 = smul.addr %s158, 4
        %s160 = scalar_lea.vmem %s0, %s159
        %s161 = smul.u32 8, %s10
      $region32: #{mobilenet_v3_forward.7} parent=27 // pred_fallthru
        _
    $region28: #{mobilenet_v3_forward.7} parent=5 // pred_fallthru
      _
    %p162 = scmp.le.s32.totalorder 1, %s10
    %p163 = scmp.lt.s32.totalorder %s10, 3
    %p164 = pnand %p162, %p163
    %p165 = pneg %p164
    // Predicated region
    $region33: #{mobilenet_v3_forward.7} parent=5 // pred_check
      _
    $region34: #{mobilenet_v3_forward.7} parent=5 // pred_check_branch
      %167 = sbr.rel (%p164) target = $region36
    $region35: #{mobilenet_v3_forward.7} parent=5 // pred_region
      %s168 = ssub.s32 %s10, 1
      %s169 = smul.u32 8, %s15
      %p170 = scmp.lt.s32.totalorder %s169, 15
      %s171 = scalar_select %p170, %s169, 15
      %s172 = smul.addr %s171, 4
      %s173 = scalar_lea.vmem %s0, %s172
      %p174 = pneg %p36
      %p175 = pneg %p33
      %p176 = pneg %p57
      %p177 = pneg %p54
      %p178 = pneg %p78
      %p179 = pneg %p75
      %p180 = pneg %p99
      %p181 = pneg %p96
      %p182 = pneg %p125
      %p183 = pneg %p122
      %s184 = smul.u32 8, %s15
      %p185 = scmp.lt.s32.totalorder %s184, 15
      %s186 = scalar_select %p185, %s184, 15
      %s187 = smul.addr %s186, 4
      %s188 = scalar_lea.vmem %s4, %s187
      %s189 = smul.u32 8, %s15
      %p190 = scmp.lt.s32.totalorder %s189, 15
      %s191 = scalar_select %p190, %s189, 15
      %s192 = smul.addr %s191, 4
      %s193 = scalar_lea.vmem %s0, %s192
      %s194 = smul.u32 8, %s15
      %s195 = smul.u32 8, %s15
      %p196 = scmp.lt.s32.totalorder %s195, 15
      %s197 = scalar_select %p196, %s195, 15
      %s198 = smul.addr %s197, 4
      %s199 = scalar_lea.vmem %s4, %s198
      %s200 = smul.u32 8, %s15
      %v202 = vld [vmem:[%s193] sm:$0xf]
      %v203 = vld [vmem:[%s193 + $0x4] sm:$0xf]
      %v204 = vld [vmem:[%s193 + $0x8] sm:$0xf]
      %v205 = vld [vmem:[%s193 + $0xc] sm:$0xf]
      %v206 = vld [vmem:[%s193 + $0x10] sm:$0xf]
      %v207 = vld [vmem:[%s193 + $0x14] sm:$0xf]
      %v208 = vld [vmem:[%s193 + $0x18] sm:$0xf]
      %v209 = vld [vmem:[%s193 + $0x1c] sm:$0xf]
      %v210 = vld [vmem:[%s1] sm:$0xf]
      %v211 = vld [vmem:[%s1 + $0x4] sm:$0xf]
      %v220 = vunpack.c.l.b16 %v202
      %v221 = vunpack.c.l.b16 %v203
      %v222 = vunpack.c.l.b16 %v204
      %v223 = vunpack.c.l.b16 %v205
      %v224 = vunpack.c.l.b16 %v206
      %v225 = vunpack.c.l.b16 %v207
      %v226 = vunpack.c.l.b16 %v208
      %v227 = vunpack.c.l.b16 %v209
      %v228 = vpack.c.b16 %v221, %v220
      %v229 = vpack.c.b16 %v223, %v222
      %v230 = vpack.c.b16 %v225, %v224
      %v231 = vpack.c.b16 %v227, %v226
      %v234 = vunpack.c.l.b16 %v210
      %v235 = vunpack.c.l.b16 %v211
      %v236 = vpack.c.b16 %v235, %v234
      %vm238 = vcmask 130048
      %v240 = vsel %vm238, %v228, 0
      %v243 = vsel %vm238, %v229, 0
      %v246 = vsel %vm238, %v230, 0
      %v249 = vsel %vm238, %v231, 0
      %251 = vmatprep.subr.bf16.mxu0 0
      %252 = vmatpush1.bf16.msra.mxu0 0
      %253 = vmatprep.subr.bf16.mxu0 0
      %254 = vmatpush1.bf16.msra.mxu0 0
      %255 = vmatprep.subr.bf16.mxu0 0
      %256 = vmatpush1.bf16.msra.mxu0 0
      %257 = vmatprep.subr.bf16.mxu0 0
      %258 = vmatpush1.bf16.msra.mxu0 0
      %259 = vmatprep.subr.bf16.mxu0 0
      %260 = vmatpush1.bf16.msra.mxu0 0
      %261 = vmatprep.subr.bf16.mxu0 0
      %262 = vmatpush1.bf16.msra.mxu0 0
      %263 = vmatprep.subr.bf16.mxu0 0
      %264 = vmatpush1.bf16.msra.mxu0 0
      %265 = vmatprep.subr.bf16.mxu0 0
      %266 = vmatpush1.bf16.msra.mxu0 %v236
      %267 = vmatprep.subr.bf16.mxu0 0
      %268 = vmatpush2.bf16.msra.mxu0 0
      %269 = vmatprep.subr.bf16.mxu0 0
      %270 = vmatpush2.bf16.msra.mxu0 0
      %271 = vmatprep.subr.bf16.mxu0 0
      %272 = vmatpush2.bf16.msra.mxu0 0
      %273 = vmatprep.subr.bf16.mxu0 0
      %274 = vmatpush2.bf16.msra.mxu0 0
      %275 = vmatprep.subr.bf16.mxu0 0
      %276 = vmatpush2.bf16.msra.mxu0 0
      %277 = vmatprep.subr.bf16.mxu0 0
      %278 = vmatpush2.bf16.msra.mxu0 0
      %279 = vmatprep.subr.bf16.mxu0 0
      %280 = vmatpush2.bf16.msra.mxu0 0
      %281 = vmatprep.subr.bf16.mxu0 0
      %282 = vmatpush2.bf16.msra.mxu0 0
      %283 = vmatprep.mubr.bf16.mxu0 0
      %284 = vmatmul.mubr.bf16.gmra.mxu0 %v240
      %v285 = vpop.f32.mrf.mxu0
      %v286 = vadd.f32 0.0, %v285
      %v287 = vpop.f32.mrf.mxu0
      %v288 = vpop.f32.mrf.mxu0
      %v289 = vadd.f32 0.0, %v288
      %v290 = vpop.f32.mrf.mxu0
      %291 = vmatprep.mubr.bf16.mxu0 0
      %292 = vmatmul.mubr.bf16.gmra.mxu0 %v243
      %v293 = vpop.f32.mrf.mxu0
      %v294 = vadd.f32 0.0, %v293
      %v295 = vpop.f32.mrf.mxu0
      %v296 = vpop.f32.mrf.mxu0
      %v297 = vadd.f32 0.0, %v296
      %v298 = vpop.f32.mrf.mxu0
      %299 = vmatprep.mubr.bf16.mxu0 0
      %300 = vmatmul.mubr.bf16.gmra.mxu0 %v246
      %v301 = vpop.f32.mrf.mxu0
      %v302 = vadd.f32 0.0, %v301
      %v303 = vpop.f32.mrf.mxu0
      %v304 = vpop.f32.mrf.mxu0
      %v305 = vadd.f32 0.0, %v304
      %v306 = vpop.f32.mrf.mxu0
      %307 = vmatprep.mubr.bf16.mxu0 0
      %308 = vmatmul.mubr.bf16.gmra.mxu0 %v249
      %v309 = vpop.f32.mrf.mxu0
      %v310 = vadd.f32 0.0, %v309
      %v311 = vpop.f32.mrf.mxu0
      %v312 = vpop.f32.mrf.mxu0
      %v313 = vadd.f32 0.0, %v312
      %v314 = vpop.f32.mrf.mxu0
      %315 = vdwg.mxu0
      %v316 = vld [vmem:[%s2] sm:$0x1]
      %v318 = vlaneseq
      %v319 = vshrl.u32 %v318, 7
      %v320 = vsub.s32 0, %v319
      %v321 = vrot.slane %v316, %v320
      %v323 = vmul.f32 %v286, %v321
      %v324 = vmul.f32 %v289, %v321
      %v325 = vmul.f32 %v294, %v321
      %v326 = vmul.f32 %v297, %v321
      %v327 = vmul.f32 %v302, %v321
      %v328 = vmul.f32 %v305, %v321
      %v329 = vmul.f32 %v310, %v321
      %v330 = vmul.f32 %v313, %v321
      %v331 = vld [vmem:[%s3] sm:$0x1]
      %v333 = vlaneseq
      %v334 = vshrl.u32 %v333, 7
      %v335 = vsub.s32 0, %v334
      %v336 = vrot.slane %v331, %v335
      %v338 = vadd.f32 %v323, %v336
      %v339 = vadd.f32 %v324, %v336
      %v340 = vadd.f32 %v325, %v336
      %v341 = vadd.f32 %v326, %v336
      %v342 = vadd.f32 %v327, %v336
      %v343 = vadd.f32 %v328, %v336
      %v344 = vadd.f32 %v329, %v336
      %v345 = vadd.f32 %v330, %v336
      %v346 = vadd.f32 %v338, 3.0
      %v347 = vadd.f32 %v339, 3.0
      %v348 = vadd.f32 %v340, 3.0
      %v349 = vadd.f32 %v341, 3.0
      %v350 = vadd.f32 %v342, 3.0
      %v351 = vadd.f32 %v343, 3.0
      %v352 = vadd.f32 %v344, 3.0
      %v353 = vadd.f32 %v345, 3.0
      %v354 = vmax.f32 %v346, 0.0
      %v355 = vmax.f32 %v347, 0.0
      %v356 = vmax.f32 %v348, 0.0
      %v357 = vmax.f32 %v349, 0.0
      %v358 = vmax.f32 %v350, 0.0
      %v359 = vmax.f32 %v351, 0.0
      %v360 = vmax.f32 %v352, 0.0
      %v361 = vmax.f32 %v353, 0.0
      %v362 = vmin.f32 %v354, 6.0
      %v363 = vmin.f32 %v355, 6.0
      %v364 = vmin.f32 %v356, 6.0
      %v365 = vmin.f32 %v357, 6.0
      %v366 = vmin.f32 %v358, 6.0
      %v367 = vmin.f32 %v359, 6.0
      %v368 = vmin.f32 %v360, 6.0
      %v369 = vmin.f32 %v361, 6.0
      %v370 = vmul.f32 %v338, %v362
      %v371 = vmul.f32 %v339, %v363
      %v372 = vmul.f32 %v340, %v364
      %v373 = vmul.f32 %v341, %v365
      %v374 = vmul.f32 %v342, %v366
      %v375 = vmul.f32 %v343, %v367
      %v376 = vmul.f32 %v344, %v368
      %v377 = vmul.f32 %v345, %v369
      %v378 = vmul.f32 %v370, 0.16666667
      %v379 = vmul.f32 %v371, 0.16666667
      %v380 = vmul.f32 %v372, 0.16666667
      %v381 = vmul.f32 %v373, 0.16666667
      %v382 = vmul.f32 %v374, 0.16666667
      %v383 = vmul.f32 %v375, 0.16666667
      %v384 = vmul.f32 %v376, 0.16666667
      %v385 = vmul.f32 %v377, 0.16666667
      %v386 = vpack.c.bf16 %v379, %v378
      %v387 = vpack.c.bf16 %v381, %v380
      %v388 = vpack.c.bf16 %v383, %v382
      %v389 = vpack.c.bf16 %v385, %v384
      %v394 = vunpack.c.l.b16 %v386
      %v395 = vunpack.c.h.b16 %v386
      %v396 = vunpack.c.l.b16 %v387
      %v397 = vunpack.c.h.b16 %v387
      %v398 = vunpack.c.l.b16 %v388
      %v399 = vunpack.c.h.b16 %v388
      %v400 = vunpack.c.l.b16 %v389
      %v401 = vunpack.c.h.b16 %v389
      %v402 = vpack.c.b16 %v394, %v394
      %v403 = vpack.c.b16 %v395, %v395
      %v404 = vpack.c.b16 %v396, %v396
      %v405 = vpack.c.b16 %v397, %v397
      %v406 = vpack.c.b16 %v398, %v398
      %v407 = vpack.c.b16 %v399, %v399
      %v408 = vpack.c.b16 %v400, %v400
      %v409 = vpack.c.b16 %v401, %v401
      %vm418 = vcmask 519168
      %419 = vst.msk [vmem:[%s199] sm:$0xf] %vm418, %v402
      %420 = vst.msk [vmem:[%s199 + $0x4] sm:$0xf] %vm418, %v403
      %421 = vst.msk [vmem:[%s199 + $0x8] sm:$0xf] %vm418, %v404
      %422 = vst.msk [vmem:[%s199 + $0xc] sm:$0xf] %vm418, %v405
      %423 = vst.msk [vmem:[%s199 + $0x10] sm:$0xf] %vm418, %v406
      %424 = vst.msk [vmem:[%s199 + $0x14] sm:$0xf] %vm418, %v407
      %425 = vst.msk [vmem:[%s199 + $0x18] sm:$0xf] %vm418, %v408
      %426 = vst.msk [vmem:[%s199 + $0x1c] sm:$0xf] %vm418, %v409
      %s427 = smul.u32 8, %s15
      %p428 = scmp.lt.s32.totalorder %s427, 15
      %s429 = scalar_select %p428, %s427, 15
      %s430 = smul.addr %s429, 4
      %s431 = scalar_lea.vmem %s4, %s430
      // Predicated region
      $region37: #{mobilenet_v3_forward.7} parent=35 // pred_check
        %p432 = pneg %p122
      $region38: #{mobilenet_v3_forward.7} parent=35 // pred_check_branch
        %434 = sbr.rel (%p432) target = $region40
      $region39: #{mobilenet_v3_forward.7} parent=35 // pred_region
        %s435 = smul.u32 8, %s15
      $region40: #{mobilenet_v3_forward.7} parent=35 // pred_fallthru
        _
    $region36: #{mobilenet_v3_forward.7} parent=5 // pred_fallthru
      _
    %p436 = scmp.le.s32.totalorder 2, %s10
    // Predicated region
    $region41: #{mobilenet_v3_forward.7} parent=5 // pred_check
      %p437 = pneg %p436
    $region42: #{mobilenet_v3_forward.7} parent=5 // pred_check_branch
      %439 = sbr.rel (%p437) target = $region44
    $region43: #{mobilenet_v3_forward.7} parent=5 // pred_region
      %s440 = ssub.s32 %s10, 2
      // Predicated region
      $region45: #{mobilenet_v3_forward.7} parent=43 // pred_check
        %p441 = pneg %p128
      $region46: #{mobilenet_v3_forward.7} parent=43 // pred_check_branch
        %443 = sbr.rel (%p441) target = $region48
      $region47: #{mobilenet_v3_forward.7} parent=43 // pred_region
        %s444 = smul.u32 8, %s16
        %p445 = scmp.lt.s32.totalorder %s444, 15
        %s446 = scalar_select %p445, %s444, 15
        %s447 = smul.addr %s446, 4
        %s448 = scalar_lea.vmem %s4, %s447
      $region48: #{mobilenet_v3_forward.7} parent=43 // pred_fallthru
        _
    $region44: #{mobilenet_v3_forward.7} parent=5 // pred_fallthru
      _
  $region6: #{mobilenet_v3_forward.7} parent=0 // loop_footer
    %s14 = sadd.s32 1, %s10
  $region7: #{mobilenet_v3_forward.7} parent=0 // loop_footer_branch
    %9 = sbr.rel target = $region3
  $region8: #{mobilenet_v3_forward.7} parent=0 // loop_exit
    _

// kernel: mobilenet_v3_forward.6
$region0: #{mobilenet_v3_forward.6}
  #allocation0 [shape = 'u32[]', space=smem, size = 0x4, offset = 0x4, fixed_abs, tag = 'smem constant byte address 0x4 - core index']
  #allocation1 [shape = 'u32[144,128]{1,0:T(1,128)}', space=vmem, size = 0x12000, scoped, tag = 'internal scratch']
  %s0 = inlined_call_operand.vmem [shape: bf16[2,1,10,10,16], index: 0, kind: input, shape index: {}]
  %s1 = inlined_call_operand.vmem [shape: bf16[9,16], index: 1, kind: input, shape index: {}]
  %s2 = inlined_call_operand.vmem [shape: f32[1,16], index: 2, kind: input, shape index: {}]
  %s3 = inlined_call_operand.vmem [shape: f32[1,16], index: 3, kind: input, shape index: {}]
  %s4 = inlined_call_operand.vmem [shape: bf16[16,8], index: 4, kind: input, shape index: {}]
  %s5 = inlined_call_operand.vmem [shape: f32[1,8], index: 5, kind: input, shape index: {}]
  %s6 = inlined_call_operand.vmem [shape: bf16[8,16], index: 6, kind: input, shape index: {}]
  %s7 = inlined_call_operand.vmem [shape: f32[1,16], index: 7, kind: input, shape index: {}]
  %s8 = inlined_call_operand.vmem [shape: bf16[16,16], index: 8, kind: input, shape index: {}]
  %s9 = inlined_call_operand.vmem [shape: f32[1,16], index: 9, kind: input, shape index: {}]
  %s10 = inlined_call_operand.vmem [shape: f32[1,16], index: 10, kind: input, shape index: {}]
  %s11 = inlined_call_operand.vmem [shape: bf16[2,8,8,16], index: 11, kind: input, shape index: {}]
  %s12 = inlined_call_operand.vmem [shape: bf16[2,8,8,16], index: 12, kind: output, shape index: {}]
  %s13 = sld [smem:[#allocation0]]
  $region81: #{mobilenet_v3_forward.6} parent=0
    _
  %s15 = ssub.s32 1, %s13
  %s16 = scalar_select 0, %s15, %s13
  loop: start=0, step=1, limit=4
  $region2: #{mobilenet_v3_forward.6} parent=0 // loop_pre_header
    _
  $region3: #{mobilenet_v3_forward.6} parent=0 // loop_header
    %s18 = sphi 0, %s22
    %p19 = scmp.ge.s32.totalorder %s18, 4
    %s28 = sphi 0, %s30
    %s31 = sphi 0, %s28
    %s32 = sphi 0, %s31
    %s48 = sphi 0, %s32
    %s52 = sphi 0, %s52
    %s54 = sphi 0, %s52
    %s55 = sphi 0, %s54
    %s69 = sphi 0, %s55
    %s73 = sphi 0, %s73
    %s75 = sphi 0, %s73
    %s76 = sphi 0, %s75
    %s90 = sphi 0, %s76
    %s94 = sphi 0, %s94
    %s96 = sphi 0, %s94
    %s97 = sphi 0, %s96
    %s111 = sphi 0, %s97
    %s115 = sphi 0, %s115
    %s117 = sphi 0, %s115
    %s118 = sphi 0, %s117
    %s132 = sphi 0, %s118
    %s136 = sphi 0, %s136
    %s138 = sphi 0, %s136
    %s139 = sphi 0, %s138
    %s153 = sphi 0, %s139
    %s157 = sphi 0, %s157
    %s159 = sphi 0, %s157
    %s160 = sphi 0, %s159
    %s174 = sphi 0, %s160
    %s178 = sphi 0, %s178
    %s180 = sphi 0, %s178
    %s181 = sphi 0, %s180
    %s195 = sphi 0, %s181
    %s199 = sphi 0, %s199
    %s201 = sphi 0, %s199
    %s202 = sphi 0, %s201
    %s216 = sphi 0, %s202
    %s220 = sphi 0, %s220
    %s222 = sphi 0, %s220
    %s223 = sphi 0, %s222
    %s237 = sphi 0, %s223
    %s241 = sphi 0, %s241
    %s243 = sphi 0, %s241
    %s244 = sphi 0, %s243
    %s258 = sphi 0, %s244
    %s264 = sphi 0, %s266
    %s267 = sphi 0, %s264
    %s268 = sphi 0, %s267
    %s284 = sphi 0, %s268
    %s290 = sphi 0, %s292
    %s293 = sphi 0, %s290
    %s294 = sphi 0, %s293
    %s310 = sphi 0, %s294
  $region4: #{mobilenet_v3_forward.6} parent=0 // loop_header_branch
    %21 = sbr.rel (%p19) target = $region8
  $region5: #{mobilenet_v3_forward.6} parent=0 // loop_body
    %s23 = ssub.s32 %s18, 1
    %s24 = ssub.s32 %s18, 2
    %s25 = sadd.s32 %s18, 1
    %s26 = ssub.s32 %s18, %s25
    %p27 = scmp.eq.s32.totalorder %s26, 0
    %s29 = sadd.s32 %s28, 1
    %s30 = scalar_select %p27, %s28, %s29
    %p33 = pneg %p27
    %p34 = scmp.eq.s32.totalorder %s18, 1
    %p35 = por %p33, %p34
    %p36 = scmp.ne.s32.totalorder %s28, %s31
    %p37 = scmp.eq.s32.totalorder %s18, 0
    %p38 = por %p36, %p37
    %p39 = scmp.ne.s32.totalorder %s28, %s31
    %p40 = scmp.eq.s32.totalorder %s23, 1
    %p41 = por %p39, %p40
    %p42 = scmp.ne.s32.totalorder %s31, %s32
    %p43 = scmp.eq.s32.totalorder %s23, 0
    %p44 = por %p42, %p43
    %p45 = scmp.ne.s32.totalorder %s31, %s32
    %p46 = scmp.eq.s32.totalorder %s24, 1
    %p47 = por %p45, %p46
    %p49 = scmp.ne.s32.totalorder %s32, %s48
    %p50 = scmp.eq.s32.totalorder %s24, 0
    %p51 = por %p49, %p50
    %s53 = sadd.s32 %s52, 1
    %p56 = scmp.eq.s32.totalorder %s18, 1
    %p57 = scmp.ne.s32.totalorder %s52, %s54
    %p58 = scmp.eq.s32.totalorder %s18, 0
    %p59 = por %p57, %p58
    %p60 = scmp.ne.s32.totalorder %s52, %s54
    %p61 = scmp.eq.s32.totalorder %s23, 1
    %p62 = por %p60, %p61
    %p63 = scmp.ne.s32.totalorder %s54, %s55
    %p64 = scmp.eq.s32.totalorder %s23, 0
    %p65 = por %p63, %p64
    %p66 = scmp.ne.s32.totalorder %s54, %s55
    %p67 = scmp.eq.s32.totalorder %s24, 1
    %p68 = por %p66, %p67
    %p70 = scmp.ne.s32.totalorder %s55, %s69
    %p71 = scmp.eq.s32.totalorder %s24, 0
    %p72 = por %p70, %p71
    %s74 = sadd.s32 %s73, 1
    %p77 = scmp.eq.s32.totalorder %s18, 1
    %p78 = scmp.ne.s32.totalorder %s73, %s75
    %p79 = scmp.eq.s32.totalorder %s18, 0
    %p80 = por %p78, %p79
    %p81 = scmp.ne.s32.totalorder %s73, %s75
    %p82 = scmp.eq.s32.totalorder %s23, 1
    %p83 = por %p81, %p82
    %p84 = scmp.ne.s32.totalorder %s75, %s76
    %p85 = scmp.eq.s32.totalorder %s23, 0
    %p86 = por %p84, %p85
    %p87 = scmp.ne.s32.totalorder %s75, %s76
    %p88 = scmp.eq.s32.totalorder %s24, 1
    %p89 = por %p87, %p88
    %p91 = scmp.ne.s32.totalorder %s76, %s90
    %p92 = scmp.eq.s32.totalorder %s24, 0
    %p93 = por %p91, %p92
    %s95 = sadd.s32 %s94, 1
    %p98 = scmp.eq.s32.totalorder %s18, 1
    %p99 = scmp.ne.s32.totalorder %s94, %s96
    %p100 = scmp.eq.s32.totalorder %s18, 0
    %p101 = por %p99, %p100
    %p102 = scmp.ne.s32.totalorder %s94, %s96
    %p103 = scmp.eq.s32.totalorder %s23, 1
    %p104 = por %p102, %p103
    %p105 = scmp.ne.s32.totalorder %s96, %s97
    %p106 = scmp.eq.s32.totalorder %s23, 0
    %p107 = por %p105, %p106
    %p108 = scmp.ne.s32.totalorder %s96, %s97
    %p109 = scmp.eq.s32.totalorder %s24, 1
    %p110 = por %p108, %p109
    %p112 = scmp.ne.s32.totalorder %s97, %s111
    %p113 = scmp.eq.s32.totalorder %s24, 0
    %p114 = por %p112, %p113
    %s116 = sadd.s32 %s115, 1
    %p119 = scmp.eq.s32.totalorder %s18, 1
    %p120 = scmp.ne.s32.totalorder %s115, %s117
    %p121 = scmp.eq.s32.totalorder %s18, 0
    %p122 = por %p120, %p121
    %p123 = scmp.ne.s32.totalorder %s115, %s117
    %p124 = scmp.eq.s32.totalorder %s23, 1
    %p125 = por %p123, %p124
    %p126 = scmp.ne.s32.totalorder %s117, %s118
    %p127 = scmp.eq.s32.totalorder %s23, 0
    %p128 = por %p126, %p127
    %p129 = scmp.ne.s32.totalorder %s117, %s118
    %p130 = scmp.eq.s32.totalorder %s24, 1
    %p131 = por %p129, %p130
    %p133 = scmp.ne.s32.totalorder %s118, %s132
    %p134 = scmp.eq.s32.totalorder %s24, 0
    %p135 = por %p133, %p134
    %s137 = sadd.s32 %s136, 1
    %p140 = scmp.eq.s32.totalorder %s18, 1
    %p141 = scmp.ne.s32.totalorder %s136, %s138
    %p142 = scmp.eq.s32.totalorder %s18, 0
    %p143 = por %p141, %p142
    %p144 = scmp.ne.s32.totalorder %s136, %s138
    %p145 = scmp.eq.s32.totalorder %s23, 1
    %p146 = por %p144, %p145
    %p147 = scmp.ne.s32.totalorder %s138, %s139
    %p148 = scmp.eq.s32.totalorder %s23, 0
    %p149 = por %p147, %p148
    %p150 = scmp.ne.s32.totalorder %s138, %s139
    %p151 = scmp.eq.s32.totalorder %s24, 1
    %p152 = por %p150, %p151
    %p154 = scmp.ne.s32.totalorder %s139, %s153
    %p155 = scmp.eq.s32.totalorder %s24, 0
    %p156 = por %p154, %p155
    %s158 = sadd.s32 %s157, 1
    %p161 = scmp.eq.s32.totalorder %s18, 1
    %p162 = scmp.ne.s32.totalorder %s157, %s159
    %p163 = scmp.eq.s32.totalorder %s18, 0
    %p164 = por %p162, %p163
    %p165 = scmp.ne.s32.totalorder %s157, %s159
    %p166 = scmp.eq.s32.totalorder %s23, 1
    %p167 = por %p165, %p166
    %p168 = scmp.ne.s32.totalorder %s159, %s160
    %p169 = scmp.eq.s32.totalorder %s23, 0
    %p170 = por %p168, %p169
    %p171 = scmp.ne.s32.totalorder %s159, %s160
    %p172 = scmp.eq.s32.totalorder %s24, 1
    %p173 = por %p171, %p172
    %p175 = scmp.ne.s32.totalorder %s160, %s174
    %p176 = scmp.eq.s32.totalorder %s24, 0
    %p177 = por %p175, %p176
    %s179 = sadd.s32 %s178, 1
    %p182 = scmp.eq.s32.totalorder %s18, 1
    %p183 = scmp.ne.s32.totalorder %s178, %s180
    %p184 = scmp.eq.s32.totalorder %s18, 0
    %p185 = por %p183, %p184
    %p186 = scmp.ne.s32.totalorder %s178, %s180
    %p187 = scmp.eq.s32.totalorder %s23, 1
    %p188 = por %p186, %p187
    %p189 = scmp.ne.s32.totalorder %s180, %s181
    %p190 = scmp.eq.s32.totalorder %s23, 0
    %p191 = por %p189, %p190
    %p192 = scmp.ne.s32.totalorder %s180, %s181
    %p193 = scmp.eq.s32.totalorder %s24, 1
    %p194 = por %p192, %p193
    %p196 = scmp.ne.s32.totalorder %s181, %s195
    %p197 = scmp.eq.s32.totalorder %s24, 0
    %p198 = por %p196, %p197
    %s200 = sadd.s32 %s199, 1
    %p203 = scmp.eq.s32.totalorder %s18, 1
    %p204 = scmp.ne.s32.totalorder %s199, %s201
    %p205 = scmp.eq.s32.totalorder %s18, 0
    %p206 = por %p204, %p205
    %p207 = scmp.ne.s32.totalorder %s199, %s201
    %p208 = scmp.eq.s32.totalorder %s23, 1
    %p209 = por %p207, %p208
    %p210 = scmp.ne.s32.totalorder %s201, %s202
    %p211 = scmp.eq.s32.totalorder %s23, 0
    %p212 = por %p210, %p211
    %p213 = scmp.ne.s32.totalorder %s201, %s202
    %p214 = scmp.eq.s32.totalorder %s24, 1
    %p215 = por %p213, %p214
    %p217 = scmp.ne.s32.totalorder %s202, %s216
    %p218 = scmp.eq.s32.totalorder %s24, 0
    %p219 = por %p217, %p218
    %s221 = sadd.s32 %s220, 1
    %p224 = scmp.eq.s32.totalorder %s18, 1
    %p225 = scmp.ne.s32.totalorder %s220, %s222
    %p226 = scmp.eq.s32.totalorder %s18, 0
    %p227 = por %p225, %p226
    %p228 = scmp.ne.s32.totalorder %s220, %s222
    %p229 = scmp.eq.s32.totalorder %s23, 1
    %p230 = por %p228, %p229
    %p231 = scmp.ne.s32.totalorder %s222, %s223
    %p232 = scmp.eq.s32.totalorder %s23, 0
    %p233 = por %p231, %p232
    %p234 = scmp.ne.s32.totalorder %s222, %s223
    %p235 = scmp.eq.s32.totalorder %s24, 1
    %p236 = por %p234, %p235
    %p238 = scmp.ne.s32.totalorder %s223, %s237
    %p239 = scmp.eq.s32.totalorder %s24, 0
    %p240 = por %p238, %p239
    %s242 = sadd.s32 %s241, 1
    %p245 = scmp.eq.s32.totalorder %s18, 1
    %p246 = scmp.ne.s32.totalorder %s241, %s243
    %p247 = scmp.eq.s32.totalorder %s18, 0
    %p248 = por %p246, %p247
    %p249 = scmp.ne.s32.totalorder %s241, %s243
    %p250 = scmp.eq.s32.totalorder %s23, 1
    %p251 = por %p249, %p250
    %p252 = scmp.ne.s32.totalorder %s243, %s244
    %p253 = scmp.eq.s32.totalorder %s23, 0
    %p254 = por %p252, %p253
    %p255 = scmp.ne.s32.totalorder %s243, %s244
    %p256 = scmp.eq.s32.totalorder %s24, 1
    %p257 = por %p255, %p256
    %p259 = scmp.ne.s32.totalorder %s244, %s258
    %p260 = scmp.eq.s32.totalorder %s24, 0
    %p261 = por %p259, %p260
    %s262 = ssub.s32 %s18, %s25
    %p263 = scmp.eq.s32.totalorder %s262, 0
    %s265 = sadd.s32 %s264, 1
    %s266 = scalar_select %p263, %s264, %s265
    %p269 = pneg %p263
    %p270 = scmp.eq.s32.totalorder %s18, 1
    %p271 = por %p269, %p270
    %p272 = scmp.ne.s32.totalorder %s264, %s267
    %p273 = scmp.eq.s32.totalorder %s18, 0
    %p274 = por %p272, %p273
    %p275 = scmp.ne.s32.totalorder %s264, %s267
    %p276 = scmp.eq.s32.totalorder %s23, 1
    %p277 = por %p275, %p276
    %p278 = scmp.ne.s32.totalorder %s267, %s268
    %p279 = scmp.eq.s32.totalorder %s23, 0
    %p280 = por %p278, %p279
    %p281 = scmp.ne.s32.totalorder %s267, %s268
    %p282 = scmp.eq.s32.totalorder %s24, 1
    %p283 = por %p281, %p282
    %p285 = scmp.ne.s32.totalorder %s268, %s284
    %p286 = scmp.eq.s32.totalorder %s24, 0
    %p287 = por %p285, %p286
    %s288 = ssub.s32 %s18, %s25
    %p289 = scmp.eq.s32.totalorder %s288, 0
    %s291 = sadd.s32 %s290, 1
    %s292 = scalar_select %p289, %s290, %s291
    %p295 = pneg %p289
    %p296 = scmp.eq.s32.totalorder %s18, 1
    %p297 = por %p295, %p296
    %p298 = scmp.ne.s32.totalorder %s290, %s293
    %p299 = scmp.eq.s32.totalorder %s18, 0
    %p300 = por %p298, %p299
    %p301 = scmp.ne.s32.totalorder %s290, %s293
    %p302 = scmp.eq.s32.totalorder %s23, 1
    %p303 = por %p301, %p302
    %p304 = scmp.ne.s32.totalorder %s293, %s294
    %p305 = scmp.eq.s32.totalorder %s23, 0
    %p306 = por %p304, %p305
    %p307 = scmp.ne.s32.totalorder %s293, %s294
    %p308 = scmp.eq.s32.totalorder %s24, 1
    %p309 = por %p307, %p308
    %p311 = scmp.ne.s32.totalorder %s294, %s310
    %p312 = scmp.eq.s32.totalorder %s24, 0
    %p313 = por %p311, %p312
    %p314 = scmp.le.s32.totalorder 1, %s18
    %p315 = scmp.lt.s32.totalorder %s18, 3
    %p316 = pnand %p314, %p315
    %p317 = pneg %p316
    // Predicated region
    $region9: #{mobilenet_v3_forward.6} parent=5 // pred_check
      _
    $region10: #{mobilenet_v3_forward.6} parent=5 // pred_check_branch
      %319 = sbr.rel (%p316) target = $region12
    $region11: #{mobilenet_v3_forward.6} parent=5 // pred_region
      %s320 = ssub.s32 %s18, 1
      // Predicated region
      $region13: #{mobilenet_v3_forward.6} parent=11 // pred_check
        %p321 = pneg %p65
      $region14: #{mobilenet_v3_forward.6} parent=11 // pred_check_branch
        %323 = sbr.rel (%p321) target = $region16
      $region15: #{mobilenet_v3_forward.6} parent=11 // pred_region
        _
      $region16: #{mobilenet_v3_forward.6} parent=11 // pred_fallthru
        _
      // Predicated region
      $region17: #{mobilenet_v3_forward.6} parent=11 // pred_check
        %p324 = pneg %p86
      $region18: #{mobilenet_v3_forward.6} parent=11 // pred_check_branch
        %326 = sbr.rel (%p324) target = $region20
      $region19: #{mobilenet_v3_forward.6} parent=11 // pred_region
        _
      $region20: #{mobilenet_v3_forward.6} parent=11 // pred_fallthru
        _
      // Predicated region
      $region21: #{mobilenet_v3_forward.6} parent=11 // pred_check
        %p327 = pneg %p107
      $region22: #{mobilenet_v3_forward.6} parent=11 // pred_check_branch
        %329 = sbr.rel (%p327) target = $region24
      $region23: #{mobilenet_v3_forward.6} parent=11 // pred_region
        _
      $region24: #{mobilenet_v3_forward.6} parent=11 // pred_fallthru
        _
      // Predicated region
      $region25: #{mobilenet_v3_forward.6} parent=11 // pred_check
        %p330 = pneg %p128
      $region26: #{mobilenet_v3_forward.6} parent=11 // pred_check_branch
        %332 = sbr.rel (%p330) target = $region28
      $region27: #{mobilenet_v3_forward.6} parent=11 // pred_region
        _
      $region28: #{mobilenet_v3_forward.6} parent=11 // pred_fallthru
        _
      // Predicated region
      $region29: #{mobilenet_v3_forward.6} parent=11 // pred_check
        %p333 = pneg %p149
      $region30: #{mobilenet_v3_forward.6} parent=11 // pred_check_branch
        %335 = sbr.rel (%p333) target = $region32
      $region31: #{mobilenet_v3_forward.6} parent=11 // pred_region
        _
      $region32: #{mobilenet_v3_forward.6} parent=11 // pred_fallthru
        _
      // Predicated region
      $region33: #{mobilenet_v3_forward.6} parent=11 // pred_check
        %p336 = pneg %p170
      $region34: #{mobilenet_v3_forward.6} parent=11 // pred_check_branch
        %338 = sbr.rel (%p336) target = $region36
      $region35: #{mobilenet_v3_forward.6} parent=11 // pred_region
        _
      $region36: #{mobilenet_v3_forward.6} parent=11 // pred_fallthru
        _
      // Predicated region
      $region37: #{mobilenet_v3_forward.6} parent=11 // pred_check
        %p339 = pneg %p191
      $region38: #{mobilenet_v3_forward.6} parent=11 // pred_check_branch
        %341 = sbr.rel (%p339) target = $region40
      $region39: #{mobilenet_v3_forward.6} parent=11 // pred_region
        _
      $region40: #{mobilenet_v3_forward.6} parent=11 // pred_fallthru
        _
      // Predicated region
      $region41: #{mobilenet_v3_forward.6} parent=11 // pred_check
        %p342 = pneg %p212
      $region42: #{mobilenet_v3_forward.6} parent=11 // pred_check_branch
        %344 = sbr.rel (%p342) target = $region44
      $region43: #{mobilenet_v3_forward.6} parent=11 // pred_region
        _
      $region44: #{mobilenet_v3_forward.6} parent=11 // pred_fallthru
        _
      // Predicated region
      $region45: #{mobilenet_v3_forward.6} parent=11 // pred_check
        %p345 = pneg %p233
      $region46: #{mobilenet_v3_forward.6} parent=11 // pred_check_branch
        %347 = sbr.rel (%p345) target = $region48
      $region47: #{mobilenet_v3_forward.6} parent=11 // pred_region
        _
      $region48: #{mobilenet_v3_forward.6} parent=11 // pred_fallthru
        _
      // Predicated region
      $region49: #{mobilenet_v3_forward.6} parent=11 // pred_check
        %p348 = pneg %p254
      $region50: #{mobilenet_v3_forward.6} parent=11 // pred_check_branch
        %350 = sbr.rel (%p348) target = $region52
      $region51: #{mobilenet_v3_forward.6} parent=11 // pred_region
        _
      $region52: #{mobilenet_v3_forward.6} parent=11 // pred_fallthru
        _
    $region12: #{mobilenet_v3_forward.6} parent=5 // pred_fallthru
      _
    %p351 = scmp.lt.s32.totalorder %s18, 2
    // Predicated region
    $region53: #{mobilenet_v3_forward.6} parent=5 // pred_check
      %p352 = pneg %p351
    $region54: #{mobilenet_v3_forward.6} parent=5 // pred_check_branch
      %354 = sbr.rel (%p352) target = $region56
    $region55: #{mobilenet_v3_forward.6} parent=5 // pred_region
      // Predicated region
      $region57: #{mobilenet_v3_forward.6} parent=55 // pred_check
        %p355 = pneg %p38
      $region58: #{mobilenet_v3_forward.6} parent=55 // pred_check_branch
        %357 = sbr.rel (%p355) target = $region60
      $region59: #{mobilenet_v3_forward.6} parent=55 // pred_region
        %p358 = scmp.lt.s32.totalorder %s18, 1
        %s359 = scalar_select %p358, %s18, 1
        %s360 = smul.addr %s359, 20
        %s361 = smul.addr %s360, 4
        %s362 = scalar_lea.vmem %s0, %s361
      $region60: #{mobilenet_v3_forward.6} parent=55 // pred_fallthru
        _
      // Predicated region
      $region61: #{mobilenet_v3_forward.6} parent=55 // pred_check
        %p363 = pneg %p274
      $region62: #{mobilenet_v3_forward.6} parent=55 // pred_check_branch
        %365 = sbr.rel (%p363) target = $region64
      $region63: #{mobilenet_v3_forward.6} parent=55 // pred_region
        %p366 = scmp.lt.s32.totalorder %s18, 1
        %s367 = scalar_select %p366, %s18, 1
        %s368 = smul.addr %s367, 8
        %s369 = smul.addr %s368, 4
        %s370 = scalar_lea.vmem %s11, %s369
      $region64: #{mobilenet_v3_forward.6} parent=55 // pred_fallthru
        _
    $region56: #{mobilenet_v3_forward.6} parent=5 // pred_fallthru
      _
    %p371 = scmp.le.s32.totalorder 1, %s18
    %p372 = scmp.lt.s32.totalorder %s18, 3
    %p373 = pnand %p371, %p372
    %p374 = pneg %p373
    // Predicated region
    $region65: #{mobilenet_v3_forward.6} parent=5 // pred_check
      _
    $region66: #{mobilenet_v3_forward.6} parent=5 // pred_check_branch
      %376 = sbr.rel (%p373) target = $region68
    $region67: #{mobilenet_v3_forward.6} parent=5 // pred_region
      %s377 = ssub.s32 %s18, 1
      %p378 = scmp.lt.s32.totalorder %s23, 1
      %s379 = scalar_select %p378, %s23, 1
      %s380 = smul.addr %s379, 20
      %s381 = smul.addr %s380, 4
      %s382 = scalar_lea.vmem %s0, %s381
      %p383 = pneg %p44
      %p384 = pneg %p41
      %p385 = pneg %p65
      %p386 = pneg %p62
      %p387 = pneg %p86
      %p388 = pneg %p83
      %p389 = pneg %p107
      %p390 = pneg %p104
      %p391 = pneg %p128
      %p392 = pneg %p125
      %p393 = pneg %p149
      %p394 = pneg %p146
      %p395 = pneg %p170
      %p396 = pneg %p167
      %p397 = pneg %p191
      %p398 = pneg %p188
      %p399 = pneg %p212
      %p400 = pneg %p209
      %p401 = pneg %p233
      %p402 = pneg %p230
      %p403 = pneg %p254
      %p404 = pneg %p251
      %p405 = scmp.lt.s32.totalorder %s23, 1
      %s406 = scalar_select %p405, %s23, 1
      %s407 = smul.addr %s406, 8
      %s408 = smul.addr %s407, 4
      %s409 = scalar_lea.vmem %s11, %s408
      %p410 = pneg %p280
      %p411 = pneg %p277
      %p412 = pneg %p306
      %p413 = pneg %p303
      %p414 = scmp.lt.s32.totalorder %s23, 1
      %s415 = scalar_select %p414, %s23, 1
      %s416 = smul.addr %s415, 8
      %s417 = smul.addr %s416, 4
      %s418 = scalar_lea.vmem %s12, %s417
      %p419 = scmp.lt.s32.totalorder %s23, 1
      %s420 = scalar_select %p419, %s23, 1
      %s421 = smul.addr %s420, 20
      %s422 = smul.addr %s421, 4
      %s423 = scalar_lea.vmem %s0, %s422
      %p424 = scmp.lt.s32.totalorder %s23, 1
      %s425 = scalar_select %p424, %s23, 1
      %s426 = smul.addr %s425, 8
      %s427 = smul.addr %s426, 4
      %s428 = scalar_lea.vmem %s11, %s427
      %p429 = scmp.lt.s32.totalorder %s23, 1
      %s430 = scalar_select %p429, %s23, 1
      %s431 = smul.addr %s430, 8
      %s432 = smul.addr %s431, 4
      %s433 = scalar_lea.vmem %s12, %s432
      %v434 = vld [vmem:[%s1] sm:$0xf]
      %v435 = vld [vmem:[%s1 + $0x4] sm:$0x1]
      %v436 = vunpack.c.l.bf16 %v434
      %v437 = vunpack.c.l.bf16 %v435
      %v438 = vld [vmem:[%s423] sm:$0xf]
      %v439 = vld [vmem:[%s423 + $0x8] sm:$0xf]
      %v440 = vld [vmem:[%s423 + $0x10] sm:$0xf]
      %v441 = vld [vmem:[%s423 + $0x18] sm:$0xf]
      %v442 = vld [vmem:[%s423 + $0x20] sm:$0xf]
      %v443 = vld [vmem:[%s423 + $0x28] sm:$0xf]
      %v444 = vld [vmem:[%s423 + $0x30] sm:$0xf]
      %v445 = vld [vmem:[%s423 + $0x38] sm:$0xf]
      %v446 = vunpack.c.l.bf16 %v438
      %v447 = vunpack.c.l.bf16 %v439
      %v448 = vunpack.c.l.bf16 %v440
      %v449 = vunpack.c.l.bf16 %v441
      %v450 = vunpack.c.l.bf16 %v442
      %v451 = vunpack.c.l.bf16 %v443
      %v452 = vunpack.c.l.bf16 %v444
      %v453 = vunpack.c.l.bf16 %v445
      %v454 = vlaneseq
      %v455 = vshrl.u32 %v454, 7
      %v456 = vsub.s32 0, %v455
      %v457 = vrot.slane %v436, %v456
      %v458 = vmul.f32 %v446, %v457
      %v459 = vmul.f32 %v447, %v457
      %v460 = vmul.f32 %v448, %v457
      %v461 = vmul.f32 %v449, %v457
      %v462 = vmul.f32 %v450, %v457
      %v463 = vmul.f32 %v451, %v457
      %v464 = vmul.f32 %v452, %v457
      %v465 = vmul.f32 %v453, %v457
      %v466 = vld [vmem:[%s423 + $0x4] sm:$0x1]
      %v467 = vld [vmem:[%s423 + $0xc] sm:$0x1]
      %v468 = vld [vmem:[%s423 + $0x14] sm:$0x1]
      %v469 = vld [vmem:[%s423 + $0x1c] sm:$0x1]
      %v470 = vld [vmem:[%s423 + $0x24] sm:$0x1]
      %v471 = vld [vmem:[%s423 + $0x2c] sm:$0x1]
      %v472 = vld [vmem:[%s423 + $0x34] sm:$0x1]
      %v473 = vld [vmem:[%s423 + $0x3c] sm:$0x1]
      %v474 = vunpack.c.l.bf16 %v466
      %v475 = vunpack.c.l.bf16 %v467
      %v476 = vunpack.c.l.bf16 %v468
      %v477 = vunpack.c.l.bf16 %v469
      %v478 = vunpack.c.l.bf16 %v470
      %v479 = vunpack.c.l.bf16 %v471
      %v480 = vunpack.c.l.bf16 %v472
      %v481 = vunpack.c.l.bf16 %v473
      %v482 = vlaneseq
      %v483 = vshrl.u32 %v482, 7
      %v484 = vsub.s32 1, %v483
      %v485 = vrot.slane %v436, %v484
      %v486 = vmul.f32 %v446, %v485
      %v487 = vmul.f32 %v474, %v485
      %v488 = vmul.f32 %v447, %v485
      %v489 = vmul.f32 %v475, %v485
      %v490 = vmul.f32 %v448, %v485
      %v491 = vmul.f32 %v476, %v485
      %v492 = vmul.f32 %v449, %v485
      %v493 = vmul.f32 %v477, %v485
      %v494 = vmul.f32 %v450, %v485
      %v495 = vmul.f32 %v478, %v485
      %v496 = vmul.f32 %v451, %v485
      %v497 = vmul.f32 %v479, %v485
      %v498 = vmul.f32 %v452, %v485
      %v499 = vmul.f32 %v480, %v485
      %v500 = vmul.f32 %v453, %v485
      %v501 = vmul.f32 %v481, %v485
      %vm518 = vcmask 1046528
      %v519 = vrot.slane %v486, 1
      %v520 = vrot.slane %v487, 1
      %v521 = vsel %vm518, %v519, %v520
      %v522 = vrot.slane %v488, 1
      %v523 = vrot.slane %v489, 1
      %v524 = vsel %vm518, %v522, %v523
      %v525 = vrot.slane %v490, 1
      %v526 = vrot.slane %v491, 1
      %v527 = vsel %vm518, %v525, %v526
      %v528 = vrot.slane %v492, 1
      %v529 = vrot.slane %v493, 1
      %v530 = vsel %vm518, %v528, %v529
      %v531 = vrot.slane %v494, 1
      %v532 = vrot.slane %v495, 1
      %v533 = vsel %vm518, %v531, %v532
      %v534 = vrot.slane %v496, 1
      %v535 = vrot.slane %v497, 1
      %v536 = vsel %vm518, %v534, %v535
      %v537 = vrot.slane %v498, 1
      %v538 = vrot.slane %v499, 1
      %v539 = vsel %vm518, %v537, %v538
      %v540 = vrot.slane %v500, 1
      %v541 = vrot.slane %v501, 1
      %v542 = vsel %vm518, %v540, %v541
      %v551 = vadd.f32 %v458, %v521
      %v552 = vadd.f32 %v459, %v524
      %v553 = vadd.f32 %v460, %v527
      %v554 = vadd.f32 %v461, %v530
      %v555 = vadd.f32 %v462, %v533
      %v556 = vadd.f32 %v463, %v536
      %v557 = vadd.f32 %v464, %v539
      %v558 = vadd.f32 %v465, %v542
      %v559 = vld [vmem:[%s423] sm:$0xe]
      %v560 = vld [vmem:[%s423 + $0x8] sm:$0xe]
      %v561 = vld [vmem:[%s423 + $0x10] sm:$0xe]
      %v562 = vld [vmem:[%s423 + $0x18] sm:$0xe]
      %v563 = vld [vmem:[%s423 + $0x20] sm:$0xe]
      %v564 = vld [vmem:[%s423 + $0x28] sm:$0xe]
      %v565 = vld [vmem:[%s423 + $0x30] sm:$0xe]
      %v566 = vld [vmem:[%s423 + $0x38] sm:$0xe]
      %v567 = vunpack.c.l.bf16 %v559
      %v568 = vunpack.c.l.bf16 %v560
      %v569 = vunpack.c.l.bf16 %v561
      %v570 = vunpack.c.l.bf16 %v562
      %v571 = vunpack.c.l.bf16 %v563
      %v572 = vunpack.c.l.bf16 %v564
      %v573 = vunpack.c.l.bf16 %v565
      %v574 = vunpack.c.l.bf16 %v566
      %v575 = vlaneseq
      %v576 = vshrl.u32 %v575, 7
      %v577 = vsub.s32 2, %v576
      %v578 = vrot.slane %v436, %v577
      %v579 = vmul.f32 %v567, %v578
      %v580 = vmul.f32 %v474, %v578
      %v581 = vmul.f32 %v568, %v578
      %v582 = vmul.f32 %v475, %v578
      %v583 = vmul.f32 %v569, %v578
      %v584 = vmul.f32 %v476, %v578
      %v585 = vmul.f32 %v570, %v578
      %v586 = vmul.f32 %v477, %v578
      %v587 = vmul.f32 %v571, %v578
      %v588 = vmul.f32 %v478, %v578
      %v589 = vmul.f32 %v572, %v578
      %v590 = vmul.f32 %v479, %v578
      %v591 = vmul.f32 %v573, %v578
      %v592 = vmul.f32 %v480, %v578
      %v593 = vmul.f32 %v574, %v578
      %v594 = vmul.f32 %v481, %v578
      %vm611 = vcmask 1045504
      %v612 = vrot.slane %v579, 2
      %v613 = vrot.slane %v580, 2
      %v614 = vsel %vm611, %v612, %v613
      %v615 = vrot.slane %v581, 2
      %v616 = vrot.slane %v582, 2
      %v617 = vsel %vm611, %v615, %v616
      %v618 = vrot.slane %v583, 2
      %v619 = vrot.slane %v584, 2
      %v620 = vsel %vm611, %v618, %v619
      %v621 = vrot.slane %v585, 2
      %v622 = vrot.slane %v586, 2
      %v623 = vsel %vm611, %v621, %v622
      %v624 = vrot.slane %v587, 2
      %v625 = vrot.slane %v588, 2
      %v626 = vsel %vm611, %v624, %v625
      %v627 = vrot.slane %v589, 2
      %v628 = vrot.slane %v590, 2
      %v629 = vsel %vm611, %v627, %v628
      %v630 = vrot.slane %v591, 2
      %v631 = vrot.slane %v592, 2
      %v632 = vsel %vm611, %v630, %v631
      %v633 = vrot.slane %v593, 2
      %v634 = vrot.slane %v594, 2
      %v635 = vsel %vm611, %v633, %v634
      %v644 = vadd.f32 %v551, %v614
      %v645 = vadd.f32 %v552, %v617
      %v646 = vadd.f32 %v553, %v620
      %v647 = vadd.f32 %v554, %v623
      %v648 = vadd.f32 %v555, %v626
      %v649 = vadd.f32 %v556, %v629
      %v650 = vadd.f32 %v557, %v632
      %v651 = vadd.f32 %v558, %v635
      %s652 = scalar_lea.vmem %s423, 8
      %v653 = vld [vmem:[%s652] sm:$0xf]
      %v654 = vld [vmem:[%s652 + $0x8] sm:$0xf]
      %v655 = vld [vmem:[%s652 + $0x10] sm:$0xf]
      %v656 = vld [vmem:[%s652 + $0x18] sm:$0xf]
      %v657 = vld [vmem:[%s652 + $0x20] sm:$0xf]
      %v658 = vld [vmem:[%s652 + $0x28] sm:$0xf]
      %v659 = vld [vmem:[%s652 + $0x30] sm:$0xf]
      %v660 = vld [vmem:[%s652 + $0x38] sm:$0xf]
      %v661 = vunpack.c.l.bf16 %v653
      %v662 = vunpack.c.l.bf16 %v654
      %v663 = vunpack.c.l.bf16 %v655
      %v664 = vunpack.c.l.bf16 %v656
      %v665 = vunpack.c.l.bf16 %v657
      %v666 = vunpack.c.l.bf16 %v658
      %v667 = vunpack.c.l.bf16 %v659
      %v668 = vunpack.c.l.bf16 %v660
      %v669 = vlaneseq
      %v670 = vshrl.u32 %v669, 7
      %v671 = vsub.s32 3, %v670
      %v672 = vrot.slane %v436, %v671
      %v673 = vmul.f32 %v661, %v672
      %v674 = vmul.f32 %v662, %v672
      %v675 = vmul.f32 %v663, %v672
      %v676 = vmul.f32 %v664, %v672
      %v677 = vmul.f32 %v665, %v672
      %v678 = vmul.f32 %v666, %v672
      %v679 = vmul.f32 %v667, %v672
      %v680 = vmul.f32 %v668, %v672
      %v681 = vadd.f32 %v644, %v673
      %v682 = vadd.f32 %v645, %v674
      %v683 = vadd.f32 %v646, %v675
      %v684 = vadd.f32 %v647, %v676
      %v685 = vadd.f32 %v648, %v677
      %v686 = vadd.f32 %v649, %v678
      %v687 = vadd.f32 %v650, %v679
      %v688 = vadd.f32 %v651, %v680
      %v689 = vld [vmem:[%s652 + $0x4] sm:$0x1]
      %v690 = vld [vmem:[%s652 + $0xc] sm:$0x1]
      %v691 = vld [vmem:[%s652 + $0x14] sm:$0x1]
      %v692 = vld [vmem:[%s652 + $0x1c] sm:$0x1]
      %v693 = vld [vmem:[%s652 + $0x24] sm:$0x1]
      %v694 = vld [vmem:[%s652 + $0x2c] sm:$0x1]
      %v695 = vld [vmem:[%s652 + $0x34] sm:$0x1]
      %v696 = vld [vmem:[%s652 + $0x3c] sm:$0x1]
      %v697 = vunpack.c.l.bf16 %v689
      %v698 = vunpack.c.l.bf16 %v690
      %v699 = vunpack.c.l.bf16 %v691
      %v700 = vunpack.c.l.bf16 %v692
      %v701 = vunpack.c.l.bf16 %v693
      %v702 = vunpack.c.l.bf16 %v694
      %v703 = vunpack.c.l.bf16 %v695
      %v704 = vunpack.c.l.bf16 %v696
      %v705 = vlaneseq
      %v706 = vshrl.u32 %v705, 7
      %v707 = vsub.s32 4, %v706
      %v708 = vrot.slane %v436, %v707
      %v709 = vmul.f32 %v661, %v708
      %v710 = vmul.f32 %v697, %v708
      %v711 = vmul.f32 %v662, %v708
      %v712 = vmul.f32 %v698, %v708
      %v713 = vmul.f32 %v663, %v708
      %v714 = vmul.f32 %v699, %v708
      %v715 = vmul.f32 %v664, %v708
      %v716 = vmul.f32 %v700, %v708
      %v717 = vmul.f32 %v665, %v708
      %v718 = vmul.f32 %v701, %v708
      %v719 = vmul.f32 %v666, %v708
      %v720 = vmul.f32 %v702, %v708
      %v721 = vmul.f32 %v667, %v708
      %v722 = vmul.f32 %v703, %v708
      %v723 = vmul.f32 %v668, %v708
      %v724 = vmul.f32 %v704, %v708
      %v741 = vrot.slane %v709, 1
      %v742 = vrot.slane %v710, 1
      %v743 = vsel %vm518, %v741, %v742
      %v744 = vrot.slane %v711, 1
      %v745 = vrot.slane %v712, 1
      %v746 = vsel %vm518, %v744, %v745
      %v747 = vrot.slane %v713, 1
      %v748 = vrot.slane %v714, 1
      %v749 = vsel %vm518, %v747, %v748
      %v750 = vrot.slane %v715, 1
      %v751 = vrot.slane %v716, 1
      %v752 = vsel %vm518, %v750, %v751
      %v753 = vrot.slane %v717, 1
      %v754 = vrot.slane %v718, 1
      %v755 = vsel %vm518, %v753, %v754
      %v756 = vrot.slane %v719, 1
      %v757 = vrot.slane %v720, 1
      %v758 = vsel %vm518, %v756, %v757
      %v759 = vrot.slane %v721, 1
      %v760 = vrot.slane %v722, 1
      %v761 = vsel %vm518, %v759, %v760
      %v762 = vrot.slane %v723, 1
      %v763 = vrot.slane %v724, 1
      %v764 = vsel %vm518, %v762, %v763
      %v773 = vadd.f32 %v681, %v743
      %v774 = vadd.f32 %v682, %v746
      %v775 = vadd.f32 %v683, %v749
      %v776 = vadd.f32 %v684, %v752
      %v777 = vadd.f32 %v685, %v755
      %v778 = vadd.f32 %v686, %v758
      %v779 = vadd.f32 %v687, %v761
      %v780 = vadd.f32 %v688, %v764
      %v781 = vld [vmem:[%s652] sm:$0xe]
      %v782 = vld [vmem:[%s652 + $0x8] sm:$0xe]
      %v783 = vld [vmem:[%s652 + $0x10] sm:$0xe]
      %v784 = vld [vmem:[%s652 + $0x18] sm:$0xe]
      %v785 = vld [vmem:[%s652 + $0x20] sm:$0xe]
      %v786 = vld [vmem:[%s652 + $0x28] sm:$0xe]
      %v787 = vld [vmem:[%s652 + $0x30] sm:$0xe]
      %v788 = vld [vmem:[%s652 + $0x38] sm:$0xe]
      %v789 = vunpack.c.l.bf16 %v781
      %v790 = vunpack.c.l.bf16 %v782
      %v791 = vunpack.c.l.bf16 %v783
      %v792 = vunpack.c.l.bf16 %v784
      %v793 = vunpack.c.l.bf16 %v785
      %v794 = vunpack.c.l.bf16 %v786
      %v795 = vunpack.c.l.bf16 %v787
      %v796 = vunpack.c.l.bf16 %v788
      %v797 = vlaneseq
      %v798 = vshrl.u32 %v797, 7
      %v799 = vsub.s32 5, %v798
      %v800 = vrot.slane %v436, %v799
      %v801 = vmul.f32 %v789, %v800
      %v802 = vmul.f32 %v697, %v800
      %v803 = vmul.f32 %v790, %v800
      %v804 = vmul.f32 %v698, %v800
      %v805 = vmul.f32 %v791, %v800
      %v806 = vmul.f32 %v699, %v800
      %v807 = vmul.f32 %v792, %v800
      %v808 = vmul.f32 %v700, %v800
      %v809 = vmul.f32 %v793, %v800
      %v810 = vmul.f32 %v701, %v800
      %v811 = vmul.f32 %v794, %v800
      %v812 = vmul.f32 %v702, %v800
      %v813 = vmul.f32 %v795, %v800
      %v814 = vmul.f32 %v703, %v800
      %v815 = vmul.f32 %v796, %v800
      %v816 = vmul.f32 %v704, %v800
      %v833 = vrot.slane %v801, 2
      %v834 = vrot.slane %v802, 2
      %v835 = vsel %vm611, %v833, %v834
      %v836 = vrot.slane %v803, 2
      %v837 = vrot.slane %v804, 2
      %v838 = vsel %vm611, %v836, %v837
      %v839 = vrot.slane %v805, 2
      %v840 = vrot.slane %v806, 2
      %v841 = vsel %vm611, %v839, %v840
      %v842 = vrot.slane %v807, 2
      %v843 = vrot.slane %v808, 2
      %v844 = vsel %vm611, %v842, %v843
      %v845 = vrot.slane %v809, 2
      %v846 = vrot.slane %v810, 2
      %v847 = vsel %vm611, %v845, %v846
      %v848 = vrot.slane %v811, 2
      %v849 = vrot.slane %v812, 2
      %v850 = vsel %vm611, %v848, %v849
      %v851 = vrot.slane %v813, 2
      %v852 = vrot.slane %v814, 2
      %v853 = vsel %vm611, %v851, %v852
      %v854 = vrot.slane %v815, 2
      %v855 = vrot.slane %v816, 2
      %v856 = vsel %vm611, %v854, %v855
      %v865 = vadd.f32 %v773, %v835
      %v866 = vadd.f32 %v774, %v838
      %v867 = vadd.f32 %v775, %v841
      %v868 = vadd.f32 %v776, %v844
      %v869 = vadd.f32 %v777, %v847
      %v870 = vadd.f32 %v778, %v850
      %v871 = vadd.f32 %v779, %v853
      %v872 = vadd.f32 %v780, %v856
      %s873 = scalar_lea.vmem %s423, 16
      %v874 = vld [vmem:[%s873] sm:$0xf]
      %v875 = vld [vmem:[%s873 + $0x8] sm:$0xf]
      %v876 = vld [vmem:[%s873 + $0x10] sm:$0xf]
      %v877 = vld [vmem:[%s873 + $0x18] sm:$0xf]
      %v878 = vld [vmem:[%s873 + $0x20] sm:$0xf]
      %v879 = vld [vmem:[%s873 + $0x28] sm:$0xf]
      %v880 = vld [vmem:[%s873 + $0x30] sm:$0xf]
      %v881 = vld [vmem:[%s873 + $0x38] sm:$0xf]
      %v882 = vunpack.c.l.bf16 %v874
      %v883 = vunpack.c.l.bf16 %v875
      %v884 = vunpack.c.l.bf16 %v876
      %v885 = vunpack.c.l.bf16 %v877
      %v886 = vunpack.c.l.bf16 %v878
      %v887 = vunpack.c.l.bf16 %v879
      %v888 = vunpack.c.l.bf16 %v880
      %v889 = vunpack.c.l.bf16 %v881
      %v890 = vlaneseq
      %v891 = vshrl.u32 %v890, 7
      %v892 = vsub.s32 6, %v891
      %v893 = vrot.slane %v436, %v892
      %v894 = vmul.f32 %v882, %v893
      %v895 = vmul.f32 %v883, %v893
      %v896 = vmul.f32 %v884, %v893
      %v897 = vmul.f32 %v885, %v893
      %v898 = vmul.f32 %v886, %v893
      %v899 = vmul.f32 %v887, %v893
      %v900 = vmul.f32 %v888, %v893
      %v901 = vmul.f32 %v889, %v893
      %v902 = vadd.f32 %v865, %v894
      %v903 = vadd.f32 %v866, %v895
      %v904 = vadd.f32 %v867, %v896
      %v905 = vadd.f32 %v868, %v897
      %v906 = vadd.f32 %v869, %v898
      %v907 = vadd.f32 %v870, %v899
      %v908 = vadd.f32 %v871, %v900
      %v909 = vadd.f32 %v872, %v901
      %v910 = vld [vmem:[%s873 + $0x4] sm:$0x1]
      %v911 = vld [vmem:[%s873 + $0xc] sm:$0x1]
      %v912 = vld [vmem:[%s873 + $0x14] sm:$0x1]
      %v913 = vld [vmem:[%s873 + $0x1c] sm:$0x1]
      %v914 = vld [vmem:[%s873 + $0x24] sm:$0x1]
      %v915 = vld [vmem:[%s873 + $0x2c] sm:$0x1]
      %v916 = vld [vmem:[%s873 + $0x34] sm:$0x1]
      %v917 = vld [vmem:[%s873 + $0x3c] sm:$0x1]
      %v918 = vunpack.c.l.bf16 %v910
      %v919 = vunpack.c.l.bf16 %v911
      %v920 = vunpack.c.l.bf16 %v912
      %v921 = vunpack.c.l.bf16 %v913
      %v922 = vunpack.c.l.bf16 %v914
      %v923 = vunpack.c.l.bf16 %v915
      %v924 = vunpack.c.l.bf16 %v916
      %v925 = vunpack.c.l.bf16 %v917
      %v926 = vlaneseq
      %v927 = vshrl.u32 %v926, 7
      %v928 = vsub.s32 7, %v927
      %v929 = vrot.slane %v436, %v928
      %v930 = vmul.f32 %v882, %v929
      %v931 = vmul.f32 %v918, %v929
      %v932 = vmul.f32 %v883, %v929
      %v933 = vmul.f32 %v919, %v929
      %v934 = vmul.f32 %v884, %v929
      %v935 = vmul.f32 %v920, %v929
      %v936 = vmul.f32 %v885, %v929
      %v937 = vmul.f32 %v921, %v929
      %v938 = vmul.f32 %v886, %v929
      %v939 = vmul.f32 %v922, %v929
      %v940 = vmul.f32 %v887, %v929
      %v941 = vmul.f32 %v923, %v929
      %v942 = vmul.f32 %v888, %v929
      %v943 = vmul.f32 %v924, %v929
      %v944 = vmul.f32 %v889, %v929
      %v945 = vmul.f32 %v925, %v929
      %v962 = vrot.slane %v930, 1
      %v963 = vrot.slane %v931, 1
      %v964 = vsel %vm518, %v962, %v963
      %v965 = vrot.slane %v932, 1
      %v966 = vrot.slane %v933, 1
      %v967 = vsel %vm518, %v965, %v966
      %v968 = vrot.slane %v934, 1
      %v969 = vrot.slane %v935, 1
      %v970 = vsel %vm518, %v968, %v969
      %v971 = vrot.slane %v936, 1
      %v972 = vrot.slane %v937, 1
      %v973 = vsel %vm518, %v971, %v972
      %v974 = vrot.slane %v938, 1
      %v975 = vrot.slane %v939, 1
      %v976 = vsel %vm518, %v974, %v975
      %v977 = vrot.slane %v940, 1
      %v978 = vrot.slane %v941, 1
      %v979 = vsel %vm518, %v977, %v978
      %v980 = vrot.slane %v942, 1
      %v981 = vrot.slane %v943, 1
      %v982 = vsel %vm518, %v980, %v981
      %v983 = vrot.slane %v944, 1
      %v984 = vrot.slane %v945, 1
      %v985 = vsel %vm518, %v983, %v984
      %v994 = vadd.f32 %v902, %v964
      %v995 = vadd.f32 %v903, %v967
      %v996 = vadd.f32 %v904, %v970
      %v997 = vadd.f32 %v905, %v973
      %v998 = vadd.f32 %v906, %v976
      %v999 = vadd.f32 %v907, %v979
      %v1000 = vadd.f32 %v908, %v982
      %v1001 = vadd.f32 %v909, %v985
      %v1002 = vld [vmem:[%s873] sm:$0xe]
      %v1003 = vld [vmem:[%s873 + $0x8] sm:$0xe]
      %v1004 = vld [vmem:[%s873 + $0x10] sm:$0xe]
      %v1005 = vld [vmem:[%s873 + $0x18] sm:$0xe]
      %v1006 = vld [vmem:[%s873 + $0x20] sm:$0xe]
      %v1007 = vld [vmem:[%s873 + $0x28] sm:$0xe]
      %v1008 = vld [vmem:[%s873 + $0x30] sm:$0xe]
      %v1009 = vld [vmem:[%s873 + $0x38] sm:$0xe]
      %v1010 = vunpack.c.l.bf16 %v1002
      %v1011 = vunpack.c.l.bf16 %v1003
      %v1012 = vunpack.c.l.bf16 %v1004
      %v1013 = vunpack.c.l.bf16 %v1005
      %v1014 = vunpack.c.l.bf16 %v1006
      %v1015 = vunpack.c.l.bf16 %v1007
      %v1016 = vunpack.c.l.bf16 %v1008
      %v1017 = vunpack.c.l.bf16 %v1009
      %v1018 = vlaneseq
      %v1019 = vshrl.u32 %v1018, 7
      %v1020 = vsub.s32 0, %v1019
      %v1021 = vrot.slane %v437, %v1020
      %v1022 = vmul.f32 %v1010, %v1021
      %v1023 = vmul.f32 %v918, %v1021
      %v1024 = vmul.f32 %v1011, %v1021
      %v1025 = vmul.f32 %v919, %v1021
      %v1026 = vmul.f32 %v1012, %v1021
      %v1027 = vmul.f32 %v920, %v1021
      %v1028 = vmul.f32 %v1013, %v1021
      %v1029 = vmul.f32 %v921, %v1021
      %v1030 = vmul.f32 %v1014, %v1021
      %v1031 = vmul.f32 %v922, %v1021
      %v1032 = vmul.f32 %v1015, %v1021
      %v1033 = vmul.f32 %v923, %v1021
      %v1034 = vmul.f32 %v1016, %v1021
      %v1035 = vmul.f32 %v924, %v1021
      %v1036 = vmul.f32 %v1017, %v1021
      %v1037 = vmul.f32 %v925, %v1021
      %v1054 = vrot.slane %v1022, 2
      %v1055 = vrot.slane %v1023, 2
      %v1056 = vsel %vm611, %v1054, %v1055
      %v1057 = vrot.slane %v1024, 2
      %v1058 = vrot.slane %v1025, 2
      %v1059 = vsel %vm611, %v1057, %v1058
      %v1060 = vrot.slane %v1026, 2
      %v1061 = vrot.slane %v1027, 2
      %v1062 = vsel %vm611, %v1060, %v1061
      %v1063 = vrot.slane %v1028, 2
      %v1064 = vrot.slane %v1029, 2
      %v1065 = vsel %vm611, %v1063, %v1064
      %v1066 = vrot.slane %v1030, 2
      %v1067 = vrot.slane %v1031, 2
      %v1068 = vsel %vm611, %v1066, %v1067
      %v1069 = vrot.slane %v1032, 2
      %v1070 = vrot.slane %v1033, 2
      %v1071 = vsel %vm611, %v1069, %v1070
      %v1072 = vrot.slane %v1034, 2
      %v1073 = vrot.slane %v1035, 2
      %v1074 = vsel %vm611, %v1072, %v1073
      %v1075 = vrot.slane %v1036, 2
      %v1076 = vrot.slane %v1037, 2
      %v1077 = vsel %vm611, %v1075, %v1076
      %v1086 = vadd.f32 %v994, %v1056
      %v1087 = vadd.f32 %v995, %v1059
      %v1088 = vadd.f32 %v996, %v1062
      %v1089 = vadd.f32 %v997, %v1065
      %v1090 = vadd.f32 %v998, %v1068
      %v1091 = vadd.f32 %v999, %v1071
      %v1092 = vadd.f32 %v1000, %v1074
      %v1093 = vadd.f32 %v1001, %v1077
      %v1094 = vld [vmem:[%s2] sm:$0x1]
      %v1096 = vlaneseq
      %v1097 = vshrl.u32 %v1096, 7
      %v1098 = vsub.s32 0, %v1097
      %v1099 = vrot.slane %v1094, %v1098
      %v1101 = vmul.f32 %v1086, %v1099
      %v1102 = vmul.f32 %v1087, %v1099
      %v1103 = vmul.f32 %v1088, %v1099
      %v1104 = vmul.f32 %v1089, %v1099
      %v1105 = vmul.f32 %v1090, %v1099
      %v1106 = vmul.f32 %v1091, %v1099
      %v1107 = vmul.f32 %v1092, %v1099
      %v1108 = vmul.f32 %v1093, %v1099
      %v1109 = vld [vmem:[%s3] sm:$0x1]
      %v1111 = vlaneseq
      %v1112 = vshrl.u32 %v1111, 7
      %v1113 = vsub.s32 0, %v1112
      %v1114 = vrot.slane %v1109, %v1113
      %v1116 = vadd.f32 %v1101, %v1114
      %v1117 = vadd.f32 %v1102, %v1114
      %v1118 = vadd.f32 %v1103, %v1114
      %v1119 = vadd.f32 %v1104, %v1114
      %v1120 = vadd.f32 %v1105, %v1114
      %v1121 = vadd.f32 %v1106, %v1114
      %v1122 = vadd.f32 %v1107, %v1114
      %v1123 = vadd.f32 %v1108, %v1114
      %v1124 = vmax.f32 %v1116, 0.0
      %v1125 = vmax.f32 %v1117, 0.0
      %v1126 = vmax.f32 %v1118, 0.0
      %v1127 = vmax.f32 %v1119, 0.0
      %v1128 = vmax.f32 %v1120, 0.0
      %v1129 = vmax.f32 %v1121, 0.0
      %v1130 = vmax.f32 %v1122, 0.0
      %v1131 = vmax.f32 %v1123, 0.0
      %v1132 = vadd.f32 %v1124, %v1125
      %v1133 = vadd.f32 %v1132, %v1126
      %v1134 = vadd.f32 %v1133, %v1127
      %v1135 = vadd.f32 %v1134, %v1128
      %v1136 = vadd.f32 %v1135, %v1129
      %v1137 = vadd.f32 %v1136, %v1130
      %v1138 = vadd.f32 %v1137, %v1131
      %vm1139 = vcmask 130048
      %v1140 = vsel %vm1139, %v1138, 0.0
      %v1141 = vrot.slane %v1140, 4
      %v1142 = vadd.f32 %v1140, %v1141
      %v1143 = vrot.slane %v1142, 2
      %v1144 = vadd.f32 %v1142, %v1143
      %v1145 = vrot.slane %v1144, 1
      %v1146 = vadd.f32 %v1144, %v1145
      %v1147 = vmul.f32 %v1146, 0.015625
      %v1148 = vld [vmem:[%s4] sm:$0xf]
      %v1149 = vld [vmem:[%s4 + $0x4] sm:$0xf]
      %v1150 = vunpack.c.l.bf16 %v1148
      %v1151 = vunpack.c.l.bf16 %v1149
      %v1152 = vld [vmem:[%s5] sm:$0x1]
      %v1154 = vsel %vm1139, %v1147, 0
      %1156 = vmatprep.subr.mxu0 0.0
      %1157 = vmatpush1.msra.mxu0 0.0
      %1158 = vmatprep.subr.mxu0 0.0
      %1159 = vmatpush1.msra.mxu0 0.0
      %1160 = vmatprep.subr.mxu0 0.0
      %1161 = vmatpush1.msra.mxu0 0.0
      %1162 = vmatprep.subr.mxu0 0.0
      %1163 = vmatpush1.msra.mxu0 0.0
      %1164 = vmatprep.subr.mxu0 0.0
      %1165 = vmatpush1.msra.mxu0 0.0
      %1166 = vmatprep.subr.mxu0 0.0
      %1167 = vmatpush1.msra.mxu0 0.0
      %1168 = vmatprep.subr.mxu0 0.0
      %1169 = vmatpush1.msra.mxu0 0.0
      %1170 = vmatprep.subr.mxu0 0.0
      %1171 = vmatpush1.msra.mxu0 0.0
      %1172 = vmatprep.subr.mxu0 0.0
      %1173 = vmatpush1.msra.mxu0 0.0
      %1174 = vmatprep.subr.mxu0 0.0
      %1175 = vmatpush1.msra.mxu0 0.0
      %1176 = vmatprep.subr.mxu0 0.0
      %1177 = vmatpush1.msra.mxu0 0.0
      %1178 = vmatprep.subr.mxu0 0.0
      %1179 = vmatpush1.msra.mxu0 0.0
      %1180 = vmatprep.subr.mxu0 0.0
      %1181 = vmatpush1.msra.mxu0 0.0
      %1182 = vmatprep.subr.mxu0 0.0
      %1183 = vmatpush1.msra.mxu0 0.0
      %1184 = vmatprep.subr.mxu0 0.0
      %1185 = vmatpush1.msra.mxu0 %v1151
      %1186 = vmatprep.subr.mxu0 0.0
      %1187 = vmatpush1.msra.mxu0 %v1150
      %1188 = vmatprep.subr.mxu0 0.0
      %1189 = vmatpush2.msra.mxu0 0.0
      %1190 = vmatprep.subr.mxu0 0.0
      %1191 = vmatpush2.msra.mxu0 0.0
      %1192 = vmatprep.subr.mxu0 0.0
      %1193 = vmatpush2.msra.mxu0 0.0
      %1194 = vmatprep.subr.mxu0 0.0
      %1195 = vmatpush2.msra.mxu0 0.0
      %1196 = vmatprep.subr.mxu0 0.0
      %1197 = vmatpush2.msra.mxu0 0.0
      %1198 = vmatprep.subr.mxu0 0.0
      %1199 = vmatpush2.msra.mxu0 0.0
      %1200 = vmatprep.subr.mxu0 0.0
      %1201 = vmatpush2.msra.mxu0 0.0
      %1202 = vmatprep.subr.mxu0 0.0
      %1203 = vmatpush2.msra.mxu0 0.0
      %1204 = vmatprep.subr.mxu0 0.0
      %1205 = vmatpush2.msra.mxu0 0.0
      %1206 = vmatprep.subr.mxu0 0.0
      %1207 = vmatpush2.msra.mxu0 0.0
      %1208 = vmatprep.subr.mxu0 0.0
      %1209 = vmatpush2.msra.mxu0 0.0
      %1210 = vmatprep.subr.mxu0 0.0
      %1211 = vmatpush2.msra.mxu0 0.0
      %1212 = vmatprep.subr.mxu0 0.0
      %1213 = vmatpush2.msra.mxu0 0.0
      %1214 = vmatprep.subr.mxu0 0.0
      %1215 = vmatpush2.msra.mxu0 0.0
      %1216 = vmatprep.subr.mxu0 0.0
      %1217 = vmatpush2.msra.mxu0 0.0
      %1218 = vmatprep.subr.mxu0 0.0
      %1219 = vmatpush2.msra.mxu0 0.0
      %1220 = vmatprep.mubr.f32.mxu0 0.0
      %1221 = vmatmul.mubr.f32.gmra.mxu0 %v1154
      %v1222 = vpop.f32.mrf.mxu0
      %v1223 = vadd.f32 %v1152, %v1222
      %v1224 = vpop.f32.mrf.mxu0
      %1225 = vdwg.mxu0
      %v1226 = vmax.f32 %v1223, 0.0
      %v1227 = vld [vmem:[%s6] sm:$0xf]
      %v1228 = vunpack.c.l.bf16 %v1227
      %v1229 = vld [vmem:[%s7] sm:$0x1]
      %vm1230 = vcmask 64512
      %v1232 = vsel %vm1230, %v1226, 0
      %1234 = vmatprep.subr.mxu0 0.0
      %1235 = vmatpush1.msra.mxu0 0.0
      %1236 = vmatprep.subr.mxu0 0.0
      %1237 = vmatpush1.msra.mxu0 0.0
      %1238 = vmatprep.subr.mxu0 0.0
      %1239 = vmatpush1.msra.mxu0 0.0
      %1240 = vmatprep.subr.mxu0 0.0
      %1241 = vmatpush1.msra.mxu0 0.0
      %1242 = vmatprep.subr.mxu0 0.0
      %1243 = vmatpush1.msra.mxu0 0.0
      %1244 = vmatprep.subr.mxu0 0.0
      %1245 = vmatpush1.msra.mxu0 0.0
      %1246 = vmatprep.subr.mxu0 0.0
      %1247 = vmatpush1.msra.mxu0 0.0
      %1248 = vmatprep.subr.mxu0 0.0
      %1249 = vmatpush1.msra.mxu0 0.0
      %1250 = vmatprep.subr.mxu0 0.0
      %1251 = vmatpush1.msra.mxu0 0.0
      %1252 = vmatprep.subr.mxu0 0.0
      %1253 = vmatpush1.msra.mxu0 0.0
      %1254 = vmatprep.subr.mxu0 0.0
      %1255 = vmatpush1.msra.mxu0 0.0
      %1256 = vmatprep.subr.mxu0 0.0
      %1257 = vmatpush1.msra.mxu0 0.0
      %1258 = vmatprep.subr.mxu0 0.0
      %1259 = vmatpush1.msra.mxu0 0.0
      %1260 = vmatprep.subr.mxu0 0.0
      %1261 = vmatpush1.msra.mxu0 0.0
      %1262 = vmatprep.subr.mxu0 0.0
      %1263 = vmatpush1.msra.mxu0 0.0
      %1264 = vmatprep.subr.mxu0 0.0
      %1265 = vmatpush1.msra.mxu0 %v1228
      %1266 = vmatprep.subr.mxu0 0.0
      %1267 = vmatpush2.msra.mxu0 0.0
      %1268 = vmatprep.subr.mxu0 0.0
      %1269 = vmatpush2.msra.mxu0 0.0
      %1270 = vmatprep.subr.mxu0 0.0
      %1271 = vmatpush2.msra.mxu0 0.0
      %1272 = vmatprep.subr.mxu0 0.0
      %1273 = vmatpush2.msra.mxu0 0.0
      %1274 = vmatprep.subr.mxu0 0.0
      %1275 = vmatpush2.msra.mxu0 0.0
      %1276 = vmatprep.subr.mxu0 0.0
      %1277 = vmatpush2.msra.mxu0 0.0
      %1278 = vmatprep.subr.mxu0 0.0
      %1279 = vmatpush2.msra.mxu0 0.0
      %1280 = vmatprep.subr.mxu0 0.0
      %1281 = vmatpush2.msra.mxu0 0.0
      %1282 = vmatprep.subr.mxu0 0.0
      %1283 = vmatpush2.msra.mxu0 0.0
      %1284 = vmatprep.subr.mxu0 0.0
      %1285 = vmatpush2.msra.mxu0 0.0
      %1286 = vmatprep.subr.mxu0 0.0
      %1287 = vmatpush2.msra.mxu0 0.0
      %1288 = vmatprep.subr.mxu0 0.0
      %1289 = vmatpush2.msra.mxu0 0.0
      %1290 = vmatprep.subr.mxu0 0.0
      %1291 = vmatpush2.msra.mxu0 0.0
      %1292 = vmatprep.subr.mxu0 0.0
      %1293 = vmatpush2.msra.mxu0 0.0
      %1294 = vmatprep.subr.mxu0 0.0
      %1295 = vmatpush2.msra.mxu0 0.0
      %1296 = vmatprep.subr.mxu0 0.0
      %1297 = vmatpush2.msra.mxu0 0.0
      %1298 = vmatprep.mubr.f32.mxu0 0.0
      %1299 = vmatmul.mubr.f32.gmra.mxu0 %v1232
      %v1300 = vpop.f32.mrf.mxu0
      %v1301 = vadd.f32 %v1229, %v1300
      %v1302 = vpop.f32.mrf.mxu0
      %1303 = vdwg.mxu0
      %v1304 = vadd.f32 %v1301, 3.0
      %v1305 = vmax.f32 %v1304, 0.0
      %v1306 = vmin.f32 %v1305, 6.0
      %v1307 = vmul.f32 %v1306, 0.16666667
      %v1308 = vlaneseq
      %v1309 = vshrl.u32 %v1308, 7
      %v1310 = vsub.s32 0, %v1309
      %v1311 = vrot.slane %v1307, %v1310
      %v1312 = vmul.f32 %v1124, %v1311
      %v1313 = vmul.f32 %v1125, %v1311
      %v1314 = vmul.f32 %v1126, %v1311
      %v1315 = vmul.f32 %v1127, %v1311
      %v1316 = vmul.f32 %v1128, %v1311
      %v1317 = vmul.f32 %v1129, %v1311
      %v1318 = vmul.f32 %v1130, %v1311
      %v1319 = vmul.f32 %v1131, %v1311
      %v1320 = vld [vmem:[%s8] sm:$0xf]
      %v1321 = vld [vmem:[%s8 + $0x4] sm:$0xf]
      %v1322 = vunpack.c.l.bf16 %v1320
      %v1323 = vunpack.c.l.bf16 %v1321
      %v1325 = vsel %vm1139, %v1312, 0
      %1327 = vmatprep.subr.mxu0 0.0
      %1328 = vmatpush1.msra.mxu0 0.0
      %1329 = vmatprep.subr.mxu0 0.0
      %1330 = vmatpush1.msra.mxu0 0.0
      %1331 = vmatprep.subr.mxu0 0.0
      %1332 = vmatpush1.msra.mxu0 0.0
      %1333 = vmatprep.subr.mxu0 0.0
      %1334 = vmatpush1.msra.mxu0 0.0
      %1335 = vmatprep.subr.mxu0 0.0
      %1336 = vmatpush1.msra.mxu0 0.0
      %1337 = vmatprep.subr.mxu0 0.0
      %1338 = vmatpush1.msra.mxu0 0.0
      %1339 = vmatprep.subr.mxu0 0.0
      %1340 = vmatpush1.msra.mxu0 0.0
      %1341 = vmatprep.subr.mxu0 0.0
      %1342 = vmatpush1.msra.mxu0 0.0
      %1343 = vmatprep.subr.mxu0 0.0
      %1344 = vmatpush1.msra.mxu0 0.0
      %1345 = vmatprep.subr.mxu0 0.0
      %1346 = vmatpush1.msra.mxu0 0.0
      %1347 = vmatprep.subr.mxu0 0.0
      %1348 = vmatpush1.msra.mxu0 0.0
      %1349 = vmatprep.subr.mxu0 0.0
      %1350 = vmatpush1.msra.mxu0 0.0
      %1351 = vmatprep.subr.mxu0 0.0
      %1352 = vmatpush1.msra.mxu0 0.0
      %1353 = vmatprep.subr.mxu0 0.0
      %1354 = vmatpush1.msra.mxu0 0.0
      %1355 = vmatprep.subr.mxu0 0.0
      %1356 = vmatpush1.msra.mxu0 %v1323
      %1357 = vmatprep.subr.mxu0 0.0
      %1358 = vmatpush1.msra.mxu0 %v1322
      %1359 = vmatprep.subr.mxu0 0.0
      %1360 = vmatpush2.msra.mxu0 0.0
      %1361 = vmatprep.subr.mxu0 0.0
      %1362 = vmatpush2.msra.mxu0 0.0
      %1363 = vmatprep.subr.mxu0 0.0
      %1364 = vmatpush2.msra.mxu0 0.0
      %1365 = vmatprep.subr.mxu0 0.0
      %1366 = vmatpush2.msra.mxu0 0.0
      %1367 = vmatprep.subr.mxu0 0.0
      %1368 = vmatpush2.msra.mxu0 0.0
      %1369 = vmatprep.subr.mxu0 0.0
      %1370 = vmatpush2.msra.mxu0 0.0
      %1371 = vmatprep.subr.mxu0 0.0
      %1372 = vmatpush2.msra.mxu0 0.0
      %1373 = vmatprep.subr.mxu0 0.0
      %1374 = vmatpush2.msra.mxu0 0.0
      %1375 = vmatprep.subr.mxu0 0.0
      %1376 = vmatpush2.msra.mxu0 0.0
      %1377 = vmatprep.subr.mxu0 0.0
      %1378 = vmatpush2.msra.mxu0 0.0
      %1379 = vmatprep.subr.mxu0 0.0
      %1380 = vmatpush2.msra.mxu0 0.0
      %1381 = vmatprep.subr.mxu0 0.0
      %1382 = vmatpush2.msra.mxu0 0.0
      %1383 = vmatprep.subr.mxu0 0.0
      %1384 = vmatpush2.msra.mxu0 0.0
      %1385 = vmatprep.subr.mxu0 0.0
      %1386 = vmatpush2.msra.mxu0 0.0
      %1387 = vmatprep.subr.mxu0 0.0
      %1388 = vmatpush2.msra.mxu0 0.0
      %1389 = vmatprep.subr.mxu0 0.0
      %1390 = vmatpush2.msra.mxu0 0.0
      %1391 = vmatprep.mubr.f32.mxu0 0.0
      %1392 = vmatmul.mubr.f32.gmra.mxu0 %v1325
      %v1393 = vpop.f32.mrf.mxu0
      %v1394 = vadd.f32 0.0, %v1393
      %v1395 = vpop.f32.mrf.mxu0
      %1396 = vdwg.mxu0
      %v1397 = vld [vmem:[%s9] sm:$0x1]
      %v1399 = vlaneseq
      %v1400 = vshrl.u32 %v1399, 7
      %v1401 = vsub.s32 0, %v1400
      %v1402 = vrot.slane %v1397, %v1401
      %v1404 = vmul.f32 %v1394, %v1402
      %v1405 = vld [vmem:[%s10] sm:$0x1]
      %v1407 = vlaneseq
      %v1408 = vshrl.u32 %v1407, 7
      %v1409 = vsub.s32 0, %v1408
      %v1410 = vrot.slane %v1405, %v1409
      %v1412 = vadd.f32 %v1404, %v1410
      %v1413 = vld [vmem:[%s428] sm:$0xf]
      %v1414 = vunpack.c.l.bf16 %v1413
      %v1415 = vadd.f32 %v1412, %v1414
      %v1416 = vpack.c.bf16 %v1415, %v1415
      %vm1417 = vcmask 125952
      %1418 = vst.msk [vmem:[%s433] sm:$0xf] %vm1417, %v1416
      %v1420 = vsel %vm1139, %v1313, 0
      %1422 = vmatprep.subr.mxu0 0.0
      %1423 = vmatpush1.msra.mxu0 0.0
      %1424 = vmatprep.subr.mxu0 0.0
      %1425 = vmatpush1.msra.mxu0 0.0
      %1426 = vmatprep.subr.mxu0 0.0
      %1427 = vmatpush1.msra.mxu0 0.0
      %1428 = vmatprep.subr.mxu0 0.0
      %1429 = vmatpush1.msra.mxu0 0.0
      %1430 = vmatprep.subr.mxu0 0.0
      %1431 = vmatpush1.msra.mxu0 0.0
      %1432 = vmatprep.subr.mxu0 0.0
      %1433 = vmatpush1.msra.mxu0 0.0
      %1434 = vmatprep.subr.mxu0 0.0
      %1435 = vmatpush1.msra.mxu0 0.0
      %1436 = vmatprep.subr.mxu0 0.0
      %1437 = vmatpush1.msra.mxu0 0.0
      %1438 = vmatprep.subr.mxu0 0.0
      %1439 = vmatpush1.msra.mxu0 0.0
      %1440 = vmatprep.subr.mxu0 0.0
      %1441 = vmatpush1.msra.mxu0 0.0
      %1442 = vmatprep.subr.mxu0 0.0
      %1443 = vmatpush1.msra.mxu0 0.0
      %1444 = vmatprep.subr.mxu0 0.0
      %1445 = vmatpush1.msra.mxu0 0.0
      %1446 = vmatprep.subr.mxu0 0.0
      %1447 = vmatpush1.msra.mxu0 0.0
      %1448 = vmatprep.subr.mxu0 0.0
      %1449 = vmatpush1.msra.mxu0 0.0
      %1450 = vmatprep.subr.mxu0 0.0
      %1451 = vmatpush1.msra.mxu0 %v1323
      %1452 = vmatprep.subr.mxu0 0.0
      %1453 = vmatpush1.msra.mxu0 %v1322
      %1454 = vmatprep.subr.mxu0 0.0
      %1455 = vmatpush2.msra.mxu0 0.0
      %1456 = vmatprep.subr.mxu0 0.0
      %1457 = vmatpush2.msra.mxu0 0.0
      %1458 = vmatprep.subr.mxu0 0.0
      %1459 = vmatpush2.msra.mxu0 0.0
      %1460 = vmatprep.subr.mxu0 0.0
      %1461 = vmatpush2.msra.mxu0 0.0
      %1462 = vmatprep.subr.mxu0 0.0
      %1463 = vmatpush2.msra.mxu0 0.0
      %1464 = vmatprep.subr.mxu0 0.0
      %1465 = vmatpush2.msra.mxu0 0.0
      %1466 = vmatprep.subr.mxu0 0.0
      %1467 = vmatpush2.msra.mxu0 0.0
      %1468 = vmatprep.subr.mxu0 0.0
      %1469 = vmatpush2.msra.mxu0 0.0
      %1470 = vmatprep.subr.mxu0 0.0
      %1471 = vmatpush2.msra.mxu0 0.0
      %1472 = vmatprep.subr.mxu0 0.0
      %1473 = vmatpush2.msra.mxu0 0.0
      %1474 = vmatprep.subr.mxu0 0.0
      %1475 = vmatpush2.msra.mxu0 0.0
      %1476 = vmatprep.subr.mxu0 0.0
      %1477 = vmatpush2.msra.mxu0 0.0
      %1478 = vmatprep.subr.mxu0 0.0
      %1479 = vmatpush2.msra.mxu0 0.0
      %1480 = vmatprep.subr.mxu0 0.0
      %1481 = vmatpush2.msra.mxu0 0.0
      %1482 = vmatprep.subr.mxu0 0.0
      %1483 = vmatpush2.msra.mxu0 0.0
      %1484 = vmatprep.subr.mxu0 0.0
      %1485 = vmatpush2.msra.mxu0 0.0
      %1486 = vmatprep.mubr.f32.mxu0 0.0
      %1487 = vmatmul.mubr.f32.gmra.mxu0 %v1420
      %v1488 = vpop.f32.mrf.mxu0
      %v1489 = vadd.f32 0.0, %v1488
      %v1490 = vpop.f32.mrf.mxu0
      %1491 = vdwg.mxu0
      %v1492 = vld [vmem:[%s9] sm:$0x1]
      %v1494 = vlaneseq
      %v1495 = vshrl.u32 %v1494, 7
      %v1496 = vsub.s32 0, %v1495
      %v1497 = vrot.slane %v1492, %v1496
      %v1499 = vmul.f32 %v1489, %v1497
      %v1500 = vld [vmem:[%s10] sm:$0x1]
      %v1502 = vlaneseq
      %v1503 = vshrl.u32 %v1502, 7
      %v1504 = vsub.s32 0, %v1503
      %v1505 = vrot.slane %v1500, %v1504
      %v1507 = vadd.f32 %v1499, %v1505
      %s1508 = scalar_lea.vmem %s428, 4
      %v1509 = vld [vmem:[%s1508] sm:$0xf]
      %v1510 = vunpack.c.l.bf16 %v1509
      %v1511 = vadd.f32 %v1507, %v1510
      %v1512 = vpack.c.bf16 %v1511, %v1511
      %s1513 = scalar_lea.vmem %s433, 4
      %1514 = vst.msk [vmem:[%s1513] sm:$0xf] %vm1417, %v1512
      %v1516 = vsel %vm1139, %v1314, 0
      %1518 = vmatprep.subr.mxu0 0.0
      %1519 = vmatpush1.msra.mxu0 0.0
      %1520 = vmatprep.subr.mxu0 0.0
      %1521 = vmatpush1.msra.mxu0 0.0
      %1522 = vmatprep.subr.mxu0 0.0
      %1523 = vmatpush1.msra.mxu0 0.0
      %1524 = vmatprep.subr.mxu0 0.0
      %1525 = vmatpush1.msra.mxu0 0.0
      %1526 = vmatprep.subr.mxu0 0.0
      %1527 = vmatpush1.msra.mxu0 0.0
      %1528 = vmatprep.subr.mxu0 0.0
      %1529 = vmatpush1.msra.mxu0 0.0
      %1530 = vmatprep.subr.mxu0 0.0
      %1531 = vmatpush1.msra.mxu0 0.0
      %1532 = vmatprep.subr.mxu0 0.0
      %1533 = vmatpush1.msra.mxu0 0.0
      %1534 = vmatprep.subr.mxu0 0.0
      %1535 = vmatpush1.msra.mxu0 0.0
      %1536 = vmatprep.subr.mxu0 0.0
      %1537 = vmatpush1.msra.mxu0 0.0
      %1538 = vmatprep.subr.mxu0 0.0
      %1539 = vmatpush1.msra.mxu0 0.0
      %1540 = vmatprep.subr.mxu0 0.0
      %1541 = vmatpush1.msra.mxu0 0.0
      %1542 = vmatprep.subr.mxu0 0.0
      %1543 = vmatpush1.msra.mxu0 0.0
      %1544 = vmatprep.subr.mxu0 0.0
      %1545 = vmatpush1.msra.mxu0 0.0
      %1546 = vmatprep.subr.mxu0 0.0
      %1547 = vmatpush1.msra.mxu0 %v1323
      %1548 = vmatprep.subr.mxu0 0.0
      %1549 = vmatpush1.msra.mxu0 %v1322
      %1550 = vmatprep.subr.mxu0 0.0
      %1551 = vmatpush2.msra.mxu0 0.0
      %1552 = vmatprep.subr.mxu0 0.0
      %1553 = vmatpush2.msra.mxu0 0.0
      %1554 = vmatprep.subr.mxu0 0.0
      %1555 = vmatpush2.msra.mxu0 0.0
      %1556 = vmatprep.subr.mxu0 0.0
      %1557 = vmatpush2.msra.mxu0 0.0
      %1558 = vmatprep.subr.mxu0 0.0
      %1559 = vmatpush2.msra.mxu0 0.0
      %1560 = vmatprep.subr.mxu0 0.0
      %1561 = vmatpush2.msra.mxu0 0.0
      %1562 = vmatprep.subr.mxu0 0.0
      %1563 = vmatpush2.msra.mxu0 0.0
      %1564 = vmatprep.subr.mxu0 0.0
      %1565 = vmatpush2.msra.mxu0 0.0
      %1566 = vmatprep.subr.mxu0 0.0
      %1567 = vmatpush2.msra.mxu0 0.0
      %1568 = vmatprep.subr.mxu0 0.0
      %1569 = vmatpush2.msra.mxu0 0.0
      %1570 = vmatprep.subr.mxu0 0.0
      %1571 = vmatpush2.msra.mxu0 0.0
      %1572 = vmatprep.subr.mxu0 0.0
      %1573 = vmatpush2.msra.mxu0 0.0
      %1574 = vmatprep.subr.mxu0 0.0
      %1575 = vmatpush2.msra.mxu0 0.0
      %1576 = vmatprep.subr.mxu0 0.0
      %1577 = vmatpush2.msra.mxu0 0.0
      %1578 = vmatprep.subr.mxu0 0.0
      %1579 = vmatpush2.msra.mxu0 0.0
      %1580 = vmatprep.subr.mxu0 0.0
      %1581 = vmatpush2.msra.mxu0 0.0
      %1582 = vmatprep.mubr.f32.mxu0 0.0
      %1583 = vmatmul.mubr.f32.gmra.mxu0 %v1516
      %v1584 = vpop.f32.mrf.mxu0
      %v1585 = vadd.f32 0.0, %v1584
      %v1586 = vpop.f32.mrf.mxu0
      %1587 = vdwg.mxu0
      %v1588 = vld [vmem:[%s9] sm:$0x1]
      %v1590 = vlaneseq
      %v1591 = vshrl.u32 %v1590, 7
      %v1592 = vsub.s32 0, %v1591
      %v1593 = vrot.slane %v1588, %v1592
      %v1595 = vmul.f32 %v1585, %v1593
      %v1596 = vld [vmem:[%s10] sm:$0x1]
      %v1598 = vlaneseq
      %v1599 = vshrl.u32 %v1598, 7
      %v1600 = vsub.s32 0, %v1599
      %v1601 = vrot.slane %v1596, %v1600
      %v1603 = vadd.f32 %v1595, %v1601
      %s1604 = scalar_lea.vmem %s428, 8
      %v1605 = vld [vmem:[%s1604] sm:$0xf]
      %v1606 = vunpack.c.l.bf16 %v1605
      %v1607 = vadd.f32 %v1603, %v1606
      %v1608 = vpack.c.bf16 %v1607, %v1607
      %s1609 = scalar_lea.vmem %s433, 8
      %1610 = vst.msk [vmem:[%s1609] sm:$0xf] %vm1417, %v1608
      %v1612 = vsel %vm1139, %v1315, 0
      %1614 = vmatprep.subr.mxu0 0.0
      %1615 = vmatpush1.msra.mxu0 0.0
      %1616 = vmatprep.subr.mxu0 0.0
      %1617 = vmatpush1.msra.mxu0 0.0
      %1618 = vmatprep.subr.mxu0 0.0
      %1619 = vmatpush1.msra.mxu0 0.0
      %1620 = vmatprep.subr.mxu0 0.0
      %1621 = vmatpush1.msra.mxu0 0.0
      %1622 = vmatprep.subr.mxu0 0.0
      %1623 = vmatpush1.msra.mxu0 0.0
      %1624 = vmatprep.subr.mxu0 0.0
      %1625 = vmatpush1.msra.mxu0 0.0
      %1626 = vmatprep.subr.mxu0 0.0
      %1627 = vmatpush1.msra.mxu0 0.0
      %1628 = vmatprep.subr.mxu0 0.0
      %1629 = vmatpush1.msra.mxu0 0.0
      %1630 = vmatprep.subr.mxu0 0.0
      %1631 = vmatpush1.msra.mxu0 0.0
      %1632 = vmatprep.subr.mxu0 0.0
      %1633 = vmatpush1.msra.mxu0 0.0
      %1634 = vmatprep.subr.mxu0 0.0
      %1635 = vmatpush1.msra.mxu0 0.0
      %1636 = vmatprep.subr.mxu0 0.0
      %1637 = vmatpush1.msra.mxu0 0.0
      %1638 = vmatprep.subr.mxu0 0.0
      %1639 = vmatpush1.msra.mxu0 0.0
      %1640 = vmatprep.subr.mxu0 0.0
      %1641 = vmatpush1.msra.mxu0 0.0
      %1642 = vmatprep.subr.mxu0 0.0
      %1643 = vmatpush1.msra.mxu0 %v1323
      %1644 = vmatprep.subr.mxu0 0.0
      %1645 = vmatpush1.msra.mxu0 %v1322
      %1646 = vmatprep.subr.mxu0 0.0
      %1647 = vmatpush2.msra.mxu0 0.0
      %1648 = vmatprep.subr.mxu0 0.0
      %1649 = vmatpush2.msra.mxu0 0.0
      %1650 = vmatprep.subr.mxu0 0.0
      %1651 = vmatpush2.msra.mxu0 0.0
      %1652 = vmatprep.subr.mxu0 0.0
      %1653 = vmatpush2.msra.mxu0 0.0
      %1654 = vmatprep.subr.mxu0 0.0
      %1655 = vmatpush2.msra.mxu0 0.0
      %1656 = vmatprep.subr.mxu0 0.0
      %1657 = vmatpush2.msra.mxu0 0.0
      %1658 = vmatprep.subr.mxu0 0.0
      %1659 = vmatpush2.msra.mxu0 0.0
      %1660 = vmatprep.subr.mxu0 0.0
      %1661 = vmatpush2.msra.mxu0 0.0
      %1662 = vmatprep.subr.mxu0 0.0
      %1663 = vmatpush2.msra.mxu0 0.0
      %1664 = vmatprep.subr.mxu0 0.0
      %1665 = vmatpush2.msra.mxu0 0.0
      %1666 = vmatprep.subr.mxu0 0.0
      %1667 = vmatpush2.msra.mxu0 0.0
      %1668 = vmatprep.subr.mxu0 0.0
      %1669 = vmatpush2.msra.mxu0 0.0
      %1670 = vmatprep.subr.mxu0 0.0
      %1671 = vmatpush2.msra.mxu0 0.0
      %1672 = vmatprep.subr.mxu0 0.0
      %1673 = vmatpush2.msra.mxu0 0.0
      %1674 = vmatprep.subr.mxu0 0.0
      %1675 = vmatpush2.msra.mxu0 0.0
      %1676 = vmatprep.subr.mxu0 0.0
      %1677 = vmatpush2.msra.mxu0 0.0
      %1678 = vmatprep.mubr.f32.mxu0 0.0
      %1679 = vmatmul.mubr.f32.gmra.mxu0 %v1612
      %v1680 = vpop.f32.mrf.mxu0
      %v1681 = vadd.f32 0.0, %v1680
      %v1682 = vpop.f32.mrf.mxu0
      %1683 = vdwg.mxu0
      %v1684 = vld [vmem:[%s9] sm:$0x1]
      %v1686 = vlaneseq
      %v1687 = vshrl.u32 %v1686, 7
      %v1688 = vsub.s32 0, %v1687
      %v1689 = vrot.slane %v1684, %v1688
      %v1691 = vmul.f32 %v1681, %v1689
      %v1692 = vld [vmem:[%s10] sm:$0x1]
      %v1694 = vlaneseq
      %v1695 = vshrl.u32 %v1694, 7
      %v1696 = vsub.s32 0, %v1695
      %v1697 = vrot.slane %v1692, %v1696
      %v1699 = vadd.f32 %v1691, %v1697
      %s1700 = scalar_lea.vmem %s428, 12
      %v1701 = vld [vmem:[%s1700] sm:$0xf]
      %v1702 = vunpack.c.l.bf16 %v1701
      %v1703 = vadd.f32 %v1699, %v1702
      %v1704 = vpack.c.bf16 %v1703, %v1703
      %s1705 = scalar_lea.vmem %s433, 12
      %1706 = vst.msk [vmem:[%s1705] sm:$0xf] %vm1417, %v1704
      %v1708 = vsel %vm1139, %v1316, 0
      %1710 = vmatprep.subr.mxu0 0.0
      %1711 = vmatpush1.msra.mxu0 0.0
      %1712 = vmatprep.subr.mxu0 0.0
      %1713 = vmatpush1.msra.mxu0 0.0
      %1714 = vmatprep.subr.mxu0 0.0
      %1715 = vmatpush1.msra.mxu0 0.0
      %1716 = vmatprep.subr.mxu0 0.0
      %1717 = vmatpush1.msra.mxu0 0.0
      %1718 = vmatprep.subr.mxu0 0.0
      %1719 = vmatpush1.msra.mxu0 0.0
      %1720 = vmatprep.subr.mxu0 0.0
      %1721 = vmatpush1.msra.mxu0 0.0
      %1722 = vmatprep.subr.mxu0 0.0
      %1723 = vmatpush1.msra.mxu0 0.0
      %1724 = vmatprep.subr.mxu0 0.0
      %1725 = vmatpush1.msra.mxu0 0.0
      %1726 = vmatprep.subr.mxu0 0.0
      %1727 = vmatpush1.msra.mxu0 0.0
      %1728 = vmatprep.subr.mxu0 0.0
      %1729 = vmatpush1.msra.mxu0 0.0
      %1730 = vmatprep.subr.mxu0 0.0
      %1731 = vmatpush1.msra.mxu0 0.0
      %1732 = vmatprep.subr.mxu0 0.0
      %1733 = vmatpush1.msra.mxu0 0.0
      %1734 = vmatprep.subr.mxu0 0.0
      %1735 = vmatpush1.msra.mxu0 0.0
      %1736 = vmatprep.subr.mxu0 0.0
      %1737 = vmatpush1.msra.mxu0 0.0
      %1738 = vmatprep.subr.mxu0 0.0
      %1739 = vmatpush1.msra.mxu0 %v1323
      %1740 = vmatprep.subr.mxu0 0.0
      %1741 = vmatpush1.msra.mxu0 %v1322
      %1742 = vmatprep.subr.mxu0 0.0
      %1743 = vmatpush2.msra.mxu0 0.0
      %1744 = vmatprep.subr.mxu0 0.0
      %1745 = vmatpush2.msra.mxu0 0.0
      %1746 = vmatprep.subr.mxu0 0.0
      %1747 = vmatpush2.msra.mxu0 0.0
      %1748 = vmatprep.subr.mxu0 0.0
      %1749 = vmatpush2.msra.mxu0 0.0
      %1750 = vmatprep.subr.mxu0 0.0
      %1751 = vmatpush2.msra.mxu0 0.0
      %1752 = vmatprep.subr.mxu0 0.0
      %1753 = vmatpush2.msra.mxu0 0.0
      %1754 = vmatprep.subr.mxu0 0.0
      %1755 = vmatpush2.msra.mxu0 0.0
      %1756 = vmatprep.subr.mxu0 0.0
      %1757 = vmatpush2.msra.mxu0 0.0
      %1758 = vmatprep.subr.mxu0 0.0
      %1759 = vmatpush2.msra.mxu0 0.0
      %1760 = vmatprep.subr.mxu0 0.0
      %1761 = vmatpush2.msra.mxu0 0.0
      %1762 = vmatprep.subr.mxu0 0.0
      %1763 = vmatpush2.msra.mxu0 0.0
      %1764 = vmatprep.subr.mxu0 0.0
      %1765 = vmatpush2.msra.mxu0 0.0
      %1766 = vmatprep.subr.mxu0 0.0
      %1767 = vmatpush2.msra.mxu0 0.0
      %1768 = vmatprep.subr.mxu0 0.0
      %1769 = vmatpush2.msra.mxu0 0.0
      %1770 = vmatprep.subr.mxu0 0.0
      %1771 = vmatpush2.msra.mxu0 0.0
      %1772 = vmatprep.subr.mxu0 0.0
      %1773 = vmatpush2.msra.mxu0 0.0
      %1774 = vmatprep.mubr.f32.mxu0 0.0
      %1775 = vmatmul.mubr.f32.gmra.mxu0 %v1708
      %v1776 = vpop.f32.mrf.mxu0
      %v1777 = vadd.f32 0.0, %v1776
      %v1778 = vpop.f32.mrf.mxu0
      %1779 = vdwg.mxu0
      %v1780 = vld [vmem:[%s9] sm:$0x1]
      %v1782 = vlaneseq
      %v1783 = vshrl.u32 %v1782, 7
      %v1784 = vsub.s32 0, %v1783
      %v1785 = vrot.slane %v1780, %v1784
      %v1787 = vmul.f32 %v1777, %v1785
      %v1788 = vld [vmem:[%s10] sm:$0x1]
      %v1790 = vlaneseq
      %v1791 = vshrl.u32 %v1790, 7
      %v1792 = vsub.s32 0, %v1791
      %v1793 = vrot.slane %v1788, %v1792
      %v1795 = vadd.f32 %v1787, %v1793
      %s1796 = scalar_lea.vmem %s428, 16
      %v1797 = vld [vmem:[%s1796] sm:$0xf]
      %v1798 = vunpack.c.l.bf16 %v1797
      %v1799 = vadd.f32 %v1795, %v1798
      %v1800 = vpack.c.bf16 %v1799, %v1799
      %s1801 = scalar_lea.vmem %s433, 16
      %1802 = vst.msk [vmem:[%s1801] sm:$0xf] %vm1417, %v1800
      %v1804 = vsel %vm1139, %v1317, 0
      %1806 = vmatprep.subr.mxu0 0.0
      %1807 = vmatpush1.msra.mxu0 0.0
      %1808 = vmatprep.subr.mxu0 0.0
      %1809 = vmatpush1.msra.mxu0 0.0
      %1810 = vmatprep.subr.mxu0 0.0
      %1811 = vmatpush1.msra.mxu0 0.0
      %1812 = vmatprep.subr.mxu0 0.0
      %1813 = vmatpush1.msra.mxu0 0.0
      %1814 = vmatprep.subr.mxu0 0.0
      %1815 = vmatpush1.msra.mxu0 0.0
      %1816 = vmatprep.subr.mxu0 0.0
      %1817 = vmatpush1.msra.mxu0 0.0
      %1818 = vmatprep.subr.mxu0 0.0
      %1819 = vmatpush1.msra.mxu0 0.0
      %1820 = vmatprep.subr.mxu0 0.0
      %1821 = vmatpush1.msra.mxu0 0.0
      %1822 = vmatprep.subr.mxu0 0.0
      %1823 = vmatpush1.msra.mxu0 0.0
      %1824 = vmatprep.subr.mxu0 0.0
      %1825 = vmatpush1.msra.mxu0 0.0
      %1826 = vmatprep.subr.mxu0 0.0
      %1827 = vmatpush1.msra.mxu0 0.0
      %1828 = vmatprep.subr.mxu0 0.0
      %1829 = vmatpush1.msra.mxu0 0.0
      %1830 = vmatprep.subr.mxu0 0.0
      %1831 = vmatpush1.msra.mxu0 0.0
      %1832 = vmatprep.subr.mxu0 0.0
      %1833 = vmatpush1.msra.mxu0 0.0
      %1834 = vmatprep.subr.mxu0 0.0
      %1835 = vmatpush1.msra.mxu0 %v1323
      %1836 = vmatprep.subr.mxu0 0.0
      %1837 = vmatpush1.msra.mxu0 %v1322
      %1838 = vmatprep.subr.mxu0 0.0
      %1839 = vmatpush2.msra.mxu0 0.0
      %1840 = vmatprep.subr.mxu0 0.0
      %1841 = vmatpush2.msra.mxu0 0.0
      %1842 = vmatprep.subr.mxu0 0.0
      %1843 = vmatpush2.msra.mxu0 0.0
      %1844 = vmatprep.subr.mxu0 0.0
      %1845 = vmatpush2.msra.mxu0 0.0
      %1846 = vmatprep.subr.mxu0 0.0
      %1847 = vmatpush2.msra.mxu0 0.0
      %1848 = vmatprep.subr.mxu0 0.0
      %1849 = vmatpush2.msra.mxu0 0.0
      %1850 = vmatprep.subr.mxu0 0.0
      %1851 = vmatpush2.msra.mxu0 0.0
      %1852 = vmatprep.subr.mxu0 0.0
      %1853 = vmatpush2.msra.mxu0 0.0
      %1854 = vmatprep.subr.mxu0 0.0
      %1855 = vmatpush2.msra.mxu0 0.0
      %1856 = vmatprep.subr.mxu0 0.0
      %1857 = vmatpush2.msra.mxu0 0.0
      %1858 = vmatprep.subr.mxu0 0.0
      %1859 = vmatpush2.msra.mxu0 0.0
      %1860 = vmatprep.subr.mxu0 0.0
      %1861 = vmatpush2.msra.mxu0 0.0
      %1862 = vmatprep.subr.mxu0 0.0
      %1863 = vmatpush2.msra.mxu0 0.0
      %1864 = vmatprep.subr.mxu0 0.0
      %1865 = vmatpush2.msra.mxu0 0.0
      %1866 = vmatprep.subr.mxu0 0.0
      %1867 = vmatpush2.msra.mxu0 0.0
      %1868 = vmatprep.subr.mxu0 0.0
      %1869 = vmatpush2.msra.mxu0 0.0
      %1870 = vmatprep.mubr.f32.mxu0 0.0
      %1871 = vmatmul.mubr.f32.gmra.mxu0 %v1804
      %v1872 = vpop.f32.mrf.mxu0
      %v1873 = vadd.f32 0.0, %v1872
      %v1874 = vpop.f32.mrf.mxu0
      %1875 = vdwg.mxu0
      %v1876 = vld [vmem:[%s9] sm:$0x1]
      %v1878 = vlaneseq
      %v1879 = vshrl.u32 %v1878, 7
      %v1880 = vsub.s32 0, %v1879
      %v1881 = vrot.slane %v1876, %v1880
      %v1883 = vmul.f32 %v1873, %v1881
      %v1884 = vld [vmem:[%s10] sm:$0x1]
      %v1886 = vlaneseq
      %v1887 = vshrl.u32 %v1886, 7
      %v1888 = vsub.s32 0, %v1887
      %v1889 = vrot.slane %v1884, %v1888
      %v1891 = vadd.f32 %v1883, %v1889
      %s1892 = scalar_lea.vmem %s428, 20
      %v1893 = vld [vmem:[%s1892] sm:$0xf]
      %v1894 = vunpack.c.l.bf16 %v1893
      %v1895 = vadd.f32 %v1891, %v1894
      %v1896 = vpack.c.bf16 %v1895, %v1895
      %s1897 = scalar_lea.vmem %s433, 20
      %1898 = vst.msk [vmem:[%s1897] sm:$0xf] %vm1417, %v1896
      %v1900 = vsel %vm1139, %v1318, 0
      %1902 = vmatprep.subr.mxu0 0.0
      %1903 = vmatpush1.msra.mxu0 0.0
      %1904 = vmatprep.subr.mxu0 0.0
      %1905 = vmatpush1.msra.mxu0 0.0
      %1906 = vmatprep.subr.mxu0 0.0
      %1907 = vmatpush1.msra.mxu0 0.0
      %1908 = vmatprep.subr.mxu0 0.0
      %1909 = vmatpush1.msra.mxu0 0.0
      %1910 = vmatprep.subr.mxu0 0.0
      %1911 = vmatpush1.msra.mxu0 0.0
      %1912 = vmatprep.subr.mxu0 0.0
      %1913 = vmatpush1.msra.mxu0 0.0
      %1914 = vmatprep.subr.mxu0 0.0
      %1915 = vmatpush1.msra.mxu0 0.0
      %1916 = vmatprep.subr.mxu0 0.0
      %1917 = vmatpush1.msra.mxu0 0.0
      %1918 = vmatprep.subr.mxu0 0.0
      %1919 = vmatpush1.msra.mxu0 0.0
      %1920 = vmatprep.subr.mxu0 0.0
      %1921 = vmatpush1.msra.mxu0 0.0
      %1922 = vmatprep.subr.mxu0 0.0
      %1923 = vmatpush1.msra.mxu0 0.0
      %1924 = vmatprep.subr.mxu0 0.0
      %1925 = vmatpush1.msra.mxu0 0.0
      %1926 = vmatprep.subr.mxu0 0.0
      %1927 = vmatpush1.msra.mxu0 0.0
      %1928 = vmatprep.subr.mxu0 0.0
      %1929 = vmatpush1.msra.mxu0 0.0
      %1930 = vmatprep.subr.mxu0 0.0
      %1931 = vmatpush1.msra.mxu0 %v1323
      %1932 = vmatprep.subr.mxu0 0.0
      %1933 = vmatpush1.msra.mxu0 %v1322
      %1934 = vmatprep.subr.mxu0 0.0
      %1935 = vmatpush2.msra.mxu0 0.0
      %1936 = vmatprep.subr.mxu0 0.0
      %1937 = vmatpush2.msra.mxu0 0.0
      %1938 = vmatprep.subr.mxu0 0.0
      %1939 = vmatpush2.msra.mxu0 0.0
      %1940 = vmatprep.subr.mxu0 0.0
      %1941 = vmatpush2.msra.mxu0 0.0
      %1942 = vmatprep.subr.mxu0 0.0
      %1943 = vmatpush2.msra.mxu0 0.0
      %1944 = vmatprep.subr.mxu0 0.0
      %1945 = vmatpush2.msra.mxu0 0.0
      %1946 = vmatprep.subr.mxu0 0.0
      %1947 = vmatpush2.msra.mxu0 0.0
      %1948 = vmatprep.subr.mxu0 0.0
      %1949 = vmatpush2.msra.mxu0 0.0
      %1950 = vmatprep.subr.mxu0 0.0
      %1951 = vmatpush2.msra.mxu0 0.0
      %1952 = vmatprep.subr.mxu0 0.0
      %1953 = vmatpush2.msra.mxu0 0.0
      %1954 = vmatprep.subr.mxu0 0.0
      %1955 = vmatpush2.msra.mxu0 0.0
      %1956 = vmatprep.subr.mxu0 0.0
      %1957 = vmatpush2.msra.mxu0 0.0
      %1958 = vmatprep.subr.mxu0 0.0
      %1959 = vmatpush2.msra.mxu0 0.0
      %1960 = vmatprep.subr.mxu0 0.0
      %1961 = vmatpush2.msra.mxu0 0.0
      %1962 = vmatprep.subr.mxu0 0.0
      %1963 = vmatpush2.msra.mxu0 0.0
      %1964 = vmatprep.subr.mxu0 0.0
      %1965 = vmatpush2.msra.mxu0 0.0
      %1966 = vmatprep.mubr.f32.mxu0 0.0
      %1967 = vmatmul.mubr.f32.gmra.mxu0 %v1900
      %v1968 = vpop.f32.mrf.mxu0
      %v1969 = vadd.f32 0.0, %v1968
      %v1970 = vpop.f32.mrf.mxu0
      %1971 = vdwg.mxu0
      %v1972 = vld [vmem:[%s9] sm:$0x1]
      %v1974 = vlaneseq
      %v1975 = vshrl.u32 %v1974, 7
      %v1976 = vsub.s32 0, %v1975
      %v1977 = vrot.slane %v1972, %v1976
      %v1979 = vmul.f32 %v1969, %v1977
      %v1980 = vld [vmem:[%s10] sm:$0x1]
      %v1982 = vlaneseq
      %v1983 = vshrl.u32 %v1982, 7
      %v1984 = vsub.s32 0, %v1983
      %v1985 = vrot.slane %v1980, %v1984
      %v1987 = vadd.f32 %v1979, %v1985
      %s1988 = scalar_lea.vmem %s428, 24
      %v1989 = vld [vmem:[%s1988] sm:$0xf]
      %v1990 = vunpack.c.l.bf16 %v1989
      %v1991 = vadd.f32 %v1987, %v1990
      %v1992 = vpack.c.bf16 %v1991, %v1991
      %s1993 = scalar_lea.vmem %s433, 24
      %1994 = vst.msk [vmem:[%s1993] sm:$0xf] %vm1417, %v1992
      %v1996 = vsel %vm1139, %v1319, 0
      %1998 = vmatprep.subr.mxu0 0.0
      %1999 = vmatpush1.msra.mxu0 0.0
      %2000 = vmatprep.subr.mxu0 0.0
      %2001 = vmatpush1.msra.mxu0 0.0
      %2002 = vmatprep.subr.mxu0 0.0
      %2003 = vmatpush1.msra.mxu0 0.0
      %2004 = vmatprep.subr.mxu0 0.0
      %2005 = vmatpush1.msra.mxu0 0.0
      %2006 = vmatprep.subr.mxu0 0.0
      %2007 = vmatpush1.msra.mxu0 0.0
      %2008 = vmatprep.subr.mxu0 0.0
      %2009 = vmatpush1.msra.mxu0 0.0
      %2010 = vmatprep.subr.mxu0 0.0
      %2011 = vmatpush1.msra.mxu0 0.0
      %2012 = vmatprep.subr.mxu0 0.0
      %2013 = vmatpush1.msra.mxu0 0.0
      %2014 = vmatprep.subr.mxu0 0.0
      %2015 = vmatpush1.msra.mxu0 0.0
      %2016 = vmatprep.subr.mxu0 0.0
      %2017 = vmatpush1.msra.mxu0 0.0
      %2018 = vmatprep.subr.mxu0 0.0
      %2019 = vmatpush1.msra.mxu0 0.0
      %2020 = vmatprep.subr.mxu0 0.0
      %2021 = vmatpush1.msra.mxu0 0.0
      %2022 = vmatprep.subr.mxu0 0.0
      %2023 = vmatpush1.msra.mxu0 0.0
      %2024 = vmatprep.subr.mxu0 0.0
      %2025 = vmatpush1.msra.mxu0 0.0
      %2026 = vmatprep.subr.mxu0 0.0
      %2027 = vmatpush1.msra.mxu0 %v1323
      %2028 = vmatprep.subr.mxu0 0.0
      %2029 = vmatpush1.msra.mxu0 %v1322
      %2030 = vmatprep.subr.mxu0 0.0
      %2031 = vmatpush2.msra.mxu0 0.0
      %2032 = vmatprep.subr.mxu0 0.0
      %2033 = vmatpush2.msra.mxu0 0.0
      %2034 = vmatprep.subr.mxu0 0.0
      %2035 = vmatpush2.msra.mxu0 0.0
      %2036 = vmatprep.subr.mxu0 0.0
      %2037 = vmatpush2.msra.mxu0 0.0
      %2038 = vmatprep.subr.mxu0 0.0
      %2039 = vmatpush2.msra.mxu0 0.0
      %2040 = vmatprep.subr.mxu0 0.0
      %2041 = vmatpush2.msra.mxu0 0.0
      %2042 = vmatprep.subr.mxu0 0.0
      %2043 = vmatpush2.msra.mxu0 0.0
      %2044 = vmatprep.subr.mxu0 0.0
      %2045 = vmatpush2.msra.mxu0 0.0
      %2046 = vmatprep.subr.mxu0 0.0
      %2047 = vmatpush2.msra.mxu0 0.0
      %2048 = vmatprep.subr.mxu0 0.0
      %2049 = vmatpush2.msra.mxu0 0.0
      %2050 = vmatprep.subr.mxu0 0.0
      %2051 = vmatpush2.msra.mxu0 0.0
      %2052 = vmatprep.subr.mxu0 0.0
      %2053 = vmatpush2.msra.mxu0 0.0
      %2054 = vmatprep.subr.mxu0 0.0
      %2055 = vmatpush2.msra.mxu0 0.0
      %2056 = vmatprep.subr.mxu0 0.0
      %2057 = vmatpush2.msra.mxu0 0.0
      %2058 = vmatprep.subr.mxu0 0.0
      %2059 = vmatpush2.msra.mxu0 0.0
      %2060 = vmatprep.subr.mxu0 0.0
      %2061 = vmatpush2.msra.mxu0 0.0
      %2062 = vmatprep.mubr.f32.mxu0 0.0
      %2063 = vmatmul.mubr.f32.gmra.mxu0 %v1996
      %v2064 = vpop.f32.mrf.mxu0
      %v2065 = vadd.f32 0.0, %v2064
      %v2066 = vpop.f32.mrf.mxu0
      %2067 = vdwg.mxu0
      %v2068 = vld [vmem:[%s9] sm:$0x1]
      %v2070 = vlaneseq
      %v2071 = vshrl.u32 %v2070, 7
      %v2072 = vsub.s32 0, %v2071
      %v2073 = vrot.slane %v2068, %v2072
      %v2075 = vmul.f32 %v2065, %v2073
      %v2076 = vld [vmem:[%s10] sm:$0x1]
      %v2078 = vlaneseq
      %v2079 = vshrl.u32 %v2078, 7
      %v2080 = vsub.s32 0, %v2079
      %v2081 = vrot.slane %v2076, %v2080
      %v2083 = vadd.f32 %v2075, %v2081
      %s2084 = scalar_lea.vmem %s428, 28
      %v2085 = vld [vmem:[%s2084] sm:$0xf]
      %v2086 = vunpack.c.l.bf16 %v2085
      %v2087 = vadd.f32 %v2083, %v2086
      %v2088 = vpack.c.bf16 %v2087, %v2087
      %s2089 = scalar_lea.vmem %s433, 28
      %2090 = vst.msk [vmem:[%s2089] sm:$0xf] %vm1417, %v2088
      %p2091 = scmp.lt.s32.totalorder %s23, 1
      %s2092 = scalar_select %p2091, %s23, 1
      %s2093 = smul.addr %s2092, 8
      %s2094 = smul.addr %s2093, 4
      %s2095 = scalar_lea.vmem %s12, %s2094
      // Predicated region
      $region69: #{mobilenet_v3_forward.6} parent=67 // pred_check
        %p2096 = pneg %p303
      $region70: #{mobilenet_v3_forward.6} parent=67 // pred_check_branch
        %2098 = sbr.rel (%p2096) target = $region72
      $region71: #{mobilenet_v3_forward.6} parent=67 // pred_region
        _
      $region72: #{mobilenet_v3_forward.6} parent=67 // pred_fallthru
        _
    $region68: #{mobilenet_v3_forward.6} parent=5 // pred_fallthru
      _
    %p2099 = scmp.le.s32.totalorder 2, %s18
    // Predicated region
    $region73: #{mobilenet_v3_forward.6} parent=5 // pred_check
      %p2100 = pneg %p2099
    $region74: #{mobilenet_v3_forward.6} parent=5 // pred_check_branch
      %2102 = sbr.rel (%p2100) target = $region76
    $region75: #{mobilenet_v3_forward.6} parent=5 // pred_region
      %s2103 = ssub.s32 %s18, 2
      // Predicated region
      $region77: #{mobilenet_v3_forward.6} parent=75 // pred_check
        %p2104 = pneg %p309
      $region78: #{mobilenet_v3_forward.6} parent=75 // pred_check_branch
        %2106 = sbr.rel (%p2104) target = $region80
      $region79: #{mobilenet_v3_forward.6} parent=75 // pred_region
        %p2107 = scmp.lt.s32.totalorder %s24, 1
        %s2108 = scalar_select %p2107, %s24, 1
        %s2109 = smul.addr %s2108, 8
        %s2110 = smul.addr %s2109, 4
        %s2111 = scalar_lea.vmem %s12, %s2110
      $region80: #{mobilenet_v3_forward.6} parent=75 // pred_fallthru
        _
    $region76: #{mobilenet_v3_forward.6} parent=5 // pred_fallthru
      _
  $region6: #{mobilenet_v3_forward.6} parent=0 // loop_footer
    %s22 = sadd.s32 1, %s18
  $region7: #{mobilenet_v3_forward.6} parent=0 // loop_footer_branch
    %17 = sbr.rel target = $region3
  $region8: #{mobilenet_v3_forward.6} parent=0 // loop_exit
    _

// kernel: mobilenet_v3_forward.9
$region0: #{mobilenet_v3_forward.9}
  #allocation0 [shape = 'u32[]', space=smem, size = 0x4, offset = 0x4, fixed_abs, tag = 'smem constant byte address 0x4 - core index']
  #allocation1 [shape = 'u32[144,128]{1,0:T(1,128)}', space=vmem, size = 0x12000, scoped, tag = 'internal scratch']
  %s0 = inlined_call_operand.vmem [shape: bf16[2,16,24], index: 0, kind: input, shape index: {}]
  %s1 = inlined_call_operand.vmem [shape: bf16[24,144], index: 1, kind: input, shape index: {}]
  %s2 = inlined_call_operand.vmem [shape: f32[1,144], index: 2, kind: input, shape index: {}]
  %s3 = inlined_call_operand.vmem [shape: f32[1,144], index: 3, kind: input, shape index: {}]
  %s4 = inlined_call_operand.vmem [shape: bf16[144,64], index: 4, kind: input, shape index: {}]
  %s5 = inlined_call_operand.vmem [shape: f32[1,64], index: 5, kind: input, shape index: {}]
  %s6 = inlined_call_operand.vmem [shape: bf16[64,10], index: 6, kind: input, shape index: {}]
  %s7 = inlined_call_operand.vmem [shape: f32[1,10], index: 7, kind: input, shape index: {}]
  %s8 = inlined_call_operand.hbm [shape: f32[2,1,10], index: 8, kind: output, shape index: {}]
  %s9 = sld [smem:[#allocation0]]
  $region65: #{mobilenet_v3_forward.9} parent=0
    _
  %s11 = ssub.s32 1, %s9
  %s12 = scalar_select 0, %s11, %s9
  $region1: #{mobilenet_v3_forward.9} parent=0
    #allocation2 [shape = 'u8[1024]{0}', space=vmem, size = 0x400, scoped, tag = 'output window, operand 0']
    #allocation3 [shape = 's32[2]{0}', space=sflag, size = 0x8, scoped, tag = 'scoped memory for mobilenet_v3_forward.9']
    %13 = vsyncpa [#allocation3], 0
    %s14 = scalar_lea.sflag [#allocation3], 1
    %15 = vsyncpa %s14, 0
    loop: start=0, step=1, limit=4
    $region2: #{mobilenet_v3_forward.9} parent=1 // loop_pre_header
      _
    $region3: #{mobilenet_v3_forward.9} parent=1 // loop_header
      %s17 = sphi 0, %s21
      %p18 = scmp.ge.s32.totalorder %s17, 4
      %s27 = sphi 0, %s29
      %s30 = sphi 0, %s27
      %s31 = sphi 0, %s30
      %s47 = sphi 0, %s31
      %s51 = sphi 0, %s51
      %s53 = sphi 0, %s51
      %s54 = sphi 0, %s53
      %s68 = sphi 0, %s54
      %s72 = sphi 0, %s72
      %s74 = sphi 0, %s72
      %s75 = sphi 0, %s74
      %s89 = sphi 0, %s75
      %s93 = sphi 0, %s93
      %s95 = sphi 0, %s93
      %s96 = sphi 0, %s95
      %s110 = sphi 0, %s96
      %s114 = sphi 0, %s114
      %s116 = sphi 0, %s114
      %s117 = sphi 0, %s116
      %s131 = sphi 0, %s117
      %s135 = sphi 0, %s135
      %s137 = sphi 0, %s135
      %s138 = sphi 0, %s137
      %s152 = sphi 0, %s138
      %s156 = sphi 0, %s156
      %s158 = sphi 0, %s156
      %s159 = sphi 0, %s158
      %s173 = sphi 0, %s159
      %s177 = sphi 0, %s177
      %s179 = sphi 0, %s177
      %s180 = sphi 0, %s179
      %s194 = sphi 0, %s180
      %s200 = sphi 0, %s202
      %s203 = sphi 0, %s200
      %s204 = sphi 0, %s203
      %s220 = sphi 0, %s204
    $region4: #{mobilenet_v3_forward.9} parent=1 // loop_header_branch
      %20 = sbr.rel (%p18) target = $region8
    $region5: #{mobilenet_v3_forward.9} parent=1 // loop_body
      %s22 = ssub.s32 %s17, 1
      %s23 = ssub.s32 %s17, 2
      %s24 = sadd.s32 %s17, 1
      %s25 = ssub.s32 %s17, %s24
      %p26 = scmp.eq.s32.totalorder %s25, 0
      %s28 = sadd.s32 %s27, 1
      %s29 = scalar_select %p26, %s27, %s28
      %p32 = pneg %p26
      %p33 = scmp.eq.s32.totalorder %s17, 1
      %p34 = por %p32, %p33
      %p35 = scmp.ne.s32.totalorder %s27, %s30
      %p36 = scmp.eq.s32.totalorder %s17, 0
      %p37 = por %p35, %p36
      %p38 = scmp.ne.s32.totalorder %s27, %s30
      %p39 = scmp.eq.s32.totalorder %s22, 1
      %p40 = por %p38, %p39
      %p41 = scmp.ne.s32.totalorder %s30, %s31
      %p42 = scmp.eq.s32.totalorder %s22, 0
      %p43 = por %p41, %p42
      %p44 = scmp.ne.s32.totalorder %s30, %s31
      %p45 = scmp.eq.s32.totalorder %s23, 1
      %p46 = por %p44, %p45
      %p48 = scmp.ne.s32.totalorder %s31, %s47
      %p49 = scmp.eq.s32.totalorder %s23, 0
      %p50 = por %p48, %p49
      %s52 = sadd.s32 %s51, 1
      %p55 = scmp.eq.s32.totalorder %s17, 1
      %p56 = scmp.ne.s32.totalorder %s51, %s53
      %p57 = scmp.eq.s32.totalorder %s17, 0
      %p58 = por %p56, %p57
      %p59 = scmp.ne.s32.totalorder %s51, %s53
      %p60 = scmp.eq.s32.totalorder %s22, 1
      %p61 = por %p59, %p60
      %p62 = scmp.ne.s32.totalorder %s53, %s54
      %p63 = scmp.eq.s32.totalorder %s22, 0
      %p64 = por %p62, %p63
      %p65 = scmp.ne.s32.totalorder %s53, %s54
      %p66 = scmp.eq.s32.totalorder %s23, 1
      %p67 = por %p65, %p66
      %p69 = scmp.ne.s32.totalorder %s54, %s68
      %p70 = scmp.eq.s32.totalorder %s23, 0
      %p71 = por %p69, %p70
      %s73 = sadd.s32 %s72, 1
      %p76 = scmp.eq.s32.totalorder %s17, 1
      %p77 = scmp.ne.s32.totalorder %s72, %s74
      %p78 = scmp.eq.s32.totalorder %s17, 0
      %p79 = por %p77, %p78
      %p80 = scmp.ne.s32.totalorder %s72, %s74
      %p81 = scmp.eq.s32.totalorder %s22, 1
      %p82 = por %p80, %p81
      %p83 = scmp.ne.s32.totalorder %s74, %s75
      %p84 = scmp.eq.s32.totalorder %s22, 0
      %p85 = por %p83, %p84
      %p86 = scmp.ne.s32.totalorder %s74, %s75
      %p87 = scmp.eq.s32.totalorder %s23, 1
      %p88 = por %p86, %p87
      %p90 = scmp.ne.s32.totalorder %s75, %s89
      %p91 = scmp.eq.s32.totalorder %s23, 0
      %p92 = por %p90, %p91
      %s94 = sadd.s32 %s93, 1
      %p97 = scmp.eq.s32.totalorder %s17, 1
      %p98 = scmp.ne.s32.totalorder %s93, %s95
      %p99 = scmp.eq.s32.totalorder %s17, 0
      %p100 = por %p98, %p99
      %p101 = scmp.ne.s32.totalorder %s93, %s95
      %p102 = scmp.eq.s32.totalorder %s22, 1
      %p103 = por %p101, %p102
      %p104 = scmp.ne.s32.totalorder %s95, %s96
      %p105 = scmp.eq.s32.totalorder %s22, 0
      %p106 = por %p104, %p105
      %p107 = scmp.ne.s32.totalorder %s95, %s96
      %p108 = scmp.eq.s32.totalorder %s23, 1
      %p109 = por %p107, %p108
      %p111 = scmp.ne.s32.totalorder %s96, %s110
      %p112 = scmp.eq.s32.totalorder %s23, 0
      %p113 = por %p111, %p112
      %s115 = sadd.s32 %s114, 1
      %p118 = scmp.eq.s32.totalorder %s17, 1
      %p119 = scmp.ne.s32.totalorder %s114, %s116
      %p120 = scmp.eq.s32.totalorder %s17, 0
      %p121 = por %p119, %p120
      %p122 = scmp.ne.s32.totalorder %s114, %s116
      %p123 = scmp.eq.s32.totalorder %s22, 1
      %p124 = por %p122, %p123
      %p125 = scmp.ne.s32.totalorder %s116, %s117
      %p126 = scmp.eq.s32.totalorder %s22, 0
      %p127 = por %p125, %p126
      %p128 = scmp.ne.s32.totalorder %s116, %s117
      %p129 = scmp.eq.s32.totalorder %s23, 1
      %p130 = por %p128, %p129
      %p132 = scmp.ne.s32.totalorder %s117, %s131
      %p133 = scmp.eq.s32.totalorder %s23, 0
      %p134 = por %p132, %p133
      %s136 = sadd.s32 %s135, 1
      %p139 = scmp.eq.s32.totalorder %s17, 1
      %p140 = scmp.ne.s32.totalorder %s135, %s137
      %p141 = scmp.eq.s32.totalorder %s17, 0
      %p142 = por %p140, %p141
      %p143 = scmp.ne.s32.totalorder %s135, %s137
      %p144 = scmp.eq.s32.totalorder %s22, 1
      %p145 = por %p143, %p144
      %p146 = scmp.ne.s32.totalorder %s137, %s138
      %p147 = scmp.eq.s32.totalorder %s22, 0
      %p148 = por %p146, %p147
      %p149 = scmp.ne.s32.totalorder %s137, %s138
      %p150 = scmp.eq.s32.totalorder %s23, 1
      %p151 = por %p149, %p150
      %p153 = scmp.ne.s32.totalorder %s138, %s152
      %p154 = scmp.eq.s32.totalorder %s23, 0
      %p155 = por %p153, %p154
      %s157 = sadd.s32 %s156, 1
      %p160 = scmp.eq.s32.totalorder %s17, 1
      %p161 = scmp.ne.s32.totalorder %s156, %s158
      %p162 = scmp.eq.s32.totalorder %s17, 0
      %p163 = por %p161, %p162
      %p164 = scmp.ne.s32.totalorder %s156, %s158
      %p165 = scmp.eq.s32.totalorder %s22, 1
      %p166 = por %p164, %p165
      %p167 = scmp.ne.s32.totalorder %s158, %s159
      %p168 = scmp.eq.s32.totalorder %s22, 0
      %p169 = por %p167, %p168
      %p170 = scmp.ne.s32.totalorder %s158, %s159
      %p171 = scmp.eq.s32.totalorder %s23, 1
      %p172 = por %p170, %p171
      %p174 = scmp.ne.s32.totalorder %s159, %s173
      %p175 = scmp.eq.s32.totalorder %s23, 0
      %p176 = por %p174, %p175
      %s178 = sadd.s32 %s177, 1
      %p181 = scmp.eq.s32.totalorder %s17, 1
      %p182 = scmp.ne.s32.totalorder %s177, %s179
      %p183 = scmp.eq.s32.totalorder %s17, 0
      %p184 = por %p182, %p183
      %p185 = scmp.ne.s32.totalorder %s177, %s179
      %p186 = scmp.eq.s32.totalorder %s22, 1
      %p187 = por %p185, %p186
      %p188 = scmp.ne.s32.totalorder %s179, %s180
      %p189 = scmp.eq.s32.totalorder %s22, 0
      %p190 = por %p188, %p189
      %p191 = scmp.ne.s32.totalorder %s179, %s180
      %p192 = scmp.eq.s32.totalorder %s23, 1
      %p193 = por %p191, %p192
      %p195 = scmp.ne.s32.totalorder %s180, %s194
      %p196 = scmp.eq.s32.totalorder %s23, 0
      %p197 = por %p195, %p196
      %s198 = ssub.s32 %s17, %s24
      %p199 = scmp.eq.s32.totalorder %s198, 0
      %s201 = sadd.s32 %s200, 1
      %s202 = scalar_select %p199, %s200, %s201
      %p205 = pneg %p199
      %p206 = scmp.eq.s32.totalorder %s17, 1
      %p207 = por %p205, %p206
      %p208 = scmp.ne.s32.totalorder %s200, %s203
      %p209 = scmp.eq.s32.totalorder %s17, 0
      %p210 = por %p208, %p209
      %p211 = scmp.ne.s32.totalorder %s200, %s203
      %p212 = scmp.eq.s32.totalorder %s22, 1
      %p213 = por %p211, %p212
      %p214 = scmp.ne.s32.totalorder %s203, %s204
      %p215 = scmp.eq.s32.totalorder %s22, 0
      %p216 = por %p214, %p215
      %p217 = scmp.ne.s32.totalorder %s203, %s204
      %p218 = scmp.eq.s32.totalorder %s23, 1
      %p219 = por %p217, %p218
      %p221 = scmp.ne.s32.totalorder %s204, %s220
      %p222 = scmp.eq.s32.totalorder %s23, 0
      %p223 = por %p221, %p222
      %p224 = scmp.le.s32.totalorder 1, %s17
      %p225 = scmp.lt.s32.totalorder %s17, 3
      %p226 = pnand %p224, %p225
      %p227 = pneg %p226
      // Predicated region
      $region9: #{mobilenet_v3_forward.9} parent=5 // pred_check
        _
      $region10: #{mobilenet_v3_forward.9} parent=5 // pred_check_branch
        %229 = sbr.rel (%p226) target = $region12
      $region11: #{mobilenet_v3_forward.9} parent=5 // pred_region
        %s230 = ssub.s32 %s17, 1
        // Predicated region
        $region13: #{mobilenet_v3_forward.9} parent=11 // pred_check
          %p231 = pneg %p64
        $region14: #{mobilenet_v3_forward.9} parent=11 // pred_check_branch
          %233 = sbr.rel (%p231) target = $region16
        $region15: #{mobilenet_v3_forward.9} parent=11 // pred_region
          _
        $region16: #{mobilenet_v3_forward.9} parent=11 // pred_fallthru
          _
        // Predicated region
        $region17: #{mobilenet_v3_forward.9} parent=11 // pred_check
          %p234 = pneg %p85
        $region18: #{mobilenet_v3_forward.9} parent=11 // pred_check_branch
          %236 = sbr.rel (%p234) target = $region20
        $region19: #{mobilenet_v3_forward.9} parent=11 // pred_region
          _
        $region20: #{mobilenet_v3_forward.9} parent=11 // pred_fallthru
          _
        // Predicated region
        $region21: #{mobilenet_v3_forward.9} parent=11 // pred_check
          %p237 = pneg %p106
        $region22: #{mobilenet_v3_forward.9} parent=11 // pred_check_branch
          %239 = sbr.rel (%p237) target = $region24
        $region23: #{mobilenet_v3_forward.9} parent=11 // pred_region
          _
        $region24: #{mobilenet_v3_forward.9} parent=11 // pred_fallthru
          _
        // Predicated region
        $region25: #{mobilenet_v3_forward.9} parent=11 // pred_check
          %p240 = pneg %p127
        $region26: #{mobilenet_v3_forward.9} parent=11 // pred_check_branch
          %242 = sbr.rel (%p240) target = $region28
        $region27: #{mobilenet_v3_forward.9} parent=11 // pred_region
          _
        $region28: #{mobilenet_v3_forward.9} parent=11 // pred_fallthru
          _
        // Predicated region
        $region29: #{mobilenet_v3_forward.9} parent=11 // pred_check
          %p243 = pneg %p148
        $region30: #{mobilenet_v3_forward.9} parent=11 // pred_check_branch
          %245 = sbr.rel (%p243) target = $region32
        $region31: #{mobilenet_v3_forward.9} parent=11 // pred_region
          _
        $region32: #{mobilenet_v3_forward.9} parent=11 // pred_fallthru
          _
        // Predicated region
        $region33: #{mobilenet_v3_forward.9} parent=11 // pred_check
          %p246 = pneg %p169
        $region34: #{mobilenet_v3_forward.9} parent=11 // pred_check_branch
          %248 = sbr.rel (%p246) target = $region36
        $region35: #{mobilenet_v3_forward.9} parent=11 // pred_region
          _
        $region36: #{mobilenet_v3_forward.9} parent=11 // pred_fallthru
          _
        // Predicated region
        $region37: #{mobilenet_v3_forward.9} parent=11 // pred_check
          %p249 = pneg %p190
        $region38: #{mobilenet_v3_forward.9} parent=11 // pred_check_branch
          %251 = sbr.rel (%p249) target = $region40
        $region39: #{mobilenet_v3_forward.9} parent=11 // pred_region
          _
        $region40: #{mobilenet_v3_forward.9} parent=11 // pred_fallthru
          _
      $region12: #{mobilenet_v3_forward.9} parent=5 // pred_fallthru
        _
      %p252 = scmp.lt.s32.totalorder %s17, 2
      // Predicated region
      $region41: #{mobilenet_v3_forward.9} parent=5 // pred_check
        %p253 = pneg %p252
      $region42: #{mobilenet_v3_forward.9} parent=5 // pred_check_branch
        %255 = sbr.rel (%p253) target = $region44
      $region43: #{mobilenet_v3_forward.9} parent=5 // pred_region
        // Predicated region
        $region45: #{mobilenet_v3_forward.9} parent=43 // pred_check
          %p256 = pneg %p37
        $region46: #{mobilenet_v3_forward.9} parent=43 // pred_check_branch
          %258 = sbr.rel (%p256) target = $region48
        $region47: #{mobilenet_v3_forward.9} parent=43 // pred_region
          %p259 = scmp.lt.s32.totalorder %s17, 1
          %s260 = scalar_select %p259, %s17, 1
          %s261 = smul.addr %s260, 2
          %s262 = smul.addr %s261, 4
          %s263 = scalar_lea.vmem %s0, %s262
        $region48: #{mobilenet_v3_forward.9} parent=43 // pred_fallthru
          _
      $region44: #{mobilenet_v3_forward.9} parent=5 // pred_fallthru
        _
      %p264 = scmp.le.s32.totalorder 1, %s17
      %p265 = scmp.lt.s32.totalorder %s17, 3
      %p266 = pnand %p264, %p265
      %p267 = pneg %p266
      // Predicated region
      $region49: #{mobilenet_v3_forward.9} parent=5 // pred_check
        _
      $region50: #{mobilenet_v3_forward.9} parent=5 // pred_check_branch
        %269 = sbr.rel (%p266) target = $region52
      $region51: #{mobilenet_v3_forward.9} parent=5 // pred_region
        %s270 = ssub.s32 %s17, 1
        %p271 = scmp.lt.s32.totalorder %s22, 1
        %s272 = scalar_select %p271, %s22, 1
        %s273 = smul.addr %s272, 2
        %s274 = smul.addr %s273, 4
        %s275 = scalar_lea.vmem %s0, %s274
        %p276 = pneg %p43
        %p277 = pneg %p40
        %p278 = pneg %p64
        %p279 = pneg %p61
        %p280 = pneg %p85
        %p281 = pneg %p82
        %p282 = pneg %p106
        %p283 = pneg %p103
        %p284 = pneg %p127
        %p285 = pneg %p124
        %p286 = pneg %p148
        %p287 = pneg %p145
        %p288 = pneg %p169
        %p289 = pneg %p166
        %p290 = pneg %p190
        %p291 = pneg %p187
        %p292 = pneg %p216
        %p293 = pneg %p213
        %s294 = sand.u32 %s203, 1
        %s295 = scalar_lea.sflag [#allocation3], %s294
        %s296 = sand.u32 %s203, 1
        %s297 = scalar_lea.vmem [#allocation2], %s296
        %p298 = scmp.lt.s32.totalorder %s22, 1
        %s299 = scalar_select %p298, %s22, 1
        %s300 = smul.addr %s299, 2
        %s301 = smul.addr %s300, 4
        %s302 = scalar_lea.vmem %s0, %s301
        %v304 = vld [vmem:[%s302] sm:$0xf]
        %v305 = vld [vmem:[%s302 + $0x4] sm:$0xf]
        %v306 = vld [vmem:[%s1] sm:$0xff]
        %v307 = vld [vmem:[%s1 + $0x8] sm:$0xff]
        %v308 = vld [vmem:[%s1 + $0x10] sm:$0xff]
        %v311 = vunpack.c.l.b16 %v304
        %v312 = vunpack.c.l.b16 %v305
        %v313 = vpack.c.b16 %v312, %v311
        %v317 = vunpack.c.l.b16 %v306
        %v318 = vunpack.c.h.b16 %v306
        %v319 = vunpack.c.l.b16 %v307
        %v320 = vunpack.c.h.b16 %v307
        %v321 = vunpack.c.l.b16 %v308
        %v322 = vunpack.c.h.b16 %v308
        %v323 = vpack.c.b16 %v319, %v317
        %v324 = vpack.c.b16 %v320, %v318
        %v325 = vpack.c.b16 %v321, %v321
        %v326 = vpack.c.b16 %v322, %v322
        %vm329 = vcmask 195584
        %v331 = vsel %vm329, %v313, 0
        %vm333 = vcmask 1043456
        %v335 = vsel %vm333, %v325, 0
        %v338 = vsel %vm333, %v326, 0
        %340 = vmatprep.subr.bf16.mxu0 0
        %341 = vmatpush1.bf16.msra.mxu0 0
        %342 = vmatprep.subr.bf16.mxu0 0
        %343 = vmatpush1.bf16.msra.mxu0 0
        %344 = vmatprep.subr.bf16.mxu0 0
        %345 = vmatpush1.bf16.msra.mxu0 0
        %346 = vmatprep.subr.bf16.mxu0 0
        %347 = vmatpush1.bf16.msra.mxu0 0
        %348 = vmatprep.subr.bf16.mxu0 0
        %349 = vmatpush1.bf16.msra.mxu0 0
        %350 = vmatprep.subr.bf16.mxu0 0
        %351 = vmatpush1.bf16.msra.mxu0 0
        %352 = vmatprep.subr.bf16.mxu0 %v338
        %353 = vmatpush1.bf16.msra.mxu0 %v335
        %354 = vmatprep.subr.bf16.mxu0 %v324
        %355 = vmatpush1.bf16.msra.mxu0 %v323
        %356 = vmatprep.subr.bf16.mxu0 0
        %357 = vmatpush2.bf16.msra.mxu0 0
        %358 = vmatprep.subr.bf16.mxu0 0
        %359 = vmatpush2.bf16.msra.mxu0 0
        %360 = vmatprep.subr.bf16.mxu0 0
        %361 = vmatpush2.bf16.msra.mxu0 0
        %362 = vmatprep.subr.bf16.mxu0 0
        %363 = vmatpush2.bf16.msra.mxu0 0
        %364 = vmatprep.subr.bf16.mxu0 0
        %365 = vmatpush2.bf16.msra.mxu0 0
        %366 = vmatprep.subr.bf16.mxu0 0
        %367 = vmatpush2.bf16.msra.mxu0 0
        %368 = vmatprep.subr.bf16.mxu0 0
        %369 = vmatpush2.bf16.msra.mxu0 0
        %370 = vmatprep.subr.bf16.mxu0 0
        %371 = vmatpush2.bf16.msra.mxu0 0
        %372 = vmatprep.mubr.bf16.mxu0 0
        %373 = vmatmul.mubr.bf16.gmra.mxu0 %v331
        %v374 = vpop.f32.mrf.mxu0
        %v375 = vadd.f32 0.0, %v374
        %v376 = vpop.f32.mrf.mxu0
        %v377 = vadd.f32 0.0, %v376
        %v378 = vpop.f32.mrf.mxu0
        %v379 = vadd.f32 0.0, %v378
        %v380 = vpop.f32.mrf.mxu0
        %v381 = vadd.f32 0.0, %v380
        %382 = vdwg.mxu0
        %v383 = vld [vmem:[%s2] sm:$0x3]
        %v385 = vlaneseq
        %v386 = vshrl.u32 %v385, 7
        %v387 = vsub.s32 0, %v386
        %v388 = vrot.slane %v383, %v387
        %v389 = vlaneseq
        %v390 = vshrl.u32 %v389, 7
        %v391 = vsub.s32 1, %v390
        %v392 = vrot.slane %v383, %v391
        %v395 = vmul.f32 %v375, %v388
        %v396 = vmul.f32 %v377, %v392
        %v397 = vmul.f32 %v379, %v388
        %v398 = vmul.f32 %v381, %v392
        %v399 = vld [vmem:[%s3] sm:$0x3]
        %v401 = vlaneseq
        %v402 = vshrl.u32 %v401, 7
        %v403 = vsub.s32 0, %v402
        %v404 = vrot.slane %v399, %v403
        %v405 = vlaneseq
        %v406 = vshrl.u32 %v405, 7
        %v407 = vsub.s32 1, %v406
        %v408 = vrot.slane %v399, %v407
        %v411 = vadd.f32 %v395, %v404
        %v412 = vadd.f32 %v396, %v408
        %v413 = vadd.f32 %v397, %v404
        %v414 = vadd.f32 %v398, %v408
        %v415 = vadd.f32 %v411, 3.0
        %v416 = vadd.f32 %v412, 3.0
        %v417 = vadd.f32 %v413, 3.0
        %v418 = vadd.f32 %v414, 3.0
        %v419 = vmax.f32 %v415, 0.0
        %v420 = vmax.f32 %v416, 0.0
        %v421 = vmax.f32 %v417, 0.0
        %v422 = vmax.f32 %v418, 0.0
        %v423 = vmin.f32 %v419, 6.0
        %v424 = vmin.f32 %v420, 6.0
        %v425 = vmin.f32 %v421, 6.0
        %v426 = vmin.f32 %v422, 6.0
        %v427 = vmul.f32 %v411, %v423
        %v428 = vmul.f32 %v412, %v424
        %v429 = vmul.f32 %v413, %v425
        %v430 = vmul.f32 %v414, %v426
        %v431 = vmul.f32 %v427, 0.16666667
        %v432 = vmul.f32 %v428, 0.16666667
        %v433 = vmul.f32 %v429, 0.16666667
        %v434 = vmul.f32 %v430, 0.16666667
        %v435 = vadd.f32 %v431, %v433
        %v436 = vrot.slane %v435, 4
        %v437 = vadd.f32 %v435, %v436
        %v438 = vrot.slane %v437, 2
        %v439 = vadd.f32 %v437, %v438
        %v440 = vrot.slane %v439, 1
        %v441 = vadd.f32 %v439, %v440
        %vm442 = vcmask 130048
        %v443 = vsel %vm442, %v432, 0.0
        %v444 = vsel %vm442, %v434, 0.0
        %v445 = vadd.f32 %v443, %v444
        %v446 = vrot.slane %v445, 4
        %v447 = vadd.f32 %v445, %v446
        %v448 = vrot.slane %v447, 2
        %v449 = vadd.f32 %v447, %v448
        %v450 = vrot.slane %v449, 1
        %v451 = vadd.f32 %v449, %v450
        %v452 = vmul.f32 %v441, 0.0625
        %v453 = vmul.f32 %v451, 0.0625
        %v454 = vld [vmem:[%s4] sm:$0xf]
        %v455 = vld [vmem:[%s4 + $0x4] sm:$0xf]
        %v456 = vld [vmem:[%s4 + $0x8] sm:$0xf]
        %v457 = vld [vmem:[%s4 + $0xc] sm:$0xf]
        %v458 = vld [vmem:[%s4 + $0x10] sm:$0xf]
        %v459 = vld [vmem:[%s4 + $0x14] sm:$0xf]
        %v460 = vld [vmem:[%s4 + $0x18] sm:$0xf]
        %v461 = vld [vmem:[%s4 + $0x1c] sm:$0xf]
        %v462 = vld [vmem:[%s4 + $0x20] sm:$0xf]
        %v463 = vld [vmem:[%s4 + $0x24] sm:$0xf]
        %v464 = vld [vmem:[%s4 + $0x28] sm:$0xf]
        %v465 = vld [vmem:[%s4 + $0x2c] sm:$0xf]
        %v466 = vld [vmem:[%s4 + $0x30] sm:$0xf]
        %v467 = vld [vmem:[%s4 + $0x34] sm:$0xf]
        %v468 = vld [vmem:[%s4 + $0x38] sm:$0xf]
        %v469 = vld [vmem:[%s4 + $0x3c] sm:$0xf]
        %v470 = vld [vmem:[%s4 + $0x40] sm:$0xf]
        %v471 = vld [vmem:[%s4 + $0x44] sm:$0xf]
        %v472 = vunpack.c.l.bf16 %v454
        %v473 = vunpack.c.l.bf16 %v455
        %v474 = vunpack.c.l.bf16 %v456
        %v475 = vunpack.c.l.bf16 %v457
        %v476 = vunpack.c.l.bf16 %v458
        %v477 = vunpack.c.l.bf16 %v459
        %v478 = vunpack.c.l.bf16 %v460
        %v479 = vunpack.c.l.bf16 %v461
        %v480 = vunpack.c.l.bf16 %v462
        %v481 = vunpack.c.l.bf16 %v463
        %v482 = vunpack.c.l.bf16 %v464
        %v483 = vunpack.c.l.bf16 %v465
        %v484 = vunpack.c.l.bf16 %v466
        %v485 = vunpack.c.l.bf16 %v467
        %v486 = vunpack.c.l.bf16 %v468
        %v487 = vunpack.c.l.bf16 %v469
        %v488 = vunpack.c.l.bf16 %v470
        %v489 = vunpack.c.l.bf16 %v471
        %v490 = vld [vmem:[%s5] sm:$0x1]
        %v492 = vsel %vm442, %v453, 0
        %494 = vmatprep.subr.mxu0 0.0
        %495 = vmatpush1.msra.mxu0 %v487
        %496 = vmatprep.subr.mxu0 0.0
        %497 = vmatpush1.msra.mxu0 %v486
        %498 = vmatprep.subr.mxu0 0.0
        %499 = vmatpush1.msra.mxu0 %v485
        %500 = vmatprep.subr.mxu0 0.0
        %501 = vmatpush1.msra.mxu0 %v484
        %502 = vmatprep.subr.mxu0 0.0
        %503 = vmatpush1.msra.mxu0 %v483
        %504 = vmatprep.subr.mxu0 0.0
        %505 = vmatpush1.msra.mxu0 %v482
        %506 = vmatprep.subr.mxu0 0.0
        %507 = vmatpush1.msra.mxu0 %v481
        %508 = vmatprep.subr.mxu0 0.0
        %509 = vmatpush1.msra.mxu0 %v480
        %510 = vmatprep.subr.mxu0 0.0
        %511 = vmatpush1.msra.mxu0 %v479
        %512 = vmatprep.subr.mxu0 0.0
        %513 = vmatpush1.msra.mxu0 %v478
        %514 = vmatprep.subr.mxu0 0.0
        %515 = vmatpush1.msra.mxu0 %v477
        %516 = vmatprep.subr.mxu0 0.0
        %517 = vmatpush1.msra.mxu0 %v476
        %518 = vmatprep.subr.mxu0 0.0
        %519 = vmatpush1.msra.mxu0 %v475
        %520 = vmatprep.subr.mxu0 0.0
        %521 = vmatpush1.msra.mxu0 %v474
        %522 = vmatprep.subr.mxu0 0.0
        %523 = vmatpush1.msra.mxu0 %v473
        %524 = vmatprep.subr.mxu0 0.0
        %525 = vmatpush1.msra.mxu0 %v472
        %526 = vmatprep.subr.mxu0 0.0
        %527 = vmatpush2.msra.mxu0 0.0
        %528 = vmatprep.subr.mxu0 0.0
        %529 = vmatpush2.msra.mxu0 0.0
        %530 = vmatprep.subr.mxu0 0.0
        %531 = vmatpush2.msra.mxu0 0.0
        %532 = vmatprep.subr.mxu0 0.0
        %533 = vmatpush2.msra.mxu0 0.0
        %534 = vmatprep.subr.mxu0 0.0
        %535 = vmatpush2.msra.mxu0 0.0
        %536 = vmatprep.subr.mxu0 0.0
        %537 = vmatpush2.msra.mxu0 0.0
        %538 = vmatprep.subr.mxu0 0.0
        %539 = vmatpush2.msra.mxu0 0.0
        %540 = vmatprep.subr.mxu0 0.0
        %541 = vmatpush2.msra.mxu0 0.0
        %542 = vmatprep.subr.mxu0 0.0
        %543 = vmatpush2.msra.mxu0 0.0
        %544 = vmatprep.subr.mxu0 0.0
        %545 = vmatpush2.msra.mxu0 0.0
        %546 = vmatprep.subr.mxu0 0.0
        %547 = vmatpush2.msra.mxu0 0.0
        %548 = vmatprep.subr.mxu0 0.0
        %549 = vmatpush2.msra.mxu0 0.0
        %550 = vmatprep.subr.mxu0 0.0
        %551 = vmatpush2.msra.mxu0 0.0
        %552 = vmatprep.subr.mxu0 0.0
        %553 = vmatpush2.msra.mxu0 0.0
        %554 = vmatprep.subr.mxu0 0.0
        %555 = vmatpush2.msra.mxu0 %v489
        %556 = vmatprep.subr.mxu0 0.0
        %557 = vmatpush2.msra.mxu0 %v488
        %558 = vmatprep.mubr.f32.mxu0 %v492
        %559 = vmatmul.mubr.f32.gmra.mxu0 %v452
        %v560 = vpop.f32.mrf.mxu0
        %v561 = vadd.f32 %v490, %v560
        %v562 = vpop.f32.mrf.mxu0
        %563 = vdwg.mxu0
        %v564 = vadd.f32 %v561, 3.0
        %v565 = vmax.f32 %v564, 0.0
        %v566 = vmin.f32 %v565, 6.0
        %v567 = vmul.f32 %v561, %v566
        %v568 = vmul.f32 %v567, 0.16666667
        %v569 = vld [vmem:[%s6] sm:$0xf]
        %v570 = vld [vmem:[%s6 + $0x4] sm:$0xf]
        %v571 = vld [vmem:[%s6 + $0x8] sm:$0xf]
        %v572 = vld [vmem:[%s6 + $0xc] sm:$0xf]
        %v573 = vld [vmem:[%s6 + $0x10] sm:$0xf]
        %v574 = vld [vmem:[%s6 + $0x14] sm:$0xf]
        %v575 = vld [vmem:[%s6 + $0x18] sm:$0xf]
        %v576 = vld [vmem:[%s6 + $0x1c] sm:$0xf]
        %v577 = vunpack.c.l.bf16 %v569
        %v578 = vunpack.c.l.bf16 %v570
        %v579 = vunpack.c.l.bf16 %v571
        %v580 = vunpack.c.l.bf16 %v572
        %v581 = vunpack.c.l.bf16 %v573
        %v582 = vunpack.c.l.bf16 %v574
        %v583 = vunpack.c.l.bf16 %v575
        %v584 = vunpack.c.l.bf16 %v576
        %v585 = vld [vmem:[%s7] sm:$0x1]
        %vm586 = vcmask 523264
        %v588 = vsel %vm586, %v568, 0
        %590 = vmatprep.subr.mxu0 0.0
        %591 = vmatpush1.msra.mxu0 0.0
        %592 = vmatprep.subr.mxu0 0.0
        %593 = vmatpush1.msra.mxu0 0.0
        %594 = vmatprep.subr.mxu0 0.0
        %595 = vmatpush1.msra.mxu0 0.0
        %596 = vmatprep.subr.mxu0 0.0
        %597 = vmatpush1.msra.mxu0 0.0
        %598 = vmatprep.subr.mxu0 0.0
        %599 = vmatpush1.msra.mxu0 0.0
        %600 = vmatprep.subr.mxu0 0.0
        %601 = vmatpush1.msra.mxu0 0.0
        %602 = vmatprep.subr.mxu0 0.0
        %603 = vmatpush1.msra.mxu0 0.0
        %604 = vmatprep.subr.mxu0 0.0
        %605 = vmatpush1.msra.mxu0 0.0
        %606 = vmatprep.subr.mxu0 0.0
        %607 = vmatpush1.msra.mxu0 %v584
        %608 = vmatprep.subr.mxu0 0.0
        %609 = vmatpush1.msra.mxu0 %v583
        %610 = vmatprep.subr.mxu0 0.0
        %611 = vmatpush1.msra.mxu0 %v582
        %612 = vmatprep.subr.mxu0 0.0
        %613 = vmatpush1.msra.mxu0 %v581
        %614 = vmatprep.subr.mxu0 0.0
        %615 = vmatpush1.msra.mxu0 %v580
        %616 = vmatprep.subr.mxu0 0.0
        %617 = vmatpush1.msra.mxu0 %v579
        %618 = vmatprep.subr.mxu0 0.0
        %619 = vmatpush1.msra.mxu0 %v578
        %620 = vmatprep.subr.mxu0 0.0
        %621 = vmatpush1.msra.mxu0 %v577
        %622 = vmatprep.subr.mxu0 0.0
        %623 = vmatpush2.msra.mxu0 0.0
        %624 = vmatprep.subr.mxu0 0.0
        %625 = vmatpush2.msra.mxu0 0.0
        %626 = vmatprep.subr.mxu0 0.0
        %627 = vmatpush2.msra.mxu0 0.0
        %628 = vmatprep.subr.mxu0 0.0
        %629 = vmatpush2.msra.mxu0 0.0
        %630 = vmatprep.subr.mxu0 0.0
        %631 = vmatpush2.msra.mxu0 0.0
        %632 = vmatprep.subr.mxu0 0.0
        %633 = vmatpush2.msra.mxu0 0.0
        %634 = vmatprep.subr.mxu0 0.0
        %635 = vmatpush2.msra.mxu0 0.0
        %636 = vmatprep.subr.mxu0 0.0
        %637 = vmatpush2.msra.mxu0 0.0
        %638 = vmatprep.subr.mxu0 0.0
        %639 = vmatpush2.msra.mxu0 0.0
        %640 = vmatprep.subr.mxu0 0.0
        %641 = vmatpush2.msra.mxu0 0.0
        %642 = vmatprep.subr.mxu0 0.0
        %643 = vmatpush2.msra.mxu0 0.0
        %644 = vmatprep.subr.mxu0 0.0
        %645 = vmatpush2.msra.mxu0 0.0
        %646 = vmatprep.subr.mxu0 0.0
        %647 = vmatpush2.msra.mxu0 0.0
        %648 = vmatprep.subr.mxu0 0.0
        %649 = vmatpush2.msra.mxu0 0.0
        %650 = vmatprep.subr.mxu0 0.0
        %651 = vmatpush2.msra.mxu0 0.0
        %652 = vmatprep.subr.mxu0 0.0
        %653 = vmatpush2.msra.mxu0 0.0
        %654 = vmatprep.mubr.f32.mxu0 0.0
        %655 = vmatmul.mubr.f32.gmra.mxu0 %v588
        %v656 = vpop.f32.mrf.mxu0
        %v657 = vadd.f32 %v585, %v656
        %v658 = vpop.f32.mrf.mxu0
        %659 = vdwg.mxu0
        %vm660 = vcmask 73728
        %661 = vst.msk [vmem:[%s297] sm:$0x1] %vm660, %v657
        %s662 = sand.u32 %s203, 1
        %s663 = scalar_lea.sflag [#allocation3], %s662
        %s664 = sand.u32 %s203, 1
        %s665 = scalar_lea.vmem [#allocation2], %s664
        // Predicated region
        $region53: #{mobilenet_v3_forward.9} parent=51 // pred_check
          %p666 = pneg %p213
        $region54: #{mobilenet_v3_forward.9} parent=51 // pred_check_branch
          %668 = sbr.rel (%p666) target = $region56
        $region55: #{mobilenet_v3_forward.9} parent=51 // pred_region
          %s670 = ssub.s32 16, 16
          %671 = vsyncadd %s663, %s670
          %s672 = smul.addr %s22, 16
          %s673 = scalar_lea.hbm %s8, %s672
          %s675 = sshll.u32 %s665, 4
          %s676 = int_to_ptr.vmem [resolvable:$true] %s675
          %678 = dma.vmem_to_hbm [thread:$0]  %s676, 16, %s673, %s663
        $region56: #{mobilenet_v3_forward.9} parent=51 // pred_fallthru
          _
      $region52: #{mobilenet_v3_forward.9} parent=5 // pred_fallthru
        _
      %p679 = scmp.le.s32.totalorder 2, %s17
      // Predicated region
      $region57: #{mobilenet_v3_forward.9} parent=5 // pred_check
        %p680 = pneg %p679
      $region58: #{mobilenet_v3_forward.9} parent=5 // pred_check_branch
        %682 = sbr.rel (%p680) target = $region60
      $region59: #{mobilenet_v3_forward.9} parent=5 // pred_region
        %s683 = ssub.s32 %s17, 2
        // Predicated region
        $region61: #{mobilenet_v3_forward.9} parent=59 // pred_check
          %p684 = pneg %p219
        $region62: #{mobilenet_v3_forward.9} parent=59 // pred_check_branch
          %686 = sbr.rel (%p684) target = $region64
        $region63: #{mobilenet_v3_forward.9} parent=59 // pred_region
          %s687 = sand.u32 %s204, 1
          %s688 = scalar_lea.sflag [#allocation3], %s687
          %s689 = sand.u32 %s204, 1
          %s690 = scalar_lea.vmem [#allocation2], %s689
          %691 = dma.done %s688, 16
        $region64: #{mobilenet_v3_forward.9} parent=59 // pred_fallthru
          _
      $region60: #{mobilenet_v3_forward.9} parent=5 // pred_fallthru
        _
    $region6: #{mobilenet_v3_forward.9} parent=1 // loop_footer
      %s21 = sadd.s32 1, %s17
    $region7: #{mobilenet_v3_forward.9} parent=1 // loop_footer_branch
      %16 = sbr.rel target = $region3
    $region8: #{mobilenet_v3_forward.9} parent=1 // loop_exit
      _
    %692 = vsyncpa [#allocation3], 1
    %s693 = scalar_lea.sflag [#allocation3], 1
    %694 = vsyncpa %s693, 1

// kernel: mobilenet_v3_forward.8
$region0: #{mobilenet_v3_forward.8}
  #allocation0 [shape = 'u32[]', space=smem, size = 0x4, offset = 0x4, fixed_abs, tag = 'smem constant byte address 0x4 - core index']
  #allocation1 [shape = 'u32[144,128]{1,0:T(1,128)}', space=vmem, size = 0x12000, scoped, tag = 'internal scratch']
  %s0 = inlined_call_operand.vmem [shape: bf16[2,4,5,5,64], index: 0, kind: input, shape index: {}]
  %s1 = inlined_call_operand.vmem [shape: bf16[9,64], index: 1, kind: input, shape index: {}]
  %s2 = inlined_call_operand.vmem [shape: f32[1,64], index: 2, kind: input, shape index: {}]
  %s3 = inlined_call_operand.vmem [shape: f32[1,64], index: 3, kind: input, shape index: {}]
  %s4 = inlined_call_operand.vmem [shape: bf16[64,24], index: 4, kind: input, shape index: {}]
  %s5 = inlined_call_operand.vmem [shape: f32[1,24], index: 5, kind: input, shape index: {}]
  %s6 = inlined_call_operand.vmem [shape: f32[1,24], index: 6, kind: input, shape index: {}]
  %s7 = inlined_call_operand.vmem [shape: bf16[2,4,4,24], index: 7, kind: output, shape index: {}]
  %s8 = sld [smem:[#allocation0]]
  $region61: #{mobilenet_v3_forward.8} parent=0
    _
  %s10 = ssub.s32 1, %s8
  %s11 = scalar_select 0, %s10, %s8
  loop: start=0, step=1, limit=4
  $region2: #{mobilenet_v3_forward.8} parent=0 // loop_pre_header
    _
  $region3: #{mobilenet_v3_forward.8} parent=0 // loop_header
    %s13 = sphi 0, %s17
    %p14 = scmp.ge.s32.totalorder %s13, 4
    %s23 = sphi 0, %s25
    %s26 = sphi 0, %s23
    %s27 = sphi 0, %s26
    %s43 = sphi 0, %s27
    %s47 = sphi 0, %s47
    %s49 = sphi 0, %s47
    %s50 = sphi 0, %s49
    %s64 = sphi 0, %s50
    %s68 = sphi 0, %s68
    %s70 = sphi 0, %s68
    %s71 = sphi 0, %s70
    %s85 = sphi 0, %s71
    %s89 = sphi 0, %s89
    %s91 = sphi 0, %s89
    %s92 = sphi 0, %s91
    %s106 = sphi 0, %s92
    %s110 = sphi 0, %s110
    %s112 = sphi 0, %s110
    %s113 = sphi 0, %s112
    %s127 = sphi 0, %s113
    %s131 = sphi 0, %s131
    %s133 = sphi 0, %s131
    %s134 = sphi 0, %s133
    %s148 = sphi 0, %s134
    %s152 = sphi 0, %s152
    %s154 = sphi 0, %s152
    %s155 = sphi 0, %s154
    %s169 = sphi 0, %s155
    %s175 = sphi 0, %s177
    %s178 = sphi 0, %s175
    %s179 = sphi 0, %s178
    %s195 = sphi 0, %s179
  $region4: #{mobilenet_v3_forward.8} parent=0 // loop_header_branch
    %16 = sbr.rel (%p14) target = $region8
  $region5: #{mobilenet_v3_forward.8} parent=0 // loop_body
    %s18 = ssub.s32 %s13, 1
    %s19 = ssub.s32 %s13, 2
    %s20 = sadd.s32 %s13, 1
    %s21 = ssub.s32 %s13, %s20
    %p22 = scmp.eq.s32.totalorder %s21, 0
    %s24 = sadd.s32 %s23, 1
    %s25 = scalar_select %p22, %s23, %s24
    %p28 = pneg %p22
    %p29 = scmp.eq.s32.totalorder %s13, 1
    %p30 = por %p28, %p29
    %p31 = scmp.ne.s32.totalorder %s23, %s26
    %p32 = scmp.eq.s32.totalorder %s13, 0
    %p33 = por %p31, %p32
    %p34 = scmp.ne.s32.totalorder %s23, %s26
    %p35 = scmp.eq.s32.totalorder %s18, 1
    %p36 = por %p34, %p35
    %p37 = scmp.ne.s32.totalorder %s26, %s27
    %p38 = scmp.eq.s32.totalorder %s18, 0
    %p39 = por %p37, %p38
    %p40 = scmp.ne.s32.totalorder %s26, %s27
    %p41 = scmp.eq.s32.totalorder %s19, 1
    %p42 = por %p40, %p41
    %p44 = scmp.ne.s32.totalorder %s27, %s43
    %p45 = scmp.eq.s32.totalorder %s19, 0
    %p46 = por %p44, %p45
    %s48 = sadd.s32 %s47, 1
    %p51 = scmp.eq.s32.totalorder %s13, 1
    %p52 = scmp.ne.s32.totalorder %s47, %s49
    %p53 = scmp.eq.s32.totalorder %s13, 0
    %p54 = por %p52, %p53
    %p55 = scmp.ne.s32.totalorder %s47, %s49
    %p56 = scmp.eq.s32.totalorder %s18, 1
    %p57 = por %p55, %p56
    %p58 = scmp.ne.s32.totalorder %s49, %s50
    %p59 = scmp.eq.s32.totalorder %s18, 0
    %p60 = por %p58, %p59
    %p61 = scmp.ne.s32.totalorder %s49, %s50
    %p62 = scmp.eq.s32.totalorder %s19, 1
    %p63 = por %p61, %p62
    %p65 = scmp.ne.s32.totalorder %s50, %s64
    %p66 = scmp.eq.s32.totalorder %s19, 0
    %p67 = por %p65, %p66
    %s69 = sadd.s32 %s68, 1
    %p72 = scmp.eq.s32.totalorder %s13, 1
    %p73 = scmp.ne.s32.totalorder %s68, %s70
    %p74 = scmp.eq.s32.totalorder %s13, 0
    %p75 = por %p73, %p74
    %p76 = scmp.ne.s32.totalorder %s68, %s70
    %p77 = scmp.eq.s32.totalorder %s18, 1
    %p78 = por %p76, %p77
    %p79 = scmp.ne.s32.totalorder %s70, %s71
    %p80 = scmp.eq.s32.totalorder %s18, 0
    %p81 = por %p79, %p80
    %p82 = scmp.ne.s32.totalorder %s70, %s71
    %p83 = scmp.eq.s32.totalorder %s19, 1
    %p84 = por %p82, %p83
    %p86 = scmp.ne.s32.totalorder %s71, %s85
    %p87 = scmp.eq.s32.totalorder %s19, 0
    %p88 = por %p86, %p87
    %s90 = sadd.s32 %s89, 1
    %p93 = scmp.eq.s32.totalorder %s13, 1
    %p94 = scmp.ne.s32.totalorder %s89, %s91
    %p95 = scmp.eq.s32.totalorder %s13, 0
    %p96 = por %p94, %p95
    %p97 = scmp.ne.s32.totalorder %s89, %s91
    %p98 = scmp.eq.s32.totalorder %s18, 1
    %p99 = por %p97, %p98
    %p100 = scmp.ne.s32.totalorder %s91, %s92
    %p101 = scmp.eq.s32.totalorder %s18, 0
    %p102 = por %p100, %p101
    %p103 = scmp.ne.s32.totalorder %s91, %s92
    %p104 = scmp.eq.s32.totalorder %s19, 1
    %p105 = por %p103, %p104
    %p107 = scmp.ne.s32.totalorder %s92, %s106
    %p108 = scmp.eq.s32.totalorder %s19, 0
    %p109 = por %p107, %p108
    %s111 = sadd.s32 %s110, 1
    %p114 = scmp.eq.s32.totalorder %s13, 1
    %p115 = scmp.ne.s32.totalorder %s110, %s112
    %p116 = scmp.eq.s32.totalorder %s13, 0
    %p117 = por %p115, %p116
    %p118 = scmp.ne.s32.totalorder %s110, %s112
    %p119 = scmp.eq.s32.totalorder %s18, 1
    %p120 = por %p118, %p119
    %p121 = scmp.ne.s32.totalorder %s112, %s113
    %p122 = scmp.eq.s32.totalorder %s18, 0
    %p123 = por %p121, %p122
    %p124 = scmp.ne.s32.totalorder %s112, %s113
    %p125 = scmp.eq.s32.totalorder %s19, 1
    %p126 = por %p124, %p125
    %p128 = scmp.ne.s32.totalorder %s113, %s127
    %p129 = scmp.eq.s32.totalorder %s19, 0
    %p130 = por %p128, %p129
    %s132 = sadd.s32 %s131, 1
    %p135 = scmp.eq.s32.totalorder %s13, 1
    %p136 = scmp.ne.s32.totalorder %s131, %s133
    %p137 = scmp.eq.s32.totalorder %s13, 0
    %p138 = por %p136, %p137
    %p139 = scmp.ne.s32.totalorder %s131, %s133
    %p140 = scmp.eq.s32.totalorder %s18, 1
    %p141 = por %p139, %p140
    %p142 = scmp.ne.s32.totalorder %s133, %s134
    %p143 = scmp.eq.s32.totalorder %s18, 0
    %p144 = por %p142, %p143
    %p145 = scmp.ne.s32.totalorder %s133, %s134
    %p146 = scmp.eq.s32.totalorder %s19, 1
    %p147 = por %p145, %p146
    %p149 = scmp.ne.s32.totalorder %s134, %s148
    %p150 = scmp.eq.s32.totalorder %s19, 0
    %p151 = por %p149, %p150
    %s153 = sadd.s32 %s152, 1
    %p156 = scmp.eq.s32.totalorder %s13, 1
    %p157 = scmp.ne.s32.totalorder %s152, %s154
    %p158 = scmp.eq.s32.totalorder %s13, 0
    %p159 = por %p157, %p158
    %p160 = scmp.ne.s32.totalorder %s152, %s154
    %p161 = scmp.eq.s32.totalorder %s18, 1
    %p162 = por %p160, %p161
    %p163 = scmp.ne.s32.totalorder %s154, %s155
    %p164 = scmp.eq.s32.totalorder %s18, 0
    %p165 = por %p163, %p164
    %p166 = scmp.ne.s32.totalorder %s154, %s155
    %p167 = scmp.eq.s32.totalorder %s19, 1
    %p168 = por %p166, %p167
    %p170 = scmp.ne.s32.totalorder %s155, %s169
    %p171 = scmp.eq.s32.totalorder %s19, 0
    %p172 = por %p170, %p171
    %s173 = ssub.s32 %s13, %s20
    %p174 = scmp.eq.s32.totalorder %s173, 0
    %s176 = sadd.s32 %s175, 1
    %s177 = scalar_select %p174, %s175, %s176
    %p180 = pneg %p174
    %p181 = scmp.eq.s32.totalorder %s13, 1
    %p182 = por %p180, %p181
    %p183 = scmp.ne.s32.totalorder %s175, %s178
    %p184 = scmp.eq.s32.totalorder %s13, 0
    %p185 = por %p183, %p184
    %p186 = scmp.ne.s32.totalorder %s175, %s178
    %p187 = scmp.eq.s32.totalorder %s18, 1
    %p188 = por %p186, %p187
    %p189 = scmp.ne.s32.totalorder %s178, %s179
    %p190 = scmp.eq.s32.totalorder %s18, 0
    %p191 = por %p189, %p190
    %p192 = scmp.ne.s32.totalorder %s178, %s179
    %p193 = scmp.eq.s32.totalorder %s19, 1
    %p194 = por %p192, %p193
    %p196 = scmp.ne.s32.totalorder %s179, %s195
    %p197 = scmp.eq.s32.totalorder %s19, 0
    %p198 = por %p196, %p197
    %p199 = scmp.le.s32.totalorder 1, %s13
    %p200 = scmp.lt.s32.totalorder %s13, 3
    %p201 = pnand %p199, %p200
    %p202 = pneg %p201
    // Predicated region
    $region9: #{mobilenet_v3_forward.8} parent=5 // pred_check
      _
    $region10: #{mobilenet_v3_forward.8} parent=5 // pred_check_branch
      %204 = sbr.rel (%p201) target = $region12
    $region11: #{mobilenet_v3_forward.8} parent=5 // pred_region
      %s205 = ssub.s32 %s13, 1
      // Predicated region
      $region13: #{mobilenet_v3_forward.8} parent=11 // pred_check
        %p206 = pneg %p60
      $region14: #{mobilenet_v3_forward.8} parent=11 // pred_check_branch
        %208 = sbr.rel (%p206) target = $region16
      $region15: #{mobilenet_v3_forward.8} parent=11 // pred_region
        _
      $region16: #{mobilenet_v3_forward.8} parent=11 // pred_fallthru
        _
      // Predicated region
      $region17: #{mobilenet_v3_forward.8} parent=11 // pred_check
        %p209 = pneg %p81
      $region18: #{mobilenet_v3_forward.8} parent=11 // pred_check_branch
        %211 = sbr.rel (%p209) target = $region20
      $region19: #{mobilenet_v3_forward.8} parent=11 // pred_region
        _
      $region20: #{mobilenet_v3_forward.8} parent=11 // pred_fallthru
        _
      // Predicated region
      $region21: #{mobilenet_v3_forward.8} parent=11 // pred_check
        %p212 = pneg %p102
      $region22: #{mobilenet_v3_forward.8} parent=11 // pred_check_branch
        %214 = sbr.rel (%p212) target = $region24
      $region23: #{mobilenet_v3_forward.8} parent=11 // pred_region
        _
      $region24: #{mobilenet_v3_forward.8} parent=11 // pred_fallthru
        _
      // Predicated region
      $region25: #{mobilenet_v3_forward.8} parent=11 // pred_check
        %p215 = pneg %p123
      $region26: #{mobilenet_v3_forward.8} parent=11 // pred_check_branch
        %217 = sbr.rel (%p215) target = $region28
      $region27: #{mobilenet_v3_forward.8} parent=11 // pred_region
        _
      $region28: #{mobilenet_v3_forward.8} parent=11 // pred_fallthru
        _
      // Predicated region
      $region29: #{mobilenet_v3_forward.8} parent=11 // pred_check
        %p218 = pneg %p144
      $region30: #{mobilenet_v3_forward.8} parent=11 // pred_check_branch
        %220 = sbr.rel (%p218) target = $region32
      $region31: #{mobilenet_v3_forward.8} parent=11 // pred_region
        _
      $region32: #{mobilenet_v3_forward.8} parent=11 // pred_fallthru
        _
      // Predicated region
      $region33: #{mobilenet_v3_forward.8} parent=11 // pred_check
        %p221 = pneg %p165
      $region34: #{mobilenet_v3_forward.8} parent=11 // pred_check_branch
        %223 = sbr.rel (%p221) target = $region36
      $region35: #{mobilenet_v3_forward.8} parent=11 // pred_region
        _
      $region36: #{mobilenet_v3_forward.8} parent=11 // pred_fallthru
        _
    $region12: #{mobilenet_v3_forward.8} parent=5 // pred_fallthru
      _
    %p224 = scmp.lt.s32.totalorder %s13, 2
    // Predicated region
    $region37: #{mobilenet_v3_forward.8} parent=5 // pred_check
      %p225 = pneg %p224
    $region38: #{mobilenet_v3_forward.8} parent=5 // pred_check_branch
      %227 = sbr.rel (%p225) target = $region40
    $region39: #{mobilenet_v3_forward.8} parent=5 // pred_region
      // Predicated region
      $region41: #{mobilenet_v3_forward.8} parent=39 // pred_check
        %p228 = pneg %p33
      $region42: #{mobilenet_v3_forward.8} parent=39 // pred_check_branch
        %230 = sbr.rel (%p228) target = $region44
      $region43: #{mobilenet_v3_forward.8} parent=39 // pred_region
        %p231 = scmp.lt.s32.totalorder %s13, 1
        %s232 = scalar_select %p231, %s13, 1
        %s233 = smul.addr %s232, 20
        %s234 = smul.addr %s233, 4
        %s235 = scalar_lea.vmem %s0, %s234
      $region44: #{mobilenet_v3_forward.8} parent=39 // pred_fallthru
        _
    $region40: #{mobilenet_v3_forward.8} parent=5 // pred_fallthru
      _
    %p236 = scmp.le.s32.totalorder 1, %s13
    %p237 = scmp.lt.s32.totalorder %s13, 3
    %p238 = pnand %p236, %p237
    %p239 = pneg %p238
    // Predicated region
    $region45: #{mobilenet_v3_forward.8} parent=5 // pred_check
      _
    $region46: #{mobilenet_v3_forward.8} parent=5 // pred_check_branch
      %241 = sbr.rel (%p238) target = $region48
    $region47: #{mobilenet_v3_forward.8} parent=5 // pred_region
      %s242 = ssub.s32 %s13, 1
      %p243 = scmp.lt.s32.totalorder %s18, 1
      %s244 = scalar_select %p243, %s18, 1
      %s245 = smul.addr %s244, 20
      %s246 = smul.addr %s245, 4
      %s247 = scalar_lea.vmem %s0, %s246
      %p248 = pneg %p39
      %p249 = pneg %p36
      %p250 = pneg %p60
      %p251 = pneg %p57
      %p252 = pneg %p81
      %p253 = pneg %p78
      %p254 = pneg %p102
      %p255 = pneg %p99
      %p256 = pneg %p123
      %p257 = pneg %p120
      %p258 = pneg %p144
      %p259 = pneg %p141
      %p260 = pneg %p165
      %p261 = pneg %p162
      %p262 = pneg %p191
      %p263 = pneg %p188
      %p264 = scmp.lt.s32.totalorder %s18, 1
      %s265 = scalar_select %p264, %s18, 1
      %s266 = smul.addr %s265, 4
      %s267 = smul.addr %s266, 2
      %s268 = scalar_lea.vmem %s7, %s267
      %p269 = scmp.lt.s32.totalorder %s18, 1
      %s270 = scalar_select %p269, %s18, 1
      %s271 = smul.addr %s270, 20
      %s272 = smul.addr %s271, 4
      %s273 = scalar_lea.vmem %s0, %s272
      %p274 = scmp.lt.s32.totalorder %s18, 1
      %s275 = scalar_select %p274, %s18, 1
      %s276 = smul.addr %s275, 4
      %s277 = smul.addr %s276, 2
      %s278 = scalar_lea.vmem %s7, %s277
      %v279 = vld [vmem:[%s1] sm:$0xf]
      %v280 = vld [vmem:[%s1 + $0x4] sm:$0x1]
      %v281 = vunpack.c.l.bf16 %v279
      %v282 = vunpack.c.l.bf16 %v280
      %v283 = vld [vmem:[%s273] sm:$0x3]
      %v284 = vld [vmem:[%s273 + $0x4] sm:$0x3]
      %v285 = vld [vmem:[%s273 + $0x8] sm:$0x3]
      %v286 = vld [vmem:[%s273 + $0xc] sm:$0x3]
      %v287 = vunpack.c.l.bf16 %v283
      %v288 = vunpack.c.l.bf16 %v284
      %v289 = vunpack.c.l.bf16 %v285
      %v290 = vunpack.c.l.bf16 %v286
      %v291 = vlaneseq
      %v292 = vshrl.u32 %v291, 7
      %v293 = vsub.s32 0, %v292
      %v294 = vrot.slane %v281, %v293
      %v295 = vmul.f32 %v287, %v294
      %v296 = vmul.f32 %v288, %v294
      %v297 = vmul.f32 %v289, %v294
      %v298 = vmul.f32 %v290, %v294
      %s299 = scalar_lea.vmem %s273, 20
      %v300 = vld [vmem:[%s299] sm:$0x3]
      %v301 = vld [vmem:[%s299 + $0x4] sm:$0x3]
      %v302 = vld [vmem:[%s299 + $0x8] sm:$0x3]
      %v303 = vld [vmem:[%s299 + $0xc] sm:$0x3]
      %v304 = vunpack.c.l.bf16 %v300
      %v305 = vunpack.c.l.bf16 %v301
      %v306 = vunpack.c.l.bf16 %v302
      %v307 = vunpack.c.l.bf16 %v303
      %v308 = vlaneseq
      %v309 = vshrl.u32 %v308, 7
      %v310 = vsub.s32 1, %v309
      %v311 = vrot.slane %v281, %v310
      %v312 = vmul.f32 %v304, %v311
      %v313 = vmul.f32 %v305, %v311
      %v314 = vmul.f32 %v306, %v311
      %v315 = vmul.f32 %v307, %v311
      %v316 = vadd.f32 %v295, %v312
      %v317 = vadd.f32 %v296, %v313
      %v318 = vadd.f32 %v297, %v314
      %v319 = vadd.f32 %v298, %v315
      %v320 = vld [vmem:[%s273] sm:$0x7]
      %v321 = vld [vmem:[%s273 + $0x4] sm:$0x7]
      %v322 = vld [vmem:[%s273 + $0x8] sm:$0x7]
      %v323 = vld [vmem:[%s273 + $0xc] sm:$0x7]
      %v324 = vunpack.c.l.bf16 %v320
      %v325 = vunpack.c.l.bf16 %v321
      %v326 = vunpack.c.l.bf16 %v322
      %v327 = vunpack.c.l.bf16 %v323
      %v328 = vlaneseq
      %v329 = vshrl.u32 %v328, 7
      %v330 = vsub.s32 2, %v329
      %v331 = vrot.slane %v281, %v330
      %v332 = vmul.f32 %v324, %v331
      %v333 = vmul.f32 %v325, %v331
      %v334 = vmul.f32 %v326, %v331
      %v335 = vmul.f32 %v327, %v331
      %v340 = vrot.slane %v332, 1
      %v341 = vrot.slane %v333, 1
      %v342 = vrot.slane %v334, 1
      %v343 = vrot.slane %v335, 1
      %v348 = vadd.f32 %v316, %v340
      %v349 = vadd.f32 %v317, %v341
      %v350 = vadd.f32 %v318, %v342
      %v351 = vadd.f32 %v319, %v343
      %s352 = scalar_lea.vmem %s273, 40
      %v353 = vld [vmem:[%s352] sm:$0x3]
      %v354 = vld [vmem:[%s352 + $0x4] sm:$0x3]
      %v355 = vld [vmem:[%s352 + $0x8] sm:$0x3]
      %v356 = vld [vmem:[%s352 + $0xc] sm:$0x3]
      %v357 = vunpack.c.l.bf16 %v353
      %v358 = vunpack.c.l.bf16 %v354
      %v359 = vunpack.c.l.bf16 %v355
      %v360 = vunpack.c.l.bf16 %v356
      %v361 = vlaneseq
      %v362 = vshrl.u32 %v361, 7
      %v363 = vsub.s32 3, %v362
      %v364 = vrot.slane %v281, %v363
      %v365 = vmul.f32 %v357, %v364
      %v366 = vmul.f32 %v358, %v364
      %v367 = vmul.f32 %v359, %v364
      %v368 = vmul.f32 %v360, %v364
      %v369 = vadd.f32 %v348, %v365
      %v370 = vadd.f32 %v349, %v366
      %v371 = vadd.f32 %v350, %v367
      %v372 = vadd.f32 %v351, %v368
      %s373 = scalar_lea.vmem %s273, 60
      %v374 = vld [vmem:[%s373] sm:$0x3]
      %v375 = vld [vmem:[%s373 + $0x4] sm:$0x3]
      %v376 = vld [vmem:[%s373 + $0x8] sm:$0x3]
      %v377 = vld [vmem:[%s373 + $0xc] sm:$0x3]
      %v378 = vunpack.c.l.bf16 %v374
      %v379 = vunpack.c.l.bf16 %v375
      %v380 = vunpack.c.l.bf16 %v376
      %v381 = vunpack.c.l.bf16 %v377
      %v382 = vlaneseq
      %v383 = vshrl.u32 %v382, 7
      %v384 = vsub.s32 4, %v383
      %v385 = vrot.slane %v281, %v384
      %v386 = vmul.f32 %v378, %v385
      %v387 = vmul.f32 %v379, %v385
      %v388 = vmul.f32 %v380, %v385
      %v389 = vmul.f32 %v381, %v385
      %v390 = vadd.f32 %v369, %v386
      %v391 = vadd.f32 %v370, %v387
      %v392 = vadd.f32 %v371, %v388
      %v393 = vadd.f32 %v372, %v389
      %v394 = vld [vmem:[%s352] sm:$0x7]
      %v395 = vld [vmem:[%s352 + $0x4] sm:$0x7]
      %v396 = vld [vmem:[%s352 + $0x8] sm:$0x7]
      %v397 = vld [vmem:[%s352 + $0xc] sm:$0x7]
      %v398 = vunpack.c.l.bf16 %v394
      %v399 = vunpack.c.l.bf16 %v395
      %v400 = vunpack.c.l.bf16 %v396
      %v401 = vunpack.c.l.bf16 %v397
      %v402 = vlaneseq
      %v403 = vshrl.u32 %v402, 7
      %v404 = vsub.s32 5, %v403
      %v405 = vrot.slane %v281, %v404
      %v406 = vmul.f32 %v398, %v405
      %v407 = vmul.f32 %v399, %v405
      %v408 = vmul.f32 %v400, %v405
      %v409 = vmul.f32 %v401, %v405
      %v414 = vrot.slane %v406, 1
      %v415 = vrot.slane %v407, 1
      %v416 = vrot.slane %v408, 1
      %v417 = vrot.slane %v409, 1
      %v422 = vadd.f32 %v390, %v414
      %v423 = vadd.f32 %v391, %v415
      %v424 = vadd.f32 %v392, %v416
      %v425 = vadd.f32 %v393, %v417
      %s426 = scalar_lea.vmem %s273, 4
      %v427 = vld [vmem:[%s426] sm:$0x3]
      %v428 = vld [vmem:[%s426 + $0x4] sm:$0x3]
      %v429 = vld [vmem:[%s426 + $0x8] sm:$0x3]
      %v430 = vld [vmem:[%s426 + $0xc] sm:$0x3]
      %v431 = vunpack.c.l.bf16 %v427
      %v432 = vunpack.c.l.bf16 %v428
      %v433 = vunpack.c.l.bf16 %v429
      %v434 = vunpack.c.l.bf16 %v430
      %v435 = vlaneseq
      %v436 = vshrl.u32 %v435, 7
      %v437 = vsub.s32 6, %v436
      %v438 = vrot.slane %v281, %v437
      %v439 = vmul.f32 %v431, %v438
      %v440 = vmul.f32 %v432, %v438
      %v441 = vmul.f32 %v433, %v438
      %v442 = vmul.f32 %v434, %v438
      %v443 = vadd.f32 %v422, %v439
      %v444 = vadd.f32 %v423, %v440
      %v445 = vadd.f32 %v424, %v441
      %v446 = vadd.f32 %v425, %v442
      %s447 = scalar_lea.vmem %s273, 24
      %v448 = vld [vmem:[%s447] sm:$0x3]
      %v449 = vld [vmem:[%s447 + $0x4] sm:$0x3]
      %v450 = vld [vmem:[%s447 + $0x8] sm:$0x3]
      %v451 = vld [vmem:[%s447 + $0xc] sm:$0x3]
      %v452 = vunpack.c.l.bf16 %v448
      %v453 = vunpack.c.l.bf16 %v449
      %v454 = vunpack.c.l.bf16 %v450
      %v455 = vunpack.c.l.bf16 %v451
      %v456 = vlaneseq
      %v457 = vshrl.u32 %v456, 7
      %v458 = vsub.s32 7, %v457
      %v459 = vrot.slane %v281, %v458
      %v460 = vmul.f32 %v452, %v459
      %v461 = vmul.f32 %v453, %v459
      %v462 = vmul.f32 %v454, %v459
      %v463 = vmul.f32 %v455, %v459
      %v464 = vadd.f32 %v443, %v460
      %v465 = vadd.f32 %v444, %v461
      %v466 = vadd.f32 %v445, %v462
      %v467 = vadd.f32 %v446, %v463
      %v468 = vld [vmem:[%s426] sm:$0x7]
      %v469 = vld [vmem:[%s426 + $0x4] sm:$0x7]
      %v470 = vld [vmem:[%s426 + $0x8] sm:$0x7]
      %v471 = vld [vmem:[%s426 + $0xc] sm:$0x7]
      %v472 = vunpack.c.l.bf16 %v468
      %v473 = vunpack.c.l.bf16 %v469
      %v474 = vunpack.c.l.bf16 %v470
      %v475 = vunpack.c.l.bf16 %v471
      %v476 = vlaneseq
      %v477 = vshrl.u32 %v476, 7
      %v478 = vsub.s32 0, %v477
      %v479 = vrot.slane %v282, %v478
      %v480 = vmul.f32 %v472, %v479
      %v481 = vmul.f32 %v473, %v479
      %v482 = vmul.f32 %v474, %v479
      %v483 = vmul.f32 %v475, %v479
      %v488 = vrot.slane %v480, 1
      %v489 = vrot.slane %v481, 1
      %v490 = vrot.slane %v482, 1
      %v491 = vrot.slane %v483, 1
      %v496 = vadd.f32 %v464, %v488
      %v497 = vadd.f32 %v465, %v489
      %v498 = vadd.f32 %v466, %v490
      %v499 = vadd.f32 %v467, %v491
      %v500 = vld [vmem:[%s2] sm:$0x1]
      %v502 = vlaneseq
      %v503 = vshrl.u32 %v502, 7
      %v504 = vsub.s32 0, %v503
      %v505 = vrot.slane %v500, %v504
      %v507 = vmul.f32 %v496, %v505
      %v508 = vmul.f32 %v497, %v505
      %v509 = vmul.f32 %v498, %v505
      %v510 = vmul.f32 %v499, %v505
      %v511 = vld [vmem:[%s3] sm:$0x1]
      %v513 = vlaneseq
      %v514 = vshrl.u32 %v513, 7
      %v515 = vsub.s32 0, %v514
      %v516 = vrot.slane %v511, %v515
      %v518 = vadd.f32 %v507, %v516
      %v519 = vadd.f32 %v508, %v516
      %v520 = vadd.f32 %v509, %v516
      %v521 = vadd.f32 %v510, %v516
      %v522 = vadd.f32 %v518, 3.0
      %v523 = vadd.f32 %v519, 3.0
      %v524 = vadd.f32 %v520, 3.0
      %v525 = vadd.f32 %v521, 3.0
      %v526 = vmax.f32 %v522, 0.0
      %v527 = vmax.f32 %v523, 0.0
      %v528 = vmax.f32 %v524, 0.0
      %v529 = vmax.f32 %v525, 0.0
      %v530 = vmin.f32 %v526, 6.0
      %v531 = vmin.f32 %v527, 6.0
      %v532 = vmin.f32 %v528, 6.0
      %v533 = vmin.f32 %v529, 6.0
      %v534 = vmul.f32 %v518, %v530
      %v535 = vmul.f32 %v519, %v531
      %v536 = vmul.f32 %v520, %v532
      %v537 = vmul.f32 %v521, %v533
      %v538 = vmul.f32 %v534, 0.16666667
      %v539 = vmul.f32 %v535, 0.16666667
      %v540 = vmul.f32 %v536, 0.16666667
      %v541 = vmul.f32 %v537, 0.16666667
      %v542 = vld [vmem:[%s4] sm:$0xf]
      %v543 = vld [vmem:[%s4 + $0x4] sm:$0xf]
      %v544 = vld [vmem:[%s4 + $0x8] sm:$0xf]
      %v545 = vld [vmem:[%s4 + $0xc] sm:$0xf]
      %v546 = vld [vmem:[%s4 + $0x10] sm:$0xf]
      %v547 = vld [vmem:[%s4 + $0x14] sm:$0xf]
      %v548 = vld [vmem:[%s4 + $0x18] sm:$0xf]
      %v549 = vld [vmem:[%s4 + $0x1c] sm:$0xf]
      %v550 = vunpack.c.l.bf16 %v542
      %v551 = vunpack.c.l.bf16 %v543
      %v552 = vunpack.c.l.bf16 %v544
      %v553 = vunpack.c.l.bf16 %v545
      %v554 = vunpack.c.l.bf16 %v546
      %v555 = vunpack.c.l.bf16 %v547
      %v556 = vunpack.c.l.bf16 %v548
      %v557 = vunpack.c.l.bf16 %v549
      %vm558 = vcmask 523264
      %v560 = vsel %vm558, %v538, 0
      %562 = vmatprep.subr.mxu0 0.0
      %563 = vmatpush1.msra.mxu0 0.0
      %564 = vmatprep.subr.mxu0 0.0
      %565 = vmatpush1.msra.mxu0 0.0
      %566 = vmatprep.subr.mxu0 0.0
      %567 = vmatpush1.msra.mxu0 0.0
      %568 = vmatprep.subr.mxu0 0.0
      %569 = vmatpush1.msra.mxu0 0.0
      %570 = vmatprep.subr.mxu0 0.0
      %571 = vmatpush1.msra.mxu0 0.0
      %572 = vmatprep.subr.mxu0 0.0
      %573 = vmatpush1.msra.mxu0 0.0
      %574 = vmatprep.subr.mxu0 0.0
      %575 = vmatpush1.msra.mxu0 0.0
      %576 = vmatprep.subr.mxu0 0.0
      %577 = vmatpush1.msra.mxu0 0.0
      %578 = vmatprep.subr.mxu0 0.0
      %579 = vmatpush1.msra.mxu0 %v557
      %580 = vmatprep.subr.mxu0 0.0
      %581 = vmatpush1.msra.mxu0 %v556
      %582 = vmatprep.subr.mxu0 0.0
      %583 = vmatpush1.msra.mxu0 %v555
      %584 = vmatprep.subr.mxu0 0.0
      %585 = vmatpush1.msra.mxu0 %v554
      %586 = vmatprep.subr.mxu0 0.0
      %587 = vmatpush1.msra.mxu0 %v553
      %588 = vmatprep.subr.mxu0 0.0
      %589 = vmatpush1.msra.mxu0 %v552
      %590 = vmatprep.subr.mxu0 0.0
      %591 = vmatpush1.msra.mxu0 %v551
      %592 = vmatprep.subr.mxu0 0.0
      %593 = vmatpush1.msra.mxu0 %v550
      %594 = vmatprep.subr.mxu0 0.0
      %595 = vmatpush2.msra.mxu0 0.0
      %596 = vmatprep.subr.mxu0 0.0
      %597 = vmatpush2.msra.mxu0 0.0
      %598 = vmatprep.subr.mxu0 0.0
      %599 = vmatpush2.msra.mxu0 0.0
      %600 = vmatprep.subr.mxu0 0.0
      %601 = vmatpush2.msra.mxu0 0.0
      %602 = vmatprep.subr.mxu0 0.0
      %603 = vmatpush2.msra.mxu0 0.0
      %604 = vmatprep.subr.mxu0 0.0
      %605 = vmatpush2.msra.mxu0 0.0
      %606 = vmatprep.subr.mxu0 0.0
      %607 = vmatpush2.msra.mxu0 0.0
      %608 = vmatprep.subr.mxu0 0.0
      %609 = vmatpush2.msra.mxu0 0.0
      %610 = vmatprep.subr.mxu0 0.0
      %611 = vmatpush2.msra.mxu0 0.0
      %612 = vmatprep.subr.mxu0 0.0
      %613 = vmatpush2.msra.mxu0 0.0
      %614 = vmatprep.subr.mxu0 0.0
      %615 = vmatpush2.msra.mxu0 0.0
      %616 = vmatprep.subr.mxu0 0.0
      %617 = vmatpush2.msra.mxu0 0.0
      %618 = vmatprep.subr.mxu0 0.0
      %619 = vmatpush2.msra.mxu0 0.0
      %620 = vmatprep.subr.mxu0 0.0
      %621 = vmatpush2.msra.mxu0 0.0
      %622 = vmatprep.subr.mxu0 0.0
      %623 = vmatpush2.msra.mxu0 0.0
      %624 = vmatprep.subr.mxu0 0.0
      %625 = vmatpush2.msra.mxu0 0.0
      %626 = vmatprep.mubr.f32.mxu0 0.0
      %627 = vmatmul.mubr.f32.gmra.mxu0 %v560
      %v628 = vpop.f32.mrf.mxu0
      %v629 = vadd.f32 0.0, %v628
      %v630 = vpop.f32.mrf.mxu0
      %631 = vdwg.mxu0
      %v632 = vld [vmem:[%s5] sm:$0x1]
      %v634 = vlaneseq
      %v635 = vshrl.u32 %v634, 7
      %v636 = vsub.s32 0, %v635
      %v637 = vrot.slane %v632, %v636
      %v639 = vmul.f32 %v629, %v637
      %v640 = vld [vmem:[%s6] sm:$0x1]
      %v642 = vlaneseq
      %v643 = vshrl.u32 %v642, 7
      %v644 = vsub.s32 0, %v643
      %v645 = vrot.slane %v640, %v644
      %v647 = vadd.f32 %v639, %v645
      %v648 = vpack.c.bf16 %v647, %v647
      %vm649 = vcmask 189440
      %650 = vst.msk [vmem:[%s278] sm:$0x3] %vm649, %v648
      %v652 = vsel %vm558, %v539, 0
      %654 = vmatprep.subr.mxu0 0.0
      %655 = vmatpush1.msra.mxu0 0.0
      %656 = vmatprep.subr.mxu0 0.0
      %657 = vmatpush1.msra.mxu0 0.0
      %658 = vmatprep.subr.mxu0 0.0
      %659 = vmatpush1.msra.mxu0 0.0
      %660 = vmatprep.subr.mxu0 0.0
      %661 = vmatpush1.msra.mxu0 0.0
      %662 = vmatprep.subr.mxu0 0.0
      %663 = vmatpush1.msra.mxu0 0.0
      %664 = vmatprep.subr.mxu0 0.0
      %665 = vmatpush1.msra.mxu0 0.0
      %666 = vmatprep.subr.mxu0 0.0
      %667 = vmatpush1.msra.mxu0 0.0
      %668 = vmatprep.subr.mxu0 0.0
      %669 = vmatpush1.msra.mxu0 0.0
      %670 = vmatprep.subr.mxu0 0.0
      %671 = vmatpush1.msra.mxu0 %v557
      %672 = vmatprep.subr.mxu0 0.0
      %673 = vmatpush1.msra.mxu0 %v556
      %674 = vmatprep.subr.mxu0 0.0
      %675 = vmatpush1.msra.mxu0 %v555
      %676 = vmatprep.subr.mxu0 0.0
      %677 = vmatpush1.msra.mxu0 %v554
      %678 = vmatprep.subr.mxu0 0.0
      %679 = vmatpush1.msra.mxu0 %v553
      %680 = vmatprep.subr.mxu0 0.0
      %681 = vmatpush1.msra.mxu0 %v552
      %682 = vmatprep.subr.mxu0 0.0
      %683 = vmatpush1.msra.mxu0 %v551
      %684 = vmatprep.subr.mxu0 0.0
      %685 = vmatpush1.msra.mxu0 %v550
      %686 = vmatprep.subr.mxu0 0.0
      %687 = vmatpush2.msra.mxu0 0.0
      %688 = vmatprep.subr.mxu0 0.0
      %689 = vmatpush2.msra.mxu0 0.0
      %690 = vmatprep.subr.mxu0 0.0
      %691 = vmatpush2.msra.mxu0 0.0
      %692 = vmatprep.subr.mxu0 0.0
      %693 = vmatpush2.msra.mxu0 0.0
      %694 = vmatprep.subr.mxu0 0.0
      %695 = vmatpush2.msra.mxu0 0.0
      %696 = vmatprep.subr.mxu0 0.0
      %697 = vmatpush2.msra.mxu0 0.0
      %698 = vmatprep.subr.mxu0 0.0
      %699 = vmatpush2.msra.mxu0 0.0
      %700 = vmatprep.subr.mxu0 0.0
      %701 = vmatpush2.msra.mxu0 0.0
      %702 = vmatprep.subr.mxu0 0.0
      %703 = vmatpush2.msra.mxu0 0.0
      %704 = vmatprep.subr.mxu0 0.0
      %705 = vmatpush2.msra.mxu0 0.0
      %706 = vmatprep.subr.mxu0 0.0
      %707 = vmatpush2.msra.mxu0 0.0
      %708 = vmatprep.subr.mxu0 0.0
      %709 = vmatpush2.msra.mxu0 0.0
      %710 = vmatprep.subr.mxu0 0.0
      %711 = vmatpush2.msra.mxu0 0.0
      %712 = vmatprep.subr.mxu0 0.0
      %713 = vmatpush2.msra.mxu0 0.0
      %714 = vmatprep.subr.mxu0 0.0
      %715 = vmatpush2.msra.mxu0 0.0
      %716 = vmatprep.subr.mxu0 0.0
      %717 = vmatpush2.msra.mxu0 0.0
      %718 = vmatprep.mubr.f32.mxu0 0.0
      %719 = vmatmul.mubr.f32.gmra.mxu0 %v652
      %v720 = vpop.f32.mrf.mxu0
      %v721 = vadd.f32 0.0, %v720
      %v722 = vpop.f32.mrf.mxu0
      %723 = vdwg.mxu0
      %v724 = vld [vmem:[%s5] sm:$0x1]
      %v726 = vlaneseq
      %v727 = vshrl.u32 %v726, 7
      %v728 = vsub.s32 0, %v727
      %v729 = vrot.slane %v724, %v728
      %v731 = vmul.f32 %v721, %v729
      %v732 = vld [vmem:[%s6] sm:$0x1]
      %v734 = vlaneseq
      %v735 = vshrl.u32 %v734, 7
      %v736 = vsub.s32 0, %v735
      %v737 = vrot.slane %v732, %v736
      %v739 = vadd.f32 %v731, %v737
      %v740 = vpack.c.bf16 %v739, %v739
      %s741 = scalar_lea.vmem %s278, 2
      %742 = vst.msk [vmem:[%s741] sm:$0x3] %vm649, %v740
      %v744 = vsel %vm558, %v540, 0
      %746 = vmatprep.subr.mxu0 0.0
      %747 = vmatpush1.msra.mxu0 0.0
      %748 = vmatprep.subr.mxu0 0.0
      %749 = vmatpush1.msra.mxu0 0.0
      %750 = vmatprep.subr.mxu0 0.0
      %751 = vmatpush1.msra.mxu0 0.0
      %752 = vmatprep.subr.mxu0 0.0
      %753 = vmatpush1.msra.mxu0 0.0
      %754 = vmatprep.subr.mxu0 0.0
      %755 = vmatpush1.msra.mxu0 0.0
      %756 = vmatprep.subr.mxu0 0.0
      %757 = vmatpush1.msra.mxu0 0.0
      %758 = vmatprep.subr.mxu0 0.0
      %759 = vmatpush1.msra.mxu0 0.0
      %760 = vmatprep.subr.mxu0 0.0
      %761 = vmatpush1.msra.mxu0 0.0
      %762 = vmatprep.subr.mxu0 0.0
      %763 = vmatpush1.msra.mxu0 %v557
      %764 = vmatprep.subr.mxu0 0.0
      %765 = vmatpush1.msra.mxu0 %v556
      %766 = vmatprep.subr.mxu0 0.0
      %767 = vmatpush1.msra.mxu0 %v555
      %768 = vmatprep.subr.mxu0 0.0
      %769 = vmatpush1.msra.mxu0 %v554
      %770 = vmatprep.subr.mxu0 0.0
      %771 = vmatpush1.msra.mxu0 %v553
      %772 = vmatprep.subr.mxu0 0.0
      %773 = vmatpush1.msra.mxu0 %v552
      %774 = vmatprep.subr.mxu0 0.0
      %775 = vmatpush1.msra.mxu0 %v551
      %776 = vmatprep.subr.mxu0 0.0
      %777 = vmatpush1.msra.mxu0 %v550
      %778 = vmatprep.subr.mxu0 0.0
      %779 = vmatpush2.msra.mxu0 0.0
      %780 = vmatprep.subr.mxu0 0.0
      %781 = vmatpush2.msra.mxu0 0.0
      %782 = vmatprep.subr.mxu0 0.0
      %783 = vmatpush2.msra.mxu0 0.0
      %784 = vmatprep.subr.mxu0 0.0
      %785 = vmatpush2.msra.mxu0 0.0
      %786 = vmatprep.subr.mxu0 0.0
      %787 = vmatpush2.msra.mxu0 0.0
      %788 = vmatprep.subr.mxu0 0.0
      %789 = vmatpush2.msra.mxu0 0.0
      %790 = vmatprep.subr.mxu0 0.0
      %791 = vmatpush2.msra.mxu0 0.0
      %792 = vmatprep.subr.mxu0 0.0
      %793 = vmatpush2.msra.mxu0 0.0
      %794 = vmatprep.subr.mxu0 0.0
      %795 = vmatpush2.msra.mxu0 0.0
      %796 = vmatprep.subr.mxu0 0.0
      %797 = vmatpush2.msra.mxu0 0.0
      %798 = vmatprep.subr.mxu0 0.0
      %799 = vmatpush2.msra.mxu0 0.0
      %800 = vmatprep.subr.mxu0 0.0
      %801 = vmatpush2.msra.mxu0 0.0
      %802 = vmatprep.subr.mxu0 0.0
      %803 = vmatpush2.msra.mxu0 0.0
      %804 = vmatprep.subr.mxu0 0.0
      %805 = vmatpush2.msra.mxu0 0.0
      %806 = vmatprep.subr.mxu0 0.0
      %807 = vmatpush2.msra.mxu0 0.0
      %808 = vmatprep.subr.mxu0 0.0
      %809 = vmatpush2.msra.mxu0 0.0
      %810 = vmatprep.mubr.f32.mxu0 0.0
      %811 = vmatmul.mubr.f32.gmra.mxu0 %v744
      %v812 = vpop.f32.mrf.mxu0
      %v813 = vadd.f32 0.0, %v812
      %v814 = vpop.f32.mrf.mxu0
      %815 = vdwg.mxu0
      %v816 = vld [vmem:[%s5] sm:$0x1]
      %v818 = vlaneseq
      %v819 = vshrl.u32 %v818, 7
      %v820 = vsub.s32 0, %v819
      %v821 = vrot.slane %v816, %v820
      %v823 = vmul.f32 %v813, %v821
      %v824 = vld [vmem:[%s6] sm:$0x1]
      %v826 = vlaneseq
      %v827 = vshrl.u32 %v826, 7
      %v828 = vsub.s32 0, %v827
      %v829 = vrot.slane %v824, %v828
      %v831 = vadd.f32 %v823, %v829
      %v832 = vpack.c.bf16 %v831, %v831
      %s833 = scalar_lea.vmem %s278, 4
      %834 = vst.msk [vmem:[%s833] sm:$0x3] %vm649, %v832
      %v836 = vsel %vm558, %v541, 0
      %838 = vmatprep.subr.mxu0 0.0
      %839 = vmatpush1.msra.mxu0 0.0
      %840 = vmatprep.subr.mxu0 0.0
      %841 = vmatpush1.msra.mxu0 0.0
      %842 = vmatprep.subr.mxu0 0.0
      %843 = vmatpush1.msra.mxu0 0.0
      %844 = vmatprep.subr.mxu0 0.0
      %845 = vmatpush1.msra.mxu0 0.0
      %846 = vmatprep.subr.mxu0 0.0
      %847 = vmatpush1.msra.mxu0 0.0
      %848 = vmatprep.subr.mxu0 0.0
      %849 = vmatpush1.msra.mxu0 0.0
      %850 = vmatprep.subr.mxu0 0.0
      %851 = vmatpush1.msra.mxu0 0.0
      %852 = vmatprep.subr.mxu0 0.0
      %853 = vmatpush1.msra.mxu0 0.0
      %854 = vmatprep.subr.mxu0 0.0
      %855 = vmatpush1.msra.mxu0 %v557
      %856 = vmatprep.subr.mxu0 0.0
      %857 = vmatpush1.msra.mxu0 %v556
      %858 = vmatprep.subr.mxu0 0.0
      %859 = vmatpush1.msra.mxu0 %v555
      %860 = vmatprep.subr.mxu0 0.0
      %861 = vmatpush1.msra.mxu0 %v554
      %862 = vmatprep.subr.mxu0 0.0
      %863 = vmatpush1.msra.mxu0 %v553
      %864 = vmatprep.subr.mxu0 0.0
      %865 = vmatpush1.msra.mxu0 %v552
      %866 = vmatprep.subr.mxu0 0.0
      %867 = vmatpush1.msra.mxu0 %v551
      %868 = vmatprep.subr.mxu0 0.0
      %869 = vmatpush1.msra.mxu0 %v550
      %870 = vmatprep.subr.mxu0 0.0
      %871 = vmatpush2.msra.mxu0 0.0
      %872 = vmatprep.subr.mxu0 0.0
      %873 = vmatpush2.msra.mxu0 0.0
      %874 = vmatprep.subr.mxu0 0.0
      %875 = vmatpush2.msra.mxu0 0.0
      %876 = vmatprep.subr.mxu0 0.0
      %877 = vmatpush2.msra.mxu0 0.0
      %878 = vmatprep.subr.mxu0 0.0
      %879 = vmatpush2.msra.mxu0 0.0
      %880 = vmatprep.subr.mxu0 0.0
      %881 = vmatpush2.msra.mxu0 0.0
      %882 = vmatprep.subr.mxu0 0.0
      %883 = vmatpush2.msra.mxu0 0.0
      %884 = vmatprep.subr.mxu0 0.0
      %885 = vmatpush2.msra.mxu0 0.0
      %886 = vmatprep.subr.mxu0 0.0
      %887 = vmatpush2.msra.mxu0 0.0
      %888 = vmatprep.subr.mxu0 0.0
      %889 = vmatpush2.msra.mxu0 0.0
      %890 = vmatprep.subr.mxu0 0.0
      %891 = vmatpush2.msra.mxu0 0.0
      %892 = vmatprep.subr.mxu0 0.0
      %893 = vmatpush2.msra.mxu0 0.0
      %894 = vmatprep.subr.mxu0 0.0
      %895 = vmatpush2.msra.mxu0 0.0
      %896 = vmatprep.subr.mxu0 0.0
      %897 = vmatpush2.msra.mxu0 0.0
      %898 = vmatprep.subr.mxu0 0.0
      %899 = vmatpush2.msra.mxu0 0.0
      %900 = vmatprep.subr.mxu0 0.0
      %901 = vmatpush2.msra.mxu0 0.0
      %902 = vmatprep.mubr.f32.mxu0 0.0
      %903 = vmatmul.mubr.f32.gmra.mxu0 %v836
      %v904 = vpop.f32.mrf.mxu0
      %v905 = vadd.f32 0.0, %v904
      %v906 = vpop.f32.mrf.mxu0
      %907 = vdwg.mxu0
      %v908 = vld [vmem:[%s5] sm:$0x1]
      %v910 = vlaneseq
      %v911 = vshrl.u32 %v910, 7
      %v912 = vsub.s32 0, %v911
      %v913 = vrot.slane %v908, %v912
      %v915 = vmul.f32 %v905, %v913
      %v916 = vld [vmem:[%s6] sm:$0x1]
      %v918 = vlaneseq
      %v919 = vshrl.u32 %v918, 7
      %v920 = vsub.s32 0, %v919
      %v921 = vrot.slane %v916, %v920
      %v923 = vadd.f32 %v915, %v921
      %v924 = vpack.c.bf16 %v923, %v923
      %s925 = scalar_lea.vmem %s278, 6
      %926 = vst.msk [vmem:[%s925] sm:$0x3] %vm649, %v924
      %p927 = scmp.lt.s32.totalorder %s18, 1
      %s928 = scalar_select %p927, %s18, 1
      %s929 = smul.addr %s928, 4
      %s930 = smul.addr %s929, 2
      %s931 = scalar_lea.vmem %s7, %s930
      // Predicated region
      $region49: #{mobilenet_v3_forward.8} parent=47 // pred_check
        %p932 = pneg %p188
      $region50: #{mobilenet_v3_forward.8} parent=47 // pred_check_branch
        %934 = sbr.rel (%p932) target = $region52
      $region51: #{mobilenet_v3_forward.8} parent=47 // pred_region
        _
      $region52: #{mobilenet_v3_forward.8} parent=47 // pred_fallthru
        _
    $region48: #{mobilenet_v3_forward.8} parent=5 // pred_fallthru
      _
    %p935 = scmp.le.s32.totalorder 2, %s13
    // Predicated region
    $region53: #{mobilenet_v3_forward.8} parent=5 // pred_check
      %p936 = pneg %p935
    $region54: #{mobilenet_v3_forward.8} parent=5 // pred_check_branch
      %938 = sbr.rel (%p936) target = $region56
    $region55: #{mobilenet_v3_forward.8} parent=5 // pred_region
      %s939 = ssub.s32 %s13, 2
      // Predicated region
      $region57: #{mobilenet_v3_forward.8} parent=55 // pred_check
        %p940 = pneg %p194
      $region58: #{mobilenet_v3_forward.8} parent=55 // pred_check_branch
        %942 = sbr.rel (%p940) target = $region60
      $region59: #{mobilenet_v3_forward.8} parent=55 // pred_region
        %p943 = scmp.lt.s32.totalorder %s19, 1
        %s944 = scalar_select %p943, %s19, 1
        %s945 = smul.addr %s944, 4
        %s946 = smul.addr %s945, 2
        %s947 = scalar_lea.vmem %s7, %s946
      $region60: #{mobilenet_v3_forward.8} parent=55 // pred_fallthru
        _
    $region56: #{mobilenet_v3_forward.8} parent=5 // pred_fallthru
      _
  $region6: #{mobilenet_v3_forward.8} parent=0 // loop_footer
    %s17 = sadd.s32 1, %s13
  $region7: #{mobilenet_v3_forward.8} parent=0 // loop_footer_branch
    %12 = sbr.rel target = $region3
  $region8: #{mobilenet_v3_forward.8} parent=0 // loop_exit
    _

</llo_original>
